<compile_context>
chip_gen: v5e
topology: v5e:2x2
jax: 0.10.0
libtpu: 0.0.40
codegen_flags: <defaults>
</compile_context>

<pallas_src>
import functools

import jax
import jax.numpy as jnp
from jax import lax
from jax.experimental import pallas as pl
from jax.experimental.pallas import tpu as pltpu

NEG_SLOPE = 0.01   # nn.LeakyReLU default
BN_EPS = 1e-5      # nn.BatchNorm2d default


def _cnn_lstm_kernel(W, T, Nb, C1, C2, Hd, L, K, *refs):
    # refs = [xw, w1, b1, bn_scale, bn_shift, w2, b2] + 3*L LSTM refs
    #        + [wfcT, bfc] + [out_ref] + [gin_scratch, seq_scratch, pp_scratch]
    (xw_ref, w1_ref, b1_ref, s1_ref, t1_ref, w2_ref, b2_ref) = refs[:7]
    lstm_refs = refs[7:7 + 3 * L]
    wfc_ref, bfc_ref, out_ref, gin_ref, seq_ref, pp_ref = refs[7 + 3 * L:]

    def leaky(v):
        return jnp.where(v > 0, v, NEG_SLOPE * v)

    P = W * Nb
    TN = T * Nb

    # ---- Conv2d(1, 32, k=3, padding='same') + LeakyReLU + BatchNorm ----
    # xw rows are (padded_w, sample); the three kw-shifted slices hit the MXU
    # against (5, 3*C1) weight slabs whose columns are (output H row, channel).
    xw = xw_ref[0]                                            # ((W+2)*Nb, 5)
    y = (jnp.dot(xw[0:P, :], w1_ref[0], preferred_element_type=jnp.float32)
         + jnp.dot(xw[Nb:Nb + P, :], w1_ref[1],
                   preferred_element_type=jnp.float32)
         + jnp.dot(xw[2 * Nb:2 * Nb + P, :], w1_ref[2],
                   preferred_element_type=jnp.float32)
         + b1_ref[...])                                       # (W*Nb, 3*C1)
    y = leaky(y)
    y = y * s1_ref[...] + t1_ref[...]                         # fused inference BN

    # ---- AvgPool2d((3,3), stride=(1,2), pad=0) -> t-major pooled sequence ----
    s = y[:, 0:C1] + y[:, C1:2 * C1] + y[:, 2 * C1:3 * C1]    # sum over H rows
    s3 = s.reshape(W // 2, 2 * Nb, C1)
    pooled = (s3[0:T, 0:Nb, :] + s3[0:T, Nb:2 * Nb, :]
              + s3[1:T + 1, 0:Nb, :]) * (1.0 / 9.0)           # (T, Nb, C1)
    # Dropout(p=0.33): identity in inference.

    # zero rows at t=-1 / t=T implement conv2's padding='same' along time;
    # all three stores are block-dense, Nb-aligned.
    pp_ref[0:Nb, :] = jnp.zeros((Nb, C1), jnp.float32)
    pp_ref[(T + 1) * Nb:(T + 2) * Nb, :] = jnp.zeros((Nb, C1), jnp.float32)
    pp_ref[Nb:(T + 1) * Nb, :] = pooled.reshape(TN, C1)

    # ---- Conv2d(32, 64, k=(1,3), padding='same') as 3 shifted matmuls ----
    seq = (jnp.dot(pp_ref[0:TN, :], w2_ref[0],
                   preferred_element_type=jnp.float32)
           + jnp.dot(pp_ref[Nb:Nb + TN, :], w2_ref[1],
                     preferred_element_type=jnp.float32)
           + jnp.dot(pp_ref[2 * Nb:2 * Nb + TN, :], w2_ref[2],
                     preferred_element_type=jnp.float32)
           + b2_ref[...])                                     # (T*Nb, C2)
    seq = leaky(seq)
    # Dropout(p=0.21): identity in inference.
    # .squeeze().transpose(1,2): the t-major (T*Nb, C2) layout already matches.

    # ---- LSTM (num_layers, batch_first, unidirectional) ----
    h_last = None
    for l in range(L):
        wih = lstm_refs[3 * l][...]                           # (in_l, 4*Hd)
        whh = lstm_refs[3 * l + 1][...]                       # (Hd,   4*Hd)
        bl = lstm_refs[3 * l + 2][...]                        # (1,    4*Hd)
        x_l = seq if l == 0 else seq_ref[...]
        # input projection of all T timesteps at once (hoisted out of the loop)
        gin_ref[...] = jnp.dot(x_l, wih,
                               preferred_element_type=jnp.float32) + bl
        write_seq = (l + 1 < L)

        def step(t, carry, whh=whh, write_seq=write_seq):
            h, c = carry
            base = pl.multiple_of(t * Nb, Nb)
            g = (gin_ref[pl.ds(base, Nb), :]
                 + jnp.dot(h, whh, preferred_element_type=jnp.float32))
            i_g = jax.nn.sigmoid(g[:, 0:Hd])
            f_g = jax.nn.sigmoid(g[:, Hd:2 * Hd])
            g_g = jnp.tanh(g[:, 2 * Hd:3 * Hd])
            o_g = jax.nn.sigmoid(g[:, 3 * Hd:4 * Hd])
            c = f_g * c + i_g * g_g
            h = o_g * jnp.tanh(c)
            if write_seq:
                seq_ref[pl.ds(base, Nb), :] = h
            return (h, c)

        init = (jnp.zeros((Nb, Hd), jnp.float32),
                jnp.zeros((Nb, Hd), jnp.float32))
        h_last, _ = lax.fori_loop(0, T, step, init, unroll=True)

    # ---- Dropout (identity) + Linear(hidden, numClasses) ----
    out_ref[...] = (jnp.dot(h_last, wfc_ref[...],
                            preferred_element_type=jnp.float32) + bfc_ref[...])


def prepare_params(params, *, hidden_size, num_layers):
    """One-time parameter re-layout (call once, reuse for every forward)."""
    C1, C2 = 32, 64
    Hd, L = hidden_size, num_layers

    # conv1 weights folded into 3 kw-shifted slabs: w1cat[kw, hp, h*C1+c]
    #   = w1[c, hp-h, kw] if 0 <= hp-h <= 2 else 0   (hp = padded-H index 0..4)
    w1 = params['conv1_w'][:, 0]                              # (C1, 3, 3)
    w1cat = jnp.zeros((3, 5, 3, C1), jnp.float32)             # [kw, hp, h, c]
    for h in range(3):
        for kh in range(3):
            w1cat = w1cat.at[:, h + kh, h, :].set(jnp.transpose(w1[:, kh, :]))
    w1cat = w1cat.reshape(3, 5, 3 * C1)
    b1cat = jnp.tile(params['conv1_b'], 3).reshape(1, 3 * C1)
    inv = lax.rsqrt(params['bn_var'] + BN_EPS)
    bn_scale = params['bn_gamma'] * inv
    bn_shift = params['bn_beta'] - params['bn_mean'] * bn_scale
    s1 = jnp.tile(bn_scale, 3).reshape(1, 3 * C1)
    t1 = jnp.tile(bn_shift, 3).reshape(1, 3 * C1)

    w2r = jnp.transpose(params['conv2_w'][:, :, 0, :], (2, 1, 0))   # (3, C1, C2)
    b2r = params['conv2_b'].reshape(1, C2)

    lstm = []
    for l in range(L):
        lstm.append(jnp.transpose(params[f'lstm_wih_{l}']))   # (in_l, 4*Hd)
        lstm.append(jnp.transpose(params[f'lstm_whh_{l}']))   # (Hd,   4*Hd)
        lstm.append((params[f'lstm_bih_{l}']
                     + params[f'lstm_bhh_{l}']).reshape(1, 4 * Hd))
    wfcT = jnp.transpose(params['fc_w'])                      # (Hd, K)
    bfc = params['fc_b'].reshape(1, -1)
    return tuple([w1cat, b1cat, s1, t1, w2r, b2r] + lstm + [wfcT, bfc])


def cnn_lstm_forward(x, prepared, *, hidden_size, num_layers, num_classes,
                     block_n=None):
    """x: (N, 1, H=3, W) float32 NCHW; prepared: output of prepare_params."""
    N, Cin, H, W = x.shape
    assert Cin == 1 and H == 3 and W % 2 == 0 and W >= 4
    T = W // 2 - 1                       # AvgPool output width == LSTM seq len
    C1, C2 = 32, 64
    Hd, L, K = hidden_size, num_layers, num_classes

    if block_n is None:
        block_n = min(128, ((N + 7) // 8) * 8)
    assert block_n % 8 == 0
    Nb = block_n
    N_pad = ((N + Nb - 1) // Nb) * Nb
    G = N_pad // Nb

    # ---- glue: raw input, zero-padded, re-laid-out so each block is a
    #      ((W+2)*Nb, 5) matrix with rows = (padded_w, sample), cols = padded_h.
    xpad = jnp.pad(x[:, 0].astype(jnp.float32),
                   ((0, N_pad - N), (1, 1), (1, 1)))          # (N_pad, 5, W+2)
    xw = jnp.transpose(xpad, (0, 2, 1))                       # (N_pad, W+2, 5)
    xw = (xw.reshape(G, Nb, W + 2, 5)
            .transpose(0, 2, 1, 3)
            .reshape(G, (W + 2) * Nb, 5))

    inputs = [xw] + list(prepared)

    def fixed_spec(a):
        nd = a.ndim
        return pl.BlockSpec(a.shape, lambda b, nd=nd: (0,) * nd)

    in_specs = ([pl.BlockSpec((1, (W + 2) * Nb, 5), lambda b: (b, 0, 0))]
                + [fixed_spec(a) for a in prepared])
    out_specs = pl.BlockSpec((Nb, K), lambda b: (b, 0))

    kernel = functools.partial(_cnn_lstm_kernel, W, T, Nb, C1, C2, Hd, L, K)

    out = pl.pallas_call(
        kernel,
        out_shape=jax.ShapeDtypeStruct((N_pad, K), jnp.float32),
        grid_spec=pltpu.PrefetchScalarGridSpec(
            num_scalar_prefetch=0,
            grid=(G,),
            in_specs=in_specs,
            out_specs=out_specs,
            scratch_shapes=[
                pltpu.VMEM((T * Nb, 4 * Hd), jnp.float32),    # gate pre-acts
                pltpu.VMEM((T * Nb, Hd), jnp.float32),        # layer outputs
                pltpu.VMEM(((T + 2) * Nb, C1), jnp.float32),  # padded pooled seq
            ],
        ),
        compiler_params=pltpu.CompilerParams(
            dimension_semantics=("parallel",)),
    )(*inputs)
    return out[:N]


def init_params(key, hidden_size, num_layers, num_classes):
    C1, C2 = 32, 64
    Hd = hidden_size
    p = {}

    def nxt():
        nonlocal key
        key, sub = jax.random.split(key)
        return sub

    p['conv1_w'] = 0.2 * jax.random.normal(nxt(), (C1, 1, 3, 3), jnp.float32)
    p['conv1_b'] = 0.1 * jax.random.normal(nxt(), (C1,), jnp.float32)
    p['bn_gamma'] = 1.0 + 0.1 * jax.random.normal(nxt(), (C1,), jnp.float32)
    p['bn_beta'] = 0.1 * jax.random.normal(nxt(), (C1,), jnp.float32)
    p['bn_mean'] = 0.1 * jax.random.normal(nxt(), (C1,), jnp.float32)
    p['bn_var'] = jax.random.uniform(nxt(), (C1,), jnp.float32, 0.5, 1.5)
    p['conv2_w'] = 0.15 * jax.random.normal(nxt(), (C2, C1, 1, 3), jnp.float32)
    p['conv2_b'] = 0.1 * jax.random.normal(nxt(), (C2,), jnp.float32)
    in_sz = C2
    for l in range(num_layers):
        p[f'lstm_wih_{l}'] = 0.15 * jax.random.normal(nxt(), (4 * Hd, in_sz), jnp.float32)
        p[f'lstm_whh_{l}'] = 0.15 * jax.random.normal(nxt(), (4 * Hd, Hd), jnp.float32)
        p[f'lstm_bih_{l}'] = 0.1 * jax.random.normal(nxt(), (4 * Hd,), jnp.float32)
        p[f'lstm_bhh_{l}'] = 0.1 * jax.random.normal(nxt(), (4 * Hd,), jnp.float32)
        in_sz = Hd
    p['fc_w'] = 0.2 * jax.random.normal(nxt(), (num_classes, Hd), jnp.float32)
    p['fc_b'] = 0.1 * jax.random.normal(nxt(), (num_classes,), jnp.float32)
    return p


def reference_forward(x, p, hidden_size, num_layers, num_classes):
    """Pure-JAX reference mirroring the PyTorch forward (inference mode)."""
    leaky = lambda v: jnp.where(v > 0, v, NEG_SLOPE * v)
    y = lax.conv_general_dilated(x, p['conv1_w'], (1, 1), ((1, 1), (1, 1)),
                                 dimension_numbers=('NCHW', 'OIHW', 'NCHW'))
    y = leaky(y + p['conv1_b'].reshape(1, -1, 1, 1))
    y = ((y - p['bn_mean'].reshape(1, -1, 1, 1))
         * lax.rsqrt(p['bn_var'].reshape(1, -1, 1, 1) + BN_EPS)
         * p['bn_gamma'].reshape(1, -1, 1, 1)
         + p['bn_beta'].reshape(1, -1, 1, 1))
    y = lax.reduce_window(y, 0.0, lax.add, (1, 1, 3, 3), (1, 1, 1, 2), 'VALID') / 9.0
    y = lax.conv_general_dilated(y, p['conv2_w'], (1, 1), ((0, 0), (1, 1)),
                                 dimension_numbers=('NCHW', 'OIHW', 'NCHW'))
    y = leaky(y + p['conv2_b'].reshape(1, -1, 1, 1))          # (N, 64, 1, T)
    out = jnp.transpose(y[:, :, 0, :], (0, 2, 1))             # (N, T, 64)
    Hd = hidden_size
    for l in range(num_layers):
        wih, whh = p[f'lstm_wih_{l}'], p[f'lstm_whh_{l}']
        b = p[f'lstm_bih_{l}'] + p[f'lstm_bhh_{l}']
        N, T, _ = out.shape
        h = jnp.zeros((N, Hd), jnp.float32)
        c = jnp.zeros((N, Hd), jnp.float32)
        hs = []
        for t in range(T):
            g = out[:, t] @ wih.T + h @ whh.T + b
            ig, fg, gg, og = jnp.split(g, 4, axis=-1)
            ig, fg, og = jax.nn.sigmoid(ig), jax.nn.sigmoid(fg), jax.nn.sigmoid(og)
            gg = jnp.tanh(gg)
            c = fg * c + ig * gg
            h = og * jnp.tanh(c)
            hs.append(h)
        out = jnp.stack(hs, axis=1)
    return out[:, -1] @ p['fc_w'].T + p['fc_b']


if __name__ == "__main__":
    hidden_size, num_layers, num_classes = 32, 2, 5
    N, H, W = 16, 3, 16

    key = jax.random.PRNGKey(0)
    kx, kp = jax.random.split(key)
    x = jax.random.normal(kx, (N, 1, H, W), jnp.float32)
    params = init_params(kp, hidden_size, num_layers, num_classes)

    # parameter re-layouts computed once, reused across forward calls
    prepared = prepare_params(params, hidden_size=hidden_size,
                              num_layers=num_layers)

    out = cnn_lstm_forward(x, prepared, hidden_size=hidden_size,
                           num_layers=num_layers, num_classes=num_classes,
                           block_n=8)    # small block so the demo exercises grid > 1
    out = jax.block_until_ready(out)

    ref = reference_forward(x, params, hidden_size, num_layers, num_classes)
    assert out.shape == (N, num_classes), out.shape
    assert bool(jnp.all(jnp.isfinite(out)))
    assert bool(jnp.allclose(out, ref, atol=1e-2, rtol=1e-2)), (out, ref)

    print("KERNEL_OK")
</pallas_src>

<mosaic_0001>
module attributes {stable_mosaic.version = 11 : i64} {
  func.func @_cnn_lstm_kernel(%arg0: i32, %arg1: memref<1x144x5xf32, #tpu.memory_space<vmem>>, %arg2: memref<3x5x96xf32, #tpu.memory_space<vmem>>, %arg3: memref<1x96xf32, #tpu.memory_space<vmem>>, %arg4: memref<1x96xf32, #tpu.memory_space<vmem>>, %arg5: memref<1x96xf32, #tpu.memory_space<vmem>>, %arg6: memref<3x32x64xf32, #tpu.memory_space<vmem>>, %arg7: memref<1x64xf32, #tpu.memory_space<vmem>>, %arg8: memref<64x128xf32, #tpu.memory_space<vmem>>, %arg9: memref<32x128xf32, #tpu.memory_space<vmem>>, %arg10: memref<1x128xf32, #tpu.memory_space<vmem>>, %arg11: memref<32x128xf32, #tpu.memory_space<vmem>>, %arg12: memref<32x128xf32, #tpu.memory_space<vmem>>, %arg13: memref<1x128xf32, #tpu.memory_space<vmem>>, %arg14: memref<32x5xf32, #tpu.memory_space<vmem>>, %arg15: memref<1x5xf32, #tpu.memory_space<vmem>>, %arg16: memref<8x5xf32, #tpu.memory_space<vmem>>, %arg17: memref<56x128xf32, #tpu.memory_space<vmem>>, %arg18: memref<56x32xf32, #tpu.memory_space<vmem>>, %arg19: memref<72x32xf32, #tpu.memory_space<vmem>>) attributes {dimension_semantics = [#tpu.dimension_semantics<parallel>], iteration_bounds = array<i64: 2>, scalar_prefetch = 0 : i64, scratch_operands = 3 : i64, tpu.core_type = #tpu.core_type<tc>, window_params = [{transform_indices = @transform_0, window_bounds = array<i64: 1, 144, 5>}, {pipeline_mode = #tpu.pipeline_mode<synchronous>, transform_indices = @transform_1, window_bounds = array<i64: 3, 5, 96>}, {pipeline_mode = #tpu.pipeline_mode<synchronous>, transform_indices = @transform_2, window_bounds = array<i64: 1, 96>}, {pipeline_mode = #tpu.pipeline_mode<synchronous>, transform_indices = @transform_3, window_bounds = array<i64: 1, 96>}, {pipeline_mode = #tpu.pipeline_mode<synchronous>, transform_indices = @transform_4, window_bounds = array<i64: 1, 96>}, {pipeline_mode = #tpu.pipeline_mode<synchronous>, transform_indices = @transform_5, window_bounds = array<i64: 3, 32, 64>}, {pipeline_mode = #tpu.pipeline_mode<synchronous>, transform_indices = @transform_6, window_bounds = array<i64: 1, 64>}, {pipeline_mode = #tpu.pipeline_mode<synchronous>, transform_indices = @transform_7, window_bounds = array<i64: 64, 128>}, {pipeline_mode = #tpu.pipeline_mode<synchronous>, transform_indices = @transform_8, window_bounds = array<i64: 32, 128>}, {pipeline_mode = #tpu.pipeline_mode<synchronous>, transform_indices = @transform_9, window_bounds = array<i64: 1, 128>}, {pipeline_mode = #tpu.pipeline_mode<synchronous>, transform_indices = @transform_10, window_bounds = array<i64: 32, 128>}, {pipeline_mode = #tpu.pipeline_mode<synchronous>, transform_indices = @transform_11, window_bounds = array<i64: 32, 128>}, {pipeline_mode = #tpu.pipeline_mode<synchronous>, transform_indices = @transform_12, window_bounds = array<i64: 1, 128>}, {pipeline_mode = #tpu.pipeline_mode<synchronous>, transform_indices = @transform_13, window_bounds = array<i64: 32, 5>}, {pipeline_mode = #tpu.pipeline_mode<synchronous>, transform_indices = @transform_14, window_bounds = array<i64: 1, 5>}, {transform_indices = @transform_15, window_bounds = array<i64: 8, 5>}]} {
    %c0 = arith.constant 0 : index
    %c0_0 = arith.constant 0 : index
    %c0_1 = arith.constant 0 : index
    %0 = vector.load %arg1[%c0, %c0_0, %c0_1] : memref<1x144x5xf32, #tpu.memory_space<vmem>>, vector<1x144x5xf32>
    %1 = vector.shape_cast %0 : vector<1x144x5xf32> to vector<144x5xf32>
    %2 = vector.extract_strided_slice %1 {offsets = [0, 0], sizes = [128, 5], strides = [1, 1]} : vector<144x5xf32> to vector<128x5xf32>
    %c0_2 = arith.constant 0 : index
    %c0_3 = arith.constant 0 : index
    %c0_4 = arith.constant 0 : index
    %3 = vector.load %arg2[%c0_2, %c0_3, %c0_4] : memref<3x5x96xf32, #tpu.memory_space<vmem>>, vector<1x5x96xf32>
    %4 = vector.shape_cast %3 : vector<1x5x96xf32> to vector<5x96xf32>
    %cst = arith.constant dense<0.000000e+00> : vector<128x96xf32>
    %5 = tpu.matmul %2, %4, %cst {dimension_numbers = #tpu.dot_dimension_numbers<[1], [0], [0], [1], [0, 0, 1, 1], [], []>} : vector<128x5xf32>, vector<5x96xf32>, vector<128x96xf32> -> vector<128x96xf32>
    %6 = vector.extract_strided_slice %1 {offsets = [8, 0], sizes = [128, 5], strides = [1, 1]} : vector<144x5xf32> to vector<128x5xf32>
    %c1 = arith.constant 1 : index
    %c0_5 = arith.constant 0 : index
    %c0_6 = arith.constant 0 : index
    %7 = vector.load %arg2[%c1, %c0_5, %c0_6] : memref<3x5x96xf32, #tpu.memory_space<vmem>>, vector<1x5x96xf32>
    %8 = vector.shape_cast %7 : vector<1x5x96xf32> to vector<5x96xf32>
    %cst_7 = arith.constant dense<0.000000e+00> : vector<128x96xf32>
    %9 = tpu.matmul %6, %8, %cst_7 {dimension_numbers = #tpu.dot_dimension_numbers<[1], [0], [0], [1], [0, 0, 1, 1], [], []>} : vector<128x5xf32>, vector<5x96xf32>, vector<128x96xf32> -> vector<128x96xf32>
    %10 = arith.addf %5, %9 : vector<128x96xf32>
    %11 = vector.extract_strided_slice %1 {offsets = [16, 0], sizes = [128, 5], strides = [1, 1]} : vector<144x5xf32> to vector<128x5xf32>
    %c2 = arith.constant 2 : index
    %c0_8 = arith.constant 0 : index
    %c0_9 = arith.constant 0 : index
    %12 = vector.load %arg2[%c2, %c0_8, %c0_9] : memref<3x5x96xf32, #tpu.memory_space<vmem>>, vector<1x5x96xf32>
    %13 = vector.shape_cast %12 : vector<1x5x96xf32> to vector<5x96xf32>
    %cst_10 = arith.constant dense<0.000000e+00> : vector<128x96xf32>
    %14 = tpu.matmul %11, %13, %cst_10 {dimension_numbers = #tpu.dot_dimension_numbers<[1], [0], [0], [1], [0, 0, 1, 1], [], []>} : vector<128x5xf32>, vector<5x96xf32>, vector<128x96xf32> -> vector<128x96xf32>
    %15 = arith.addf %10, %14 : vector<128x96xf32>
    %c0_11 = arith.constant 0 : index
    %c0_12 = arith.constant 0 : index
    %16 = vector.load %arg3[%c0_11, %c0_12] : memref<1x96xf32, #tpu.memory_space<vmem>>, vector<1x96xf32>
    %17 = vector.broadcast %16 : vector<1x96xf32> to vector<128x96xf32>
    %18 = arith.addf %15, %17 : vector<128x96xf32>
    %cst_13 = arith.constant 0.000000e+00 : f32
    %19 = vector.broadcast %cst_13 : f32 to vector<128x96xf32>
    %20 = arith.cmpf ogt, %18, %19 : vector<128x96xf32>
    %cst_14 = arith.constant 0.00999999977 : f32
    %21 = vector.broadcast %cst_14 : f32 to vector<128x96xf32>
    %22 = arith.mulf %21, %18 : vector<128x96xf32>
    %23 = arith.select %20, %18, %22 : vector<128x96xi1>, vector<128x96xf32>
    %c0_15 = arith.constant 0 : index
    %c0_16 = arith.constant 0 : index
    %24 = vector.load %arg4[%c0_15, %c0_16] : memref<1x96xf32, #tpu.memory_space<vmem>>, vector<1x96xf32>
    %25 = vector.broadcast %24 : vector<1x96xf32> to vector<128x96xf32>
    %26 = arith.mulf %23, %25 : vector<128x96xf32>
    %c0_17 = arith.constant 0 : index
    %c0_18 = arith.constant 0 : index
    %27 = vector.load %arg5[%c0_17, %c0_18] : memref<1x96xf32, #tpu.memory_space<vmem>>, vector<1x96xf32>
    %28 = vector.broadcast %27 : vector<1x96xf32> to vector<128x96xf32>
    %29 = arith.addf %26, %28 : vector<128x96xf32>
    %30 = vector.extract_strided_slice %29 {offsets = [0, 0], sizes = [128, 32], strides = [1, 1]} : vector<128x96xf32> to vector<128x32xf32>
    %31 = vector.extract_strided_slice %29 {offsets = [0, 32], sizes = [128, 32], strides = [1, 1]} : vector<128x96xf32> to vector<128x32xf32>
    %32 = arith.addf %30, %31 : vector<128x32xf32>
    %33 = vector.extract_strided_slice %29 {offsets = [0, 64], sizes = [128, 32], strides = [1, 1]} : vector<128x96xf32> to vector<128x32xf32>
    %34 = arith.addf %32, %33 : vector<128x32xf32>
    %35 = vector.shape_cast %34 : vector<128x32xf32> to vector<8x16x32xf32>
    %36 = vector.extract_strided_slice %35 {offsets = [0, 0, 0], sizes = [7, 8, 32], strides = [1, 1, 1]} : vector<8x16x32xf32> to vector<7x8x32xf32>
    %37 = vector.extract_strided_slice %35 {offsets = [0, 8, 0], sizes = [7, 8, 32], strides = [1, 1, 1]} : vector<8x16x32xf32> to vector<7x8x32xf32>
    %38 = arith.addf %36, %37 : vector<7x8x32xf32>
    %39 = vector.extract_strided_slice %35 {offsets = [1, 0, 0], sizes = [7, 8, 32], strides = [1, 1, 1]} : vector<8x16x32xf32> to vector<7x8x32xf32>
    %40 = arith.addf %38, %39 : vector<7x8x32xf32>
    %cst_19 = arith.constant 0.111111112 : f32
    %41 = vector.broadcast %cst_19 : f32 to vector<7x8x32xf32>
    %42 = arith.mulf %40, %41 : vector<7x8x32xf32>
    %cst_20 = arith.constant 0.000000e+00 : f32
    %43 = vector.broadcast %cst_20 : f32 to vector<8x32xf32>
    %c0_21 = arith.constant 0 : index
    %c0_22 = arith.constant 0 : index
    %44 = vector.load %arg19[%c0_21, %c0_22] : memref<72x32xf32, #tpu.memory_space<vmem>>, vector<8x32xf32>
    tpu.vector_store %arg19[%c0_21, %c0_22], %43 {strides = array<i32>} : memref<72x32xf32, #tpu.memory_space<vmem>>, vector<8x32xf32>,
    %cst_23 = arith.constant 0.000000e+00 : f32
    %45 = vector.broadcast %cst_23 : f32 to vector<8x32xf32>
    %c64 = arith.constant 64 : index
    %c0_24 = arith.constant 0 : index
    %46 = vector.load %arg19[%c64, %c0_24] : memref<72x32xf32, #tpu.memory_space<vmem>>, vector<8x32xf32>
    tpu.vector_store %arg19[%c64, %c0_24], %45 {strides = array<i32>} : memref<72x32xf32, #tpu.memory_space<vmem>>, vector<8x32xf32>,
    %47 = vector.shape_cast %42 : vector<7x8x32xf32> to vector<56x32xf32>
    %c8 = arith.constant 8 : index
    %c0_25 = arith.constant 0 : index
    %48 = vector.load %arg19[%c8, %c0_25] : memref<72x32xf32, #tpu.memory_space<vmem>>, vector<56x32xf32>
    tpu.vector_store %arg19[%c8, %c0_25], %47 {strides = array<i32>} : memref<72x32xf32, #tpu.memory_space<vmem>>, vector<56x32xf32>,
    %c0_26 = arith.constant 0 : index
    %c0_27 = arith.constant 0 : index
    %49 = vector.load %arg19[%c0_26, %c0_27] : memref<72x32xf32, #tpu.memory_space<vmem>>, vector<56x32xf32>
    %c0_28 = arith.constant 0 : index
    %c0_29 = arith.constant 0 : index
    %c0_30 = arith.constant 0 : index
    %50 = vector.load %arg6[%c0_28, %c0_29, %c0_30] : memref<3x32x64xf32, #tpu.memory_space<vmem>>, vector<1x32x64xf32>
    %51 = vector.shape_cast %50 : vector<1x32x64xf32> to vector<32x64xf32>
    %cst_31 = arith.constant dense<0.000000e+00> : vector<56x64xf32>
    %52 = tpu.matmul %49, %51, %cst_31 {dimension_numbers = #tpu.dot_dimension_numbers<[1], [0], [0], [1], [0, 0, 1, 1], [], []>} : vector<56x32xf32>, vector<32x64xf32>, vector<56x64xf32> -> vector<56x64xf32>
    %c8_32 = arith.constant 8 : index
    %c0_33 = arith.constant 0 : index
    %53 = vector.load %arg19[%c8_32, %c0_33] : memref<72x32xf32, #tpu.memory_space<vmem>>, vector<56x32xf32>
    %c1_34 = arith.constant 1 : index
    %c0_35 = arith.constant 0 : index
    %c0_36 = arith.constant 0 : index
    %54 = vector.load %arg6[%c1_34, %c0_35, %c0_36] : memref<3x32x64xf32, #tpu.memory_space<vmem>>, vector<1x32x64xf32>
    %55 = vector.shape_cast %54 : vector<1x32x64xf32> to vector<32x64xf32>
    %cst_37 = arith.constant dense<0.000000e+00> : vector<56x64xf32>
    %56 = tpu.matmul %53, %55, %cst_37 {dimension_numbers = #tpu.dot_dimension_numbers<[1], [0], [0], [1], [0, 0, 1, 1], [], []>} : vector<56x32xf32>, vector<32x64xf32>, vector<56x64xf32> -> vector<56x64xf32>
    %57 = arith.addf %52, %56 : vector<56x64xf32>
    %c16 = arith.constant 16 : index
    %c0_38 = arith.constant 0 : index
    %58 = vector.load %arg19[%c16, %c0_38] : memref<72x32xf32, #tpu.memory_space<vmem>>, vector<56x32xf32>
    %c2_39 = arith.constant 2 : index
    %c0_40 = arith.constant 0 : index
    %c0_41 = arith.constant 0 : index
    %59 = vector.load %arg6[%c2_39, %c0_40, %c0_41] : memref<3x32x64xf32, #tpu.memory_space<vmem>>, vector<1x32x64xf32>
    %60 = vector.shape_cast %59 : vector<1x32x64xf32> to vector<32x64xf32>
    %cst_42 = arith.constant dense<0.000000e+00> : vector<56x64xf32>
    %61 = tpu.matmul %58, %60, %cst_42 {dimension_numbers = #tpu.dot_dimension_numbers<[1], [0], [0], [1], [0, 0, 1, 1], [], []>} : vector<56x32xf32>, vector<32x64xf32>, vector<56x64xf32> -> vector<56x64xf32>
    %62 = arith.addf %57, %61 : vector<56x64xf32>
    %c0_43 = arith.constant 0 : index
    %c0_44 = arith.constant 0 : index
    %63 = vector.load %arg7[%c0_43, %c0_44] : memref<1x64xf32, #tpu.memory_space<vmem>>, vector<1x64xf32>
    %64 = vector.broadcast %63 : vector<1x64xf32> to vector<56x64xf32>
    %65 = arith.addf %62, %64 : vector<56x64xf32>
    %cst_45 = arith.constant 0.000000e+00 : f32
    %66 = vector.broadcast %cst_45 : f32 to vector<56x64xf32>
    %67 = arith.cmpf ogt, %65, %66 : vector<56x64xf32>
    %cst_46 = arith.constant 0.00999999977 : f32
    %68 = vector.broadcast %cst_46 : f32 to vector<56x64xf32>
    %69 = arith.mulf %68, %65 : vector<56x64xf32>
    %70 = arith.select %67, %65, %69 : vector<56x64xi1>, vector<56x64xf32>
    %c0_47 = arith.constant 0 : index
    %c0_48 = arith.constant 0 : index
    %71 = vector.load %arg8[%c0_47, %c0_48] : memref<64x128xf32, #tpu.memory_space<vmem>>, vector<64x128xf32>
    %c0_49 = arith.constant 0 : index
    %c0_50 = arith.constant 0 : index
    %72 = vector.load %arg9[%c0_49, %c0_50] : memref<32x128xf32, #tpu.memory_space<vmem>>, vector<32x128xf32>
    %c0_51 = arith.constant 0 : index
    %c0_52 = arith.constant 0 : index
    %73 = vector.load %arg10[%c0_51, %c0_52] : memref<1x128xf32, #tpu.memory_space<vmem>>, vector<1x128xf32>
    %cst_53 = arith.constant dense<0.000000e+00> : vector<56x128xf32>
    %74 = tpu.matmul %70, %71, %cst_53 {dimension_numbers = #tpu.dot_dimension_numbers<[1], [0], [0], [1], [0, 0, 1, 1], [], []>} : vector<56x64xf32>, vector<64x128xf32>, vector<56x128xf32> -> vector<56x128xf32>
    %75 = vector.broadcast %73 : vector<1x128xf32> to vector<56x128xf32>
    %76 = arith.addf %74, %75 : vector<56x128xf32>
    %c0_54 = arith.constant 0 : index
    %c0_55 = arith.constant 0 : index
    %77 = vector.load %arg17[%c0_54, %c0_55] : memref<56x128xf32, #tpu.memory_space<vmem>>, vector<56x128xf32>
    tpu.vector_store %arg17[%c0_54, %c0_55], %76 {strides = array<i32>} : memref<56x128xf32, #tpu.memory_space<vmem>>, vector<56x128xf32>,
    %cst_56 = arith.constant 0.000000e+00 : f32
    %78 = vector.broadcast %cst_56 : f32 to vector<8x32xf32>
    %cst_57 = arith.constant 0.000000e+00 : f32
    %79 = vector.broadcast %cst_57 : f32 to vector<8x32xf32>
    %c0_i32 = arith.constant 0 : i32
    %c8_i32 = arith.constant 8 : i32
    %80 = arith.muli %c0_i32, %c8_i32 : i32
    %81 = tpu.assume_multiple %80, 8 : i32
    %82 = arith.index_cast %81 : i32 to index
    %c0_58 = arith.constant 0 : index
    %83 = vector.load %arg17[%82, %c0_58] : memref<56x128xf32, #tpu.memory_space<vmem>>, vector<8x128xf32>
    %cst_59 = arith.constant dense<0.000000e+00> : vector<8x128xf32>
    %84 = tpu.matmul %78, %72, %cst_59 {dimension_numbers = #tpu.dot_dimension_numbers<[1], [0], [0], [1], [0, 0, 1, 1], [], []>} : vector<8x32xf32>, vector<32x128xf32>, vector<8x128xf32> -> vector<8x128xf32>
    %85 = arith.addf %83, %84 : vector<8x128xf32>
    %86 = vector.extract_strided_slice %85 {offsets = [0, 0], sizes = [8, 32], strides = [1, 1]} : vector<8x128xf32> to vector<8x32xf32>
    %87 = arith.negf %86 : vector<8x32xf32>
    %88 = math.exp %87 : vector<8x32xf32>
    %cst_60 = arith.constant 1.000000e+00 : f32
    %89 = vector.broadcast %cst_60 : f32 to vector<8x32xf32>
    %90 = arith.addf %89, %88 : vector<8x32xf32>
    %91 = arith.divf %89, %90 : vector<8x32xf32>
    %92 = vector.extract_strided_slice %85 {offsets = [0, 32], sizes = [8, 32], strides = [1, 1]} : vector<8x128xf32> to vector<8x32xf32>
    %93 = arith.negf %92 : vector<8x32xf32>
    %94 = math.exp %93 : vector<8x32xf32>
    %cst_61 = arith.constant 1.000000e+00 : f32
    %95 = vector.broadcast %cst_61 : f32 to vector<8x32xf32>
    %96 = arith.addf %95, %94 : vector<8x32xf32>
    %97 = arith.divf %95, %96 : vector<8x32xf32>
    %98 = vector.extract_strided_slice %85 {offsets = [0, 64], sizes = [8, 32], strides = [1, 1]} : vector<8x128xf32> to vector<8x32xf32>
    %99 = math.tanh %98 : vector<8x32xf32>
    %100 = vector.extract_strided_slice %85 {offsets = [0, 96], sizes = [8, 32], strides = [1, 1]} : vector<8x128xf32> to vector<8x32xf32>
    %101 = arith.negf %100 : vector<8x32xf32>
    %102 = math.exp %101 : vector<8x32xf32>
    %cst_62 = arith.constant 1.000000e+00 : f32
    %103 = vector.broadcast %cst_62 : f32 to vector<8x32xf32>
    %104 = arith.addf %103, %102 : vector<8x32xf32>
    %105 = arith.divf %103, %104 : vector<8x32xf32>
    %106 = arith.mulf %97, %79 : vector<8x32xf32>
    %107 = arith.mulf %91, %99 : vector<8x32xf32>
    %108 = arith.addf %106, %107 : vector<8x32xf32>
    %109 = math.tanh %108 : vector<8x32xf32>
    %110 = arith.mulf %105, %109 : vector<8x32xf32>
    %111 = arith.index_cast %81 : i32 to index
    %c0_63 = arith.constant 0 : index
    %112 = vector.load %arg18[%111, %c0_63] : memref<56x32xf32, #tpu.memory_space<vmem>>, vector<8x32xf32>
    tpu.vector_store %arg18[%111, %c0_63], %110 {strides = array<i32>} : memref<56x32xf32, #tpu.memory_space<vmem>>, vector<8x32xf32>,
    %c1_i32 = arith.constant 1 : i32
    %c8_i32_64 = arith.constant 8 : i32
    %113 = arith.muli %c1_i32, %c8_i32_64 : i32
    %114 = tpu.assume_multiple %113, 8 : i32
    %115 = arith.index_cast %114 : i32 to index
    %c0_65 = arith.constant 0 : index
    %116 = vector.load %arg17[%115, %c0_65] : memref<56x128xf32, #tpu.memory_space<vmem>>, vector<8x128xf32>
    %cst_66 = arith.constant dense<0.000000e+00> : vector<8x128xf32>
    %117 = tpu.matmul %110, %72, %cst_66 {dimension_numbers = #tpu.dot_dimension_numbers<[1], [0], [0], [1], [0, 0, 1, 1], [], []>} : vector<8x32xf32>, vector<32x128xf32>, vector<8x128xf32> -> vector<8x128xf32>
    %118 = arith.addf %116, %117 : vector<8x128xf32>
    %119 = vector.extract_strided_slice %118 {offsets = [0, 0], sizes = [8, 32], strides = [1, 1]} : vector<8x128xf32> to vector<8x32xf32>
    %120 = arith.negf %119 : vector<8x32xf32>
    %121 = math.exp %120 : vector<8x32xf32>
    %cst_67 = arith.constant 1.000000e+00 : f32
    %122 = vector.broadcast %cst_67 : f32 to vector<8x32xf32>
    %123 = arith.addf %122, %121 : vector<8x32xf32>
    %124 = arith.divf %122, %123 : vector<8x32xf32>
    %125 = vector.extract_strided_slice %118 {offsets = [0, 32], sizes = [8, 32], strides = [1, 1]} : vector<8x128xf32> to vector<8x32xf32>
    %126 = arith.negf %125 : vector<8x32xf32>
    %127 = math.exp %126 : vector<8x32xf32>
    %cst_68 = arith.constant 1.000000e+00 : f32
    %128 = vector.broadcast %cst_68 : f32 to vector<8x32xf32>
    %129 = arith.addf %128, %127 : vector<8x32xf32>
    %130 = arith.divf %128, %129 : vector<8x32xf32>
    %131 = vector.extract_strided_slice %118 {offsets = [0, 64], sizes = [8, 32], strides = [1, 1]} : vector<8x128xf32> to vector<8x32xf32>
    %132 = math.tanh %131 : vector<8x32xf32>
    %133 = vector.extract_strided_slice %118 {offsets = [0, 96], sizes = [8, 32], strides = [1, 1]} : vector<8x128xf32> to vector<8x32xf32>
    %134 = arith.negf %133 : vector<8x32xf32>
    %135 = math.exp %134 : vector<8x32xf32>
    %cst_69 = arith.constant 1.000000e+00 : f32
    %136 = vector.broadcast %cst_69 : f32 to vector<8x32xf32>
    %137 = arith.addf %136, %135 : vector<8x32xf32>
    %138 = arith.divf %136, %137 : vector<8x32xf32>
    %139 = arith.mulf %130, %108 : vector<8x32xf32>
    %140 = arith.mulf %124, %132 : vector<8x32xf32>
    %141 = arith.addf %139, %140 : vector<8x32xf32>
    %142 = math.tanh %141 : vector<8x32xf32>
    %143 = arith.mulf %138, %142 : vector<8x32xf32>
    %144 = arith.index_cast %114 : i32 to index
    %c0_70 = arith.constant 0 : index
    %145 = vector.load %arg18[%144, %c0_70] : memref<56x32xf32, #tpu.memory_space<vmem>>, vector<8x32xf32>
    tpu.vector_store %arg18[%144, %c0_70], %143 {strides = array<i32>} : memref<56x32xf32, #tpu.memory_space<vmem>>, vector<8x32xf32>,
    %c2_i32 = arith.constant 2 : i32
    %c8_i32_71 = arith.constant 8 : i32
    %146 = arith.muli %c2_i32, %c8_i32_71 : i32
    %147 = tpu.assume_multiple %146, 8 : i32
    %148 = arith.index_cast %147 : i32 to index
    %c0_72 = arith.constant 0 : index
    %149 = vector.load %arg17[%148, %c0_72] : memref<56x128xf32, #tpu.memory_space<vmem>>, vector<8x128xf32>
    %cst_73 = arith.constant dense<0.000000e+00> : vector<8x128xf32>
    %150 = tpu.matmul %143, %72, %cst_73 {dimension_numbers = #tpu.dot_dimension_numbers<[1], [0], [0], [1], [0, 0, 1, 1], [], []>} : vector<8x32xf32>, vector<32x128xf32>, vector<8x128xf32> -> vector<8x128xf32>
    %151 = arith.addf %149, %150 : vector<8x128xf32>
    %152 = vector.extract_strided_slice %151 {offsets = [0, 0], sizes = [8, 32], strides = [1, 1]} : vector<8x128xf32> to vector<8x32xf32>
    %153 = arith.negf %152 : vector<8x32xf32>
    %154 = math.exp %153 : vector<8x32xf32>
    %cst_74 = arith.constant 1.000000e+00 : f32
    %155 = vector.broadcast %cst_74 : f32 to vector<8x32xf32>
    %156 = arith.addf %155, %154 : vector<8x32xf32>
    %157 = arith.divf %155, %156 : vector<8x32xf32>
    %158 = vector.extract_strided_slice %151 {offsets = [0, 32], sizes = [8, 32], strides = [1, 1]} : vector<8x128xf32> to vector<8x32xf32>
    %159 = arith.negf %158 : vector<8x32xf32>
    %160 = math.exp %159 : vector<8x32xf32>
    %cst_75 = arith.constant 1.000000e+00 : f32
    %161 = vector.broadcast %cst_75 : f32 to vector<8x32xf32>
    %162 = arith.addf %161, %160 : vector<8x32xf32>
    %163 = arith.divf %161, %162 : vector<8x32xf32>
    %164 = vector.extract_strided_slice %151 {offsets = [0, 64], sizes = [8, 32], strides = [1, 1]} : vector<8x128xf32> to vector<8x32xf32>
    %165 = math.tanh %164 : vector<8x32xf32>
    %166 = vector.extract_strided_slice %151 {offsets = [0, 96], sizes = [8, 32], strides = [1, 1]} : vector<8x128xf32> to vector<8x32xf32>
    %167 = arith.negf %166 : vector<8x32xf32>
    %168 = math.exp %167 : vector<8x32xf32>
    %cst_76 = arith.constant 1.000000e+00 : f32
    %169 = vector.broadcast %cst_76 : f32 to vector<8x32xf32>
    %170 = arith.addf %169, %168 : vector<8x32xf32>
    %171 = arith.divf %169, %170 : vector<8x32xf32>
    %172 = arith.mulf %163, %141 : vector<8x32xf32>
    %173 = arith.mulf %157, %165 : vector<8x32xf32>
    %174 = arith.addf %172, %173 : vector<8x32xf32>
    %175 = math.tanh %174 : vector<8x32xf32>
    %176 = arith.mulf %171, %175 : vector<8x32xf32>
    %177 = arith.index_cast %147 : i32 to index
    %c0_77 = arith.constant 0 : index
    %178 = vector.load %arg18[%177, %c0_77] : memref<56x32xf32, #tpu.memory_space<vmem>>, vector<8x32xf32>
    tpu.vector_store %arg18[%177, %c0_77], %176 {strides = array<i32>} : memref<56x32xf32, #tpu.memory_space<vmem>>, vector<8x32xf32>,
    %c3_i32 = arith.constant 3 : i32
    %c8_i32_78 = arith.constant 8 : i32
    %179 = arith.muli %c3_i32, %c8_i32_78 : i32
    %180 = tpu.assume_multiple %179, 8 : i32
    %181 = arith.index_cast %180 : i32 to index
    %c0_79 = arith.constant 0 : index
    %182 = vector.load %arg17[%181, %c0_79] : memref<56x128xf32, #tpu.memory_space<vmem>>, vector<8x128xf32>
    %cst_80 = arith.constant dense<0.000000e+00> : vector<8x128xf32>
    %183 = tpu.matmul %176, %72, %cst_80 {dimension_numbers = #tpu.dot_dimension_numbers<[1], [0], [0], [1], [0, 0, 1, 1], [], []>} : vector<8x32xf32>, vector<32x128xf32>, vector<8x128xf32> -> vector<8x128xf32>
    %184 = arith.addf %182, %183 : vector<8x128xf32>
    %185 = vector.extract_strided_slice %184 {offsets = [0, 0], sizes = [8, 32], strides = [1, 1]} : vector<8x128xf32> to vector<8x32xf32>
    %186 = arith.negf %185 : vector<8x32xf32>
    %187 = math.exp %186 : vector<8x32xf32>
    %cst_81 = arith.constant 1.000000e+00 : f32
    %188 = vector.broadcast %cst_81 : f32 to vector<8x32xf32>
    %189 = arith.addf %188, %187 : vector<8x32xf32>
    %190 = arith.divf %188, %189 : vector<8x32xf32>
    %191 = vector.extract_strided_slice %184 {offsets = [0, 32], sizes = [8, 32], strides = [1, 1]} : vector<8x128xf32> to vector<8x32xf32>
    %192 = arith.negf %191 : vector<8x32xf32>
    %193 = math.exp %192 : vector<8x32xf32>
    %cst_82 = arith.constant 1.000000e+00 : f32
    %194 = vector.broadcast %cst_82 : f32 to vector<8x32xf32>
    %195 = arith.addf %194, %193 : vector<8x32xf32>
    %196 = arith.divf %194, %195 : vector<8x32xf32>
    %197 = vector.extract_strided_slice %184 {offsets = [0, 64], sizes = [8, 32], strides = [1, 1]} : vector<8x128xf32> to vector<8x32xf32>
    %198 = math.tanh %197 : vector<8x32xf32>
    %199 = vector.extract_strided_slice %184 {offsets = [0, 96], sizes = [8, 32], strides = [1, 1]} : vector<8x128xf32> to vector<8x32xf32>
    %200 = arith.negf %199 : vector<8x32xf32>
    %201 = math.exp %200 : vector<8x32xf32>
    %cst_83 = arith.constant 1.000000e+00 : f32
    %202 = vector.broadcast %cst_83 : f32 to vector<8x32xf32>
    %203 = arith.addf %202, %201 : vector<8x32xf32>
    %204 = arith.divf %202, %203 : vector<8x32xf32>
    %205 = arith.mulf %196, %174 : vector<8x32xf32>
    %206 = arith.mulf %190, %198 : vector<8x32xf32>
    %207 = arith.addf %205, %206 : vector<8x32xf32>
    %208 = math.tanh %207 : vector<8x32xf32>
    %209 = arith.mulf %204, %208 : vector<8x32xf32>
    %210 = arith.index_cast %180 : i32 to index
    %c0_84 = arith.constant 0 : index
    %211 = vector.load %arg18[%210, %c0_84] : memref<56x32xf32, #tpu.memory_space<vmem>>, vector<8x32xf32>
    tpu.vector_store %arg18[%210, %c0_84], %209 {strides = array<i32>} : memref<56x32xf32, #tpu.memory_space<vmem>>, vector<8x32xf32>,
    %c4_i32 = arith.constant 4 : i32
    %c8_i32_85 = arith.constant 8 : i32
    %212 = arith.muli %c4_i32, %c8_i32_85 : i32
    %213 = tpu.assume_multiple %212, 8 : i32
    %214 = arith.index_cast %213 : i32 to index
    %c0_86 = arith.constant 0 : index
    %215 = vector.load %arg17[%214, %c0_86] : memref<56x128xf32, #tpu.memory_space<vmem>>, vector<8x128xf32>
    %cst_87 = arith.constant dense<0.000000e+00> : vector<8x128xf32>
    %216 = tpu.matmul %209, %72, %cst_87 {dimension_numbers = #tpu.dot_dimension_numbers<[1], [0], [0], [1], [0, 0, 1, 1], [], []>} : vector<8x32xf32>, vector<32x128xf32>, vector<8x128xf32> -> vector<8x128xf32>
    %217 = arith.addf %215, %216 : vector<8x128xf32>
    %218 = vector.extract_strided_slice %217 {offsets = [0, 0], sizes = [8, 32], strides = [1, 1]} : vector<8x128xf32> to vector<8x32xf32>
    %219 = arith.negf %218 : vector<8x32xf32>
    %220 = math.exp %219 : vector<8x32xf32>
    %cst_88 = arith.constant 1.000000e+00 : f32
    %221 = vector.broadcast %cst_88 : f32 to vector<8x32xf32>
    %222 = arith.addf %221, %220 : vector<8x32xf32>
    %223 = arith.divf %221, %222 : vector<8x32xf32>
    %224 = vector.extract_strided_slice %217 {offsets = [0, 32], sizes = [8, 32], strides = [1, 1]} : vector<8x128xf32> to vector<8x32xf32>
    %225 = arith.negf %224 : vector<8x32xf32>
    %226 = math.exp %225 : vector<8x32xf32>
    %cst_89 = arith.constant 1.000000e+00 : f32
    %227 = vector.broadcast %cst_89 : f32 to vector<8x32xf32>
    %228 = arith.addf %227, %226 : vector<8x32xf32>
    %229 = arith.divf %227, %228 : vector<8x32xf32>
    %230 = vector.extract_strided_slice %217 {offsets = [0, 64], sizes = [8, 32], strides = [1, 1]} : vector<8x128xf32> to vector<8x32xf32>
    %231 = math.tanh %230 : vector<8x32xf32>
    %232 = vector.extract_strided_slice %217 {offsets = [0, 96], sizes = [8, 32], strides = [1, 1]} : vector<8x128xf32> to vector<8x32xf32>
    %233 = arith.negf %232 : vector<8x32xf32>
    %234 = math.exp %233 : vector<8x32xf32>
    %cst_90 = arith.constant 1.000000e+00 : f32
    %235 = vector.broadcast %cst_90 : f32 to vector<8x32xf32>
    %236 = arith.addf %235, %234 : vector<8x32xf32>
    %237 = arith.divf %235, %236 : vector<8x32xf32>
    %238 = arith.mulf %229, %207 : vector<8x32xf32>
    %239 = arith.mulf %223, %231 : vector<8x32xf32>
    %240 = arith.addf %238, %239 : vector<8x32xf32>
    %241 = math.tanh %240 : vector<8x32xf32>
    %242 = arith.mulf %237, %241 : vector<8x32xf32>
    %243 = arith.index_cast %213 : i32 to index
    %c0_91 = arith.constant 0 : index
    %244 = vector.load %arg18[%243, %c0_91] : memref<56x32xf32, #tpu.memory_space<vmem>>, vector<8x32xf32>
    tpu.vector_store %arg18[%243, %c0_91], %242 {strides = array<i32>} : memref<56x32xf32, #tpu.memory_space<vmem>>, vector<8x32xf32>,
    %c5_i32 = arith.constant 5 : i32
    %c8_i32_92 = arith.constant 8 : i32
    %245 = arith.muli %c5_i32, %c8_i32_92 : i32
    %246 = tpu.assume_multiple %245, 8 : i32
    %247 = arith.index_cast %246 : i32 to index
    %c0_93 = arith.constant 0 : index
    %248 = vector.load %arg17[%247, %c0_93] : memref<56x128xf32, #tpu.memory_space<vmem>>, vector<8x128xf32>
    %cst_94 = arith.constant dense<0.000000e+00> : vector<8x128xf32>
    %249 = tpu.matmul %242, %72, %cst_94 {dimension_numbers = #tpu.dot_dimension_numbers<[1], [0], [0], [1], [0, 0, 1, 1], [], []>} : vector<8x32xf32>, vector<32x128xf32>, vector<8x128xf32> -> vector<8x128xf32>
    %250 = arith.addf %248, %249 : vector<8x128xf32>
    %251 = vector.extract_strided_slice %250 {offsets = [0, 0], sizes = [8, 32], strides = [1, 1]} : vector<8x128xf32> to vector<8x32xf32>
    %252 = arith.negf %251 : vector<8x32xf32>
    %253 = math.exp %252 : vector<8x32xf32>
    %cst_95 = arith.constant 1.000000e+00 : f32
    %254 = vector.broadcast %cst_95 : f32 to vector<8x32xf32>
    %255 = arith.addf %254, %253 : vector<8x32xf32>
    %256 = arith.divf %254, %255 : vector<8x32xf32>
    %257 = vector.extract_strided_slice %250 {offsets = [0, 32], sizes = [8, 32], strides = [1, 1]} : vector<8x128xf32> to vector<8x32xf32>
    %258 = arith.negf %257 : vector<8x32xf32>
    %259 = math.exp %258 : vector<8x32xf32>
    %cst_96 = arith.constant 1.000000e+00 : f32
    %260 = vector.broadcast %cst_96 : f32 to vector<8x32xf32>
    %261 = arith.addf %260, %259 : vector<8x32xf32>
    %262 = arith.divf %260, %261 : vector<8x32xf32>
    %263 = vector.extract_strided_slice %250 {offsets = [0, 64], sizes = [8, 32], strides = [1, 1]} : vector<8x128xf32> to vector<8x32xf32>
    %264 = math.tanh %263 : vector<8x32xf32>
    %265 = vector.extract_strided_slice %250 {offsets = [0, 96], sizes = [8, 32], strides = [1, 1]} : vector<8x128xf32> to vector<8x32xf32>
    %266 = arith.negf %265 : vector<8x32xf32>
    %267 = math.exp %266 : vector<8x32xf32>
    %cst_97 = arith.constant 1.000000e+00 : f32
    %268 = vector.broadcast %cst_97 : f32 to vector<8x32xf32>
    %269 = arith.addf %268, %267 : vector<8x32xf32>
    %270 = arith.divf %268, %269 : vector<8x32xf32>
    %271 = arith.mulf %262, %240 : vector<8x32xf32>
    %272 = arith.mulf %256, %264 : vector<8x32xf32>
    %273 = arith.addf %271, %272 : vector<8x32xf32>
    %274 = math.tanh %273 : vector<8x32xf32>
    %275 = arith.mulf %270, %274 : vector<8x32xf32>
    %276 = arith.index_cast %246 : i32 to index
    %c0_98 = arith.constant 0 : index
    %277 = vector.load %arg18[%276, %c0_98] : memref<56x32xf32, #tpu.memory_space<vmem>>, vector<8x32xf32>
    tpu.vector_store %arg18[%276, %c0_98], %275 {strides = array<i32>} : memref<56x32xf32, #tpu.memory_space<vmem>>, vector<8x32xf32>,
    %c6_i32 = arith.constant 6 : i32
    %c8_i32_99 = arith.constant 8 : i32
    %278 = arith.muli %c6_i32, %c8_i32_99 : i32
    %279 = tpu.assume_multiple %278, 8 : i32
    %280 = arith.index_cast %279 : i32 to index
    %c0_100 = arith.constant 0 : index
    %281 = vector.load %arg17[%280, %c0_100] : memref<56x128xf32, #tpu.memory_space<vmem>>, vector<8x128xf32>
    %cst_101 = arith.constant dense<0.000000e+00> : vector<8x128xf32>
    %282 = tpu.matmul %275, %72, %cst_101 {dimension_numbers = #tpu.dot_dimension_numbers<[1], [0], [0], [1], [0, 0, 1, 1], [], []>} : vector<8x32xf32>, vector<32x128xf32>, vector<8x128xf32> -> vector<8x128xf32>
    %283 = arith.addf %281, %282 : vector<8x128xf32>
    %284 = vector.extract_strided_slice %283 {offsets = [0, 0], sizes = [8, 32], strides = [1, 1]} : vector<8x128xf32> to vector<8x32xf32>
    %285 = arith.negf %284 : vector<8x32xf32>
    %286 = math.exp %285 : vector<8x32xf32>
    %cst_102 = arith.constant 1.000000e+00 : f32
    %287 = vector.broadcast %cst_102 : f32 to vector<8x32xf32>
    %288 = arith.addf %287, %286 : vector<8x32xf32>
    %289 = arith.divf %287, %288 : vector<8x32xf32>
    %290 = vector.extract_strided_slice %283 {offsets = [0, 32], sizes = [8, 32], strides = [1, 1]} : vector<8x128xf32> to vector<8x32xf32>
    %291 = arith.negf %290 : vector<8x32xf32>
    %292 = math.exp %291 : vector<8x32xf32>
    %cst_103 = arith.constant 1.000000e+00 : f32
    %293 = vector.broadcast %cst_103 : f32 to vector<8x32xf32>
    %294 = arith.addf %293, %292 : vector<8x32xf32>
    %295 = arith.divf %293, %294 : vector<8x32xf32>
    %296 = vector.extract_strided_slice %283 {offsets = [0, 64], sizes = [8, 32], strides = [1, 1]} : vector<8x128xf32> to vector<8x32xf32>
    %297 = math.tanh %296 : vector<8x32xf32>
    %298 = vector.extract_strided_slice %283 {offsets = [0, 96], sizes = [8, 32], strides = [1, 1]} : vector<8x128xf32> to vector<8x32xf32>
    %299 = arith.negf %298 : vector<8x32xf32>
    %300 = math.exp %299 : vector<8x32xf32>
    %cst_104 = arith.constant 1.000000e+00 : f32
    %301 = vector.broadcast %cst_104 : f32 to vector<8x32xf32>
    %302 = arith.addf %301, %300 : vector<8x32xf32>
    %303 = arith.divf %301, %302 : vector<8x32xf32>
    %304 = arith.mulf %295, %273 : vector<8x32xf32>
    %305 = arith.mulf %289, %297 : vector<8x32xf32>
    %306 = arith.addf %304, %305 : vector<8x32xf32>
    %307 = math.tanh %306 : vector<8x32xf32>
    %308 = arith.mulf %303, %307 : vector<8x32xf32>
    %309 = arith.index_cast %279 : i32 to index
    %c0_105 = arith.constant 0 : index
    %310 = vector.load %arg18[%309, %c0_105] : memref<56x32xf32, #tpu.memory_space<vmem>>, vector<8x32xf32>
    tpu.vector_store %arg18[%309, %c0_105], %308 {strides = array<i32>} : memref<56x32xf32, #tpu.memory_space<vmem>>, vector<8x32xf32>,
    %c7_i32 = arith.constant 7 : i32
    %c0_106 = arith.constant 0 : index
    %c0_107 = arith.constant 0 : index
    %311 = vector.load %arg11[%c0_106, %c0_107] : memref<32x128xf32, #tpu.memory_space<vmem>>, vector<32x128xf32>
    %c0_108 = arith.constant 0 : index
    %c0_109 = arith.constant 0 : index
    %312 = vector.load %arg12[%c0_108, %c0_109] : memref<32x128xf32, #tpu.memory_space<vmem>>, vector<32x128xf32>
    %c0_110 = arith.constant 0 : index
    %c0_111 = arith.constant 0 : index
    %313 = vector.load %arg13[%c0_110, %c0_111] : memref<1x128xf32, #tpu.memory_space<vmem>>, vector<1x128xf32>
    %c0_112 = arith.constant 0 : index
    %c0_113 = arith.constant 0 : index
    %314 = vector.load %arg18[%c0_112, %c0_113] : memref<56x32xf32, #tpu.memory_space<vmem>>, vector<56x32xf32>
    %cst_114 = arith.constant dense<0.000000e+00> : vector<56x128xf32>
    %315 = tpu.matmul %314, %311, %cst_114 {dimension_numbers = #tpu.dot_dimension_numbers<[1], [0], [0], [1], [0, 0, 1, 1], [], []>} : vector<56x32xf32>, vector<32x128xf32>, vector<56x128xf32> -> vector<56x128xf32>
    %316 = vector.broadcast %313 : vector<1x128xf32> to vector<56x128xf32>
    %317 = arith.addf %315, %316 : vector<56x128xf32>
    %c0_115 = arith.constant 0 : index
    %c0_116 = arith.constant 0 : index
    %318 = vector.load %arg17[%c0_115, %c0_116] : memref<56x128xf32, #tpu.memory_space<vmem>>, vector<56x128xf32>
    tpu.vector_store %arg17[%c0_115, %c0_116], %317 {strides = array<i32>} : memref<56x128xf32, #tpu.memory_space<vmem>>, vector<56x128xf32>,
    %cst_117 = arith.constant 0.000000e+00 : f32
    %319 = vector.broadcast %cst_117 : f32 to vector<8x32xf32>
    %cst_118 = arith.constant 0.000000e+00 : f32
    %320 = vector.broadcast %cst_118 : f32 to vector<8x32xf32>
    %c0_i32_119 = arith.constant 0 : i32
    %c8_i32_120 = arith.constant 8 : i32
    %321 = arith.muli %c0_i32_119, %c8_i32_120 : i32
    %322 = tpu.assume_multiple %321, 8 : i32
    %323 = arith.index_cast %322 : i32 to index
    %c0_121 = arith.constant 0 : index
    %324 = vector.load %arg17[%323, %c0_121] : memref<56x128xf32, #tpu.memory_space<vmem>>, vector<8x128xf32>
    %cst_122 = arith.constant dense<0.000000e+00> : vector<8x128xf32>
    %325 = tpu.matmul %319, %312, %cst_122 {dimension_numbers = #tpu.dot_dimension_numbers<[1], [0], [0], [1], [0, 0, 1, 1], [], []>} : vector<8x32xf32>, vector<32x128xf32>, vector<8x128xf32> -> vector<8x128xf32>
    %326 = arith.addf %324, %325 : vector<8x128xf32>
    %327 = vector.extract_strided_slice %326 {offsets = [0, 0], sizes = [8, 32], strides = [1, 1]} : vector<8x128xf32> to vector<8x32xf32>
    %328 = arith.negf %327 : vector<8x32xf32>
    %329 = math.exp %328 : vector<8x32xf32>
    %cst_123 = arith.constant 1.000000e+00 : f32
    %330 = vector.broadcast %cst_123 : f32 to vector<8x32xf32>
    %331 = arith.addf %330, %329 : vector<8x32xf32>
    %332 = arith.divf %330, %331 : vector<8x32xf32>
    %333 = vector.extract_strided_slice %326 {offsets = [0, 32], sizes = [8, 32], strides = [1, 1]} : vector<8x128xf32> to vector<8x32xf32>
    %334 = arith.negf %333 : vector<8x32xf32>
    %335 = math.exp %334 : vector<8x32xf32>
    %cst_124 = arith.constant 1.000000e+00 : f32
    %336 = vector.broadcast %cst_124 : f32 to vector<8x32xf32>
    %337 = arith.addf %336, %335 : vector<8x32xf32>
    %338 = arith.divf %336, %337 : vector<8x32xf32>
    %339 = vector.extract_strided_slice %326 {offsets = [0, 64], sizes = [8, 32], strides = [1, 1]} : vector<8x128xf32> to vector<8x32xf32>
    %340 = math.tanh %339 : vector<8x32xf32>
    %341 = vector.extract_strided_slice %326 {offsets = [0, 96], sizes = [8, 32], strides = [1, 1]} : vector<8x128xf32> to vector<8x32xf32>
    %342 = arith.negf %341 : vector<8x32xf32>
    %343 = math.exp %342 : vector<8x32xf32>
    %cst_125 = arith.constant 1.000000e+00 : f32
    %344 = vector.broadcast %cst_125 : f32 to vector<8x32xf32>
    %345 = arith.addf %344, %343 : vector<8x32xf32>
    %346 = arith.divf %344, %345 : vector<8x32xf32>
    %347 = arith.mulf %338, %320 : vector<8x32xf32>
    %348 = arith.mulf %332, %340 : vector<8x32xf32>
    %349 = arith.addf %347, %348 : vector<8x32xf32>
    %350 = math.tanh %349 : vector<8x32xf32>
    %351 = arith.mulf %346, %350 : vector<8x32xf32>
    %c1_i32_126 = arith.constant 1 : i32
    %c8_i32_127 = arith.constant 8 : i32
    %352 = arith.muli %c1_i32_126, %c8_i32_127 : i32
    %353 = tpu.assume_multiple %352, 8 : i32
    %354 = arith.index_cast %353 : i32 to index
    %c0_128 = arith.constant 0 : index
    %355 = vector.load %arg17[%354, %c0_128] : memref<56x128xf32, #tpu.memory_space<vmem>>, vector<8x128xf32>
    %cst_129 = arith.constant dense<0.000000e+00> : vector<8x128xf32>
    %356 = tpu.matmul %351, %312, %cst_129 {dimension_numbers = #tpu.dot_dimension_numbers<[1], [0], [0], [1], [0, 0, 1, 1], [], []>} : vector<8x32xf32>, vector<32x128xf32>, vector<8x128xf32> -> vector<8x128xf32>
    %357 = arith.addf %355, %356 : vector<8x128xf32>
    %358 = vector.extract_strided_slice %357 {offsets = [0, 0], sizes = [8, 32], strides = [1, 1]} : vector<8x128xf32> to vector<8x32xf32>
    %359 = arith.negf %358 : vector<8x32xf32>
    %360 = math.exp %359 : vector<8x32xf32>
    %cst_130 = arith.constant 1.000000e+00 : f32
    %361 = vector.broadcast %cst_130 : f32 to vector<8x32xf32>
    %362 = arith.addf %361, %360 : vector<8x32xf32>
    %363 = arith.divf %361, %362 : vector<8x32xf32>
    %364 = vector.extract_strided_slice %357 {offsets = [0, 32], sizes = [8, 32], strides = [1, 1]} : vector<8x128xf32> to vector<8x32xf32>
    %365 = arith.negf %364 : vector<8x32xf32>
    %366 = math.exp %365 : vector<8x32xf32>
    %cst_131 = arith.constant 1.000000e+00 : f32
    %367 = vector.broadcast %cst_131 : f32 to vector<8x32xf32>
    %368 = arith.addf %367, %366 : vector<8x32xf32>
    %369 = arith.divf %367, %368 : vector<8x32xf32>
    %370 = vector.extract_strided_slice %357 {offsets = [0, 64], sizes = [8, 32], strides = [1, 1]} : vector<8x128xf32> to vector<8x32xf32>
    %371 = math.tanh %370 : vector<8x32xf32>
    %372 = vector.extract_strided_slice %357 {offsets = [0, 96], sizes = [8, 32], strides = [1, 1]} : vector<8x128xf32> to vector<8x32xf32>
    %373 = arith.negf %372 : vector<8x32xf32>
    %374 = math.exp %373 : vector<8x32xf32>
    %cst_132 = arith.constant 1.000000e+00 : f32
    %375 = vector.broadcast %cst_132 : f32 to vector<8x32xf32>
    %376 = arith.addf %375, %374 : vector<8x32xf32>
    %377 = arith.divf %375, %376 : vector<8x32xf32>
    %378 = arith.mulf %369, %349 : vector<8x32xf32>
    %379 = arith.mulf %363, %371 : vector<8x32xf32>
    %380 = arith.addf %378, %379 : vector<8x32xf32>
    %381 = math.tanh %380 : vector<8x32xf32>
    %382 = arith.mulf %377, %381 : vector<8x32xf32>
    %c2_i32_133 = arith.constant 2 : i32
    %c8_i32_134 = arith.constant 8 : i32
    %383 = arith.muli %c2_i32_133, %c8_i32_134 : i32
    %384 = tpu.assume_multiple %383, 8 : i32
    %385 = arith.index_cast %384 : i32 to index
    %c0_135 = arith.constant 0 : index
    %386 = vector.load %arg17[%385, %c0_135] : memref<56x128xf32, #tpu.memory_space<vmem>>, vector<8x128xf32>
    %cst_136 = arith.constant dense<0.000000e+00> : vector<8x128xf32>
    %387 = tpu.matmul %382, %312, %cst_136 {dimension_numbers = #tpu.dot_dimension_numbers<[1], [0], [0], [1], [0, 0, 1, 1], [], []>} : vector<8x32xf32>, vector<32x128xf32>, vector<8x128xf32> -> vector<8x128xf32>
    %388 = arith.addf %386, %387 : vector<8x128xf32>
    %389 = vector.extract_strided_slice %388 {offsets = [0, 0], sizes = [8, 32], strides = [1, 1]} : vector<8x128xf32> to vector<8x32xf32>
    %390 = arith.negf %389 : vector<8x32xf32>
    %391 = math.exp %390 : vector<8x32xf32>
    %cst_137 = arith.constant 1.000000e+00 : f32
    %392 = vector.broadcast %cst_137 : f32 to vector<8x32xf32>
    %393 = arith.addf %392, %391 : vector<8x32xf32>
    %394 = arith.divf %392, %393 : vector<8x32xf32>
    %395 = vector.extract_strided_slice %388 {offsets = [0, 32], sizes = [8, 32], strides = [1, 1]} : vector<8x128xf32> to vector<8x32xf32>
    %396 = arith.negf %395 : vector<8x32xf32>
    %397 = math.exp %396 : vector<8x32xf32>
    %cst_138 = arith.constant 1.000000e+00 : f32
    %398 = vector.broadcast %cst_138 : f32 to vector<8x32xf32>
    %399 = arith.addf %398, %397 : vector<8x32xf32>
    %400 = arith.divf %398, %399 : vector<8x32xf32>
    %401 = vector.extract_strided_slice %388 {offsets = [0, 64], sizes = [8, 32], strides = [1, 1]} : vector<8x128xf32> to vector<8x32xf32>
    %402 = math.tanh %401 : vector<8x32xf32>
    %403 = vector.extract_strided_slice %388 {offsets = [0, 96], sizes = [8, 32], strides = [1, 1]} : vector<8x128xf32> to vector<8x32xf32>
    %404 = arith.negf %403 : vector<8x32xf32>
    %405 = math.exp %404 : vector<8x32xf32>
    %cst_139 = arith.constant 1.000000e+00 : f32
    %406 = vector.broadcast %cst_139 : f32 to vector<8x32xf32>
    %407 = arith.addf %406, %405 : vector<8x32xf32>
    %408 = arith.divf %406, %407 : vector<8x32xf32>
    %409 = arith.mulf %400, %380 : vector<8x32xf32>
    %410 = arith.mulf %394, %402 : vector<8x32xf32>
    %411 = arith.addf %409, %410 : vector<8x32xf32>
    %412 = math.tanh %411 : vector<8x32xf32>
    %413 = arith.mulf %408, %412 : vector<8x32xf32>
    %c3_i32_140 = arith.constant 3 : i32
    %c8_i32_141 = arith.constant 8 : i32
    %414 = arith.muli %c3_i32_140, %c8_i32_141 : i32
    %415 = tpu.assume_multiple %414, 8 : i32
    %416 = arith.index_cast %415 : i32 to index
    %c0_142 = arith.constant 0 : index
    %417 = vector.load %arg17[%416, %c0_142] : memref<56x128xf32, #tpu.memory_space<vmem>>, vector<8x128xf32>
    %cst_143 = arith.constant dense<0.000000e+00> : vector<8x128xf32>
    %418 = tpu.matmul %413, %312, %cst_143 {dimension_numbers = #tpu.dot_dimension_numbers<[1], [0], [0], [1], [0, 0, 1, 1], [], []>} : vector<8x32xf32>, vector<32x128xf32>, vector<8x128xf32> -> vector<8x128xf32>
    %419 = arith.addf %417, %418 : vector<8x128xf32>
    %420 = vector.extract_strided_slice %419 {offsets = [0, 0], sizes = [8, 32], strides = [1, 1]} : vector<8x128xf32> to vector<8x32xf32>
    %421 = arith.negf %420 : vector<8x32xf32>
    %422 = math.exp %421 : vector<8x32xf32>
    %cst_144 = arith.constant 1.000000e+00 : f32
    %423 = vector.broadcast %cst_144 : f32 to vector<8x32xf32>
    %424 = arith.addf %423, %422 : vector<8x32xf32>
    %425 = arith.divf %423, %424 : vector<8x32xf32>
    %426 = vector.extract_strided_slice %419 {offsets = [0, 32], sizes = [8, 32], strides = [1, 1]} : vector<8x128xf32> to vector<8x32xf32>
    %427 = arith.negf %426 : vector<8x32xf32>
    %428 = math.exp %427 : vector<8x32xf32>
    %cst_145 = arith.constant 1.000000e+00 : f32
    %429 = vector.broadcast %cst_145 : f32 to vector<8x32xf32>
    %430 = arith.addf %429, %428 : vector<8x32xf32>
    %431 = arith.divf %429, %430 : vector<8x32xf32>
    %432 = vector.extract_strided_slice %419 {offsets = [0, 64], sizes = [8, 32], strides = [1, 1]} : vector<8x128xf32> to vector<8x32xf32>
    %433 = math.tanh %432 : vector<8x32xf32>
    %434 = vector.extract_strided_slice %419 {offsets = [0, 96], sizes = [8, 32], strides = [1, 1]} : vector<8x128xf32> to vector<8x32xf32>
    %435 = arith.negf %434 : vector<8x32xf32>
    %436 = math.exp %435 : vector<8x32xf32>
    %cst_146 = arith.constant 1.000000e+00 : f32
    %437 = vector.broadcast %cst_146 : f32 to vector<8x32xf32>
    %438 = arith.addf %437, %436 : vector<8x32xf32>
    %439 = arith.divf %437, %438 : vector<8x32xf32>
    %440 = arith.mulf %431, %411 : vector<8x32xf32>
    %441 = arith.mulf %425, %433 : vector<8x32xf32>
    %442 = arith.addf %440, %441 : vector<8x32xf32>
    %443 = math.tanh %442 : vector<8x32xf32>
    %444 = arith.mulf %439, %443 : vector<8x32xf32>
    %c4_i32_147 = arith.constant 4 : i32
    %c8_i32_148 = arith.constant 8 : i32
    %445 = arith.muli %c4_i32_147, %c8_i32_148 : i32
    %446 = tpu.assume_multiple %445, 8 : i32
    %447 = arith.index_cast %446 : i32 to index
    %c0_149 = arith.constant 0 : index
    %448 = vector.load %arg17[%447, %c0_149] : memref<56x128xf32, #tpu.memory_space<vmem>>, vector<8x128xf32>
    %cst_150 = arith.constant dense<0.000000e+00> : vector<8x128xf32>
    %449 = tpu.matmul %444, %312, %cst_150 {dimension_numbers = #tpu.dot_dimension_numbers<[1], [0], [0], [1], [0, 0, 1, 1], [], []>} : vector<8x32xf32>, vector<32x128xf32>, vector<8x128xf32> -> vector<8x128xf32>
    %450 = arith.addf %448, %449 : vector<8x128xf32>
    %451 = vector.extract_strided_slice %450 {offsets = [0, 0], sizes = [8, 32], strides = [1, 1]} : vector<8x128xf32> to vector<8x32xf32>
    %452 = arith.negf %451 : vector<8x32xf32>
    %453 = math.exp %452 : vector<8x32xf32>
    %cst_151 = arith.constant 1.000000e+00 : f32
    %454 = vector.broadcast %cst_151 : f32 to vector<8x32xf32>
    %455 = arith.addf %454, %453 : vector<8x32xf32>
    %456 = arith.divf %454, %455 : vector<8x32xf32>
    %457 = vector.extract_strided_slice %450 {offsets = [0, 32], sizes = [8, 32], strides = [1, 1]} : vector<8x128xf32> to vector<8x32xf32>
    %458 = arith.negf %457 : vector<8x32xf32>
    %459 = math.exp %458 : vector<8x32xf32>
    %cst_152 = arith.constant 1.000000e+00 : f32
    %460 = vector.broadcast %cst_152 : f32 to vector<8x32xf32>
    %461 = arith.addf %460, %459 : vector<8x32xf32>
    %462 = arith.divf %460, %461 : vector<8x32xf32>
    %463 = vector.extract_strided_slice %450 {offsets = [0, 64], sizes = [8, 32], strides = [1, 1]} : vector<8x128xf32> to vector<8x32xf32>
    %464 = math.tanh %463 : vector<8x32xf32>
    %465 = vector.extract_strided_slice %450 {offsets = [0, 96], sizes = [8, 32], strides = [1, 1]} : vector<8x128xf32> to vector<8x32xf32>
    %466 = arith.negf %465 : vector<8x32xf32>
    %467 = math.exp %466 : vector<8x32xf32>
    %cst_153 = arith.constant 1.000000e+00 : f32
    %468 = vector.broadcast %cst_153 : f32 to vector<8x32xf32>
    %469 = arith.addf %468, %467 : vector<8x32xf32>
    %470 = arith.divf %468, %469 : vector<8x32xf32>
    %471 = arith.mulf %462, %442 : vector<8x32xf32>
    %472 = arith.mulf %456, %464 : vector<8x32xf32>
    %473 = arith.addf %471, %472 : vector<8x32xf32>
    %474 = math.tanh %473 : vector<8x32xf32>
    %475 = arith.mulf %470, %474 : vector<8x32xf32>
    %c5_i32_154 = arith.constant 5 : i32
    %c8_i32_155 = arith.constant 8 : i32
    %476 = arith.muli %c5_i32_154, %c8_i32_155 : i32
    %477 = tpu.assume_multiple %476, 8 : i32
    %478 = arith.index_cast %477 : i32 to index
    %c0_156 = arith.constant 0 : index
    %479 = vector.load %arg17[%478, %c0_156] : memref<56x128xf32, #tpu.memory_space<vmem>>, vector<8x128xf32>
    %cst_157 = arith.constant dense<0.000000e+00> : vector<8x128xf32>
    %480 = tpu.matmul %475, %312, %cst_157 {dimension_numbers = #tpu.dot_dimension_numbers<[1], [0], [0], [1], [0, 0, 1, 1], [], []>} : vector<8x32xf32>, vector<32x128xf32>, vector<8x128xf32> -> vector<8x128xf32>
    %481 = arith.addf %479, %480 : vector<8x128xf32>
    %482 = vector.extract_strided_slice %481 {offsets = [0, 0], sizes = [8, 32], strides = [1, 1]} : vector<8x128xf32> to vector<8x32xf32>
    %483 = arith.negf %482 : vector<8x32xf32>
    %484 = math.exp %483 : vector<8x32xf32>
    %cst_158 = arith.constant 1.000000e+00 : f32
    %485 = vector.broadcast %cst_158 : f32 to vector<8x32xf32>
    %486 = arith.addf %485, %484 : vector<8x32xf32>
    %487 = arith.divf %485, %486 : vector<8x32xf32>
    %488 = vector.extract_strided_slice %481 {offsets = [0, 32], sizes = [8, 32], strides = [1, 1]} : vector<8x128xf32> to vector<8x32xf32>
    %489 = arith.negf %488 : vector<8x32xf32>
    %490 = math.exp %489 : vector<8x32xf32>
    %cst_159 = arith.constant 1.000000e+00 : f32
    %491 = vector.broadcast %cst_159 : f32 to vector<8x32xf32>
    %492 = arith.addf %491, %490 : vector<8x32xf32>
    %493 = arith.divf %491, %492 : vector<8x32xf32>
    %494 = vector.extract_strided_slice %481 {offsets = [0, 64], sizes = [8, 32], strides = [1, 1]} : vector<8x128xf32> to vector<8x32xf32>
    %495 = math.tanh %494 : vector<8x32xf32>
    %496 = vector.extract_strided_slice %481 {offsets = [0, 96], sizes = [8, 32], strides = [1, 1]} : vector<8x128xf32> to vector<8x32xf32>
    %497 = arith.negf %496 : vector<8x32xf32>
    %498 = math.exp %497 : vector<8x32xf32>
    %cst_160 = arith.constant 1.000000e+00 : f32
    %499 = vector.broadcast %cst_160 : f32 to vector<8x32xf32>
    %500 = arith.addf %499, %498 : vector<8x32xf32>
    %501 = arith.divf %499, %500 : vector<8x32xf32>
    %502 = arith.mulf %493, %473 : vector<8x32xf32>
    %503 = arith.mulf %487, %495 : vector<8x32xf32>
    %504 = arith.addf %502, %503 : vector<8x32xf32>
    %505 = math.tanh %504 : vector<8x32xf32>
    %506 = arith.mulf %501, %505 : vector<8x32xf32>
    %c6_i32_161 = arith.constant 6 : i32
    %c8_i32_162 = arith.constant 8 : i32
    %507 = arith.muli %c6_i32_161, %c8_i32_162 : i32
    %508 = tpu.assume_multiple %507, 8 : i32
    %509 = arith.index_cast %508 : i32 to index
    %c0_163 = arith.constant 0 : index
    %510 = vector.load %arg17[%509, %c0_163] : memref<56x128xf32, #tpu.memory_space<vmem>>, vector<8x128xf32>
    %cst_164 = arith.constant dense<0.000000e+00> : vector<8x128xf32>
    %511 = tpu.matmul %506, %312, %cst_164 {dimension_numbers = #tpu.dot_dimension_numbers<[1], [0], [0], [1], [0, 0, 1, 1], [], []>} : vector<8x32xf32>, vector<32x128xf32>, vector<8x128xf32> -> vector<8x128xf32>
    %512 = arith.addf %510, %511 : vector<8x128xf32>
    %513 = vector.extract_strided_slice %512 {offsets = [0, 0], sizes = [8, 32], strides = [1, 1]} : vector<8x128xf32> to vector<8x32xf32>
    %514 = arith.negf %513 : vector<8x32xf32>
    %515 = math.exp %514 : vector<8x32xf32>
    %cst_165 = arith.constant 1.000000e+00 : f32
    %516 = vector.broadcast %cst_165 : f32 to vector<8x32xf32>
    %517 = arith.addf %516, %515 : vector<8x32xf32>
    %518 = arith.divf %516, %517 : vector<8x32xf32>
    %519 = vector.extract_strided_slice %512 {offsets = [0, 32], sizes = [8, 32], strides = [1, 1]} : vector<8x128xf32> to vector<8x32xf32>
    %520 = arith.negf %519 : vector<8x32xf32>
    %521 = math.exp %520 : vector<8x32xf32>
    %cst_166 = arith.constant 1.000000e+00 : f32
    %522 = vector.broadcast %cst_166 : f32 to vector<8x32xf32>
    %523 = arith.addf %522, %521 : vector<8x32xf32>
    %524 = arith.divf %522, %523 : vector<8x32xf32>
    %525 = vector.extract_strided_slice %512 {offsets = [0, 64], sizes = [8, 32], strides = [1, 1]} : vector<8x128xf32> to vector<8x32xf32>
    %526 = math.tanh %525 : vector<8x32xf32>
    %527 = vector.extract_strided_slice %512 {offsets = [0, 96], sizes = [8, 32], strides = [1, 1]} : vector<8x128xf32> to vector<8x32xf32>
    %528 = arith.negf %527 : vector<8x32xf32>
    %529 = math.exp %528 : vector<8x32xf32>
    %cst_167 = arith.constant 1.000000e+00 : f32
    %530 = vector.broadcast %cst_167 : f32 to vector<8x32xf32>
    %531 = arith.addf %530, %529 : vector<8x32xf32>
    %532 = arith.divf %530, %531 : vector<8x32xf32>
    %533 = arith.mulf %524, %504 : vector<8x32xf32>
    %534 = arith.mulf %518, %526 : vector<8x32xf32>
    %535 = arith.addf %533, %534 : vector<8x32xf32>
    %536 = math.tanh %535 : vector<8x32xf32>
    %537 = arith.mulf %532, %536 : vector<8x32xf32>
    %c7_i32_168 = arith.constant 7 : i32
    %c0_169 = arith.constant 0 : index
    %c0_170 = arith.constant 0 : index
    %538 = vector.load %arg14[%c0_169, %c0_170] : memref<32x5xf32, #tpu.memory_space<vmem>>, vector<32x5xf32>
    %cst_171 = arith.constant dense<0.000000e+00> : vector<8x5xf32>
    %539 = tpu.matmul %537, %538, %cst_171 {dimension_numbers = #tpu.dot_dimension_numbers<[1], [0], [0], [1], [0, 0, 1, 1], [], []>} : vector<8x32xf32>, vector<32x5xf32>, vector<8x5xf32> -> vector<8x5xf32>
    %c0_172 = arith.constant 0 : index
    %c0_173 = arith.constant 0 : index
    %540 = vector.load %arg15[%c0_172, %c0_173] : memref<1x5xf32, #tpu.memory_space<vmem>>, vector<1x5xf32>
    %541 = vector.broadcast %540 : vector<1x5xf32> to vector<8x5xf32>
    %542 = arith.addf %539, %541 : vector<8x5xf32>
    %c0_174 = arith.constant 0 : index
    %c0_175 = arith.constant 0 : index
    %543 = vector.load %arg16[%c0_174, %c0_175] : memref<8x5xf32, #tpu.memory_space<vmem>>, vector<8x5xf32>
    tpu.vector_store %arg16[%c0_174, %c0_175], %542 {strides = array<i32>} : memref<8x5xf32, #tpu.memory_space<vmem>>, vector<8x5xf32>,
    return
  }
  func.func @transform_0(%arg0: i32) -> (i32, i32, i32) {
    %c0_i32 = arith.constant 0 : i32
    %c0_i32_0 = arith.constant 0 : i32
    %c0_i32_1 = arith.constant 0 : i32
    return %arg0, %c0_i32, %c0_i32_0 : i32, i32, i32
  }
  func.func @transform_1(%arg0: i32) -> (i32, i32, i32) {
    %c0_i32 = arith.constant 0 : i32
    %c0_i32_0 = arith.constant 0 : i32
    %c0_i32_1 = arith.constant 0 : i32
    %c0_i32_2 = arith.constant 0 : i32
    return %c0_i32, %c0_i32_0, %c0_i32_1 : i32, i32, i32
  }
  func.func @transform_2(%arg0: i32) -> (i32, i32) {
    %c0_i32 = arith.constant 0 : i32
    %c0_i32_0 = arith.constant 0 : i32
    %c0_i32_1 = arith.constant 0 : i32
    return %c0_i32, %c0_i32_0 : i32, i32
  }
  func.func @transform_3(%arg0: i32) -> (i32, i32) {
    %c0_i32 = arith.constant 0 : i32
    %c0_i32_0 = arith.constant 0 : i32
    %c0_i32_1 = arith.constant 0 : i32
    return %c0_i32, %c0_i32_0 : i32, i32
  }
  func.func @transform_4(%arg0: i32) -> (i32, i32) {
    %c0_i32 = arith.constant 0 : i32
    %c0_i32_0 = arith.constant 0 : i32
    %c0_i32_1 = arith.constant 0 : i32
    return %c0_i32, %c0_i32_0 : i32, i32
  }
  func.func @transform_5(%arg0: i32) -> (i32, i32, i32) {
    %c0_i32 = arith.constant 0 : i32
    %c0_i32_0 = arith.constant 0 : i32
    %c0_i32_1 = arith.constant 0 : i32
    %c0_i32_2 = arith.constant 0 : i32
    return %c0_i32, %c0_i32_0, %c0_i32_1 : i32, i32, i32
  }
  func.func @transform_6(%arg0: i32) -> (i32, i32) {
    %c0_i32 = arith.constant 0 : i32
    %c0_i32_0 = arith.constant 0 : i32
    %c0_i32_1 = arith.constant 0 : i32
    return %c0_i32, %c0_i32_0 : i32, i32
  }
  func.func @transform_7(%arg0: i32) -> (i32, i32) {
    %c0_i32 = arith.constant 0 : i32
    %c0_i32_0 = arith.constant 0 : i32
    %c0_i32_1 = arith.constant 0 : i32
    return %c0_i32, %c0_i32_0 : i32, i32
  }
  func.func @transform_8(%arg0: i32) -> (i32, i32) {
    %c0_i32 = arith.constant 0 : i32
    %c0_i32_0 = arith.constant 0 : i32
    %c0_i32_1 = arith.constant 0 : i32
    return %c0_i32, %c0_i32_0 : i32, i32
  }
  func.func @transform_9(%arg0: i32) -> (i32, i32) {
    %c0_i32 = arith.constant 0 : i32
    %c0_i32_0 = arith.constant 0 : i32
    %c0_i32_1 = arith.constant 0 : i32
    return %c0_i32, %c0_i32_0 : i32, i32
  }
  func.func @transform_10(%arg0: i32) -> (i32, i32) {
    %c0_i32 = arith.constant 0 : i32
    %c0_i32_0 = arith.constant 0 : i32
    %c0_i32_1 = arith.constant 0 : i32
    return %c0_i32, %c0_i32_0 : i32, i32
  }
  func.func @transform_11(%arg0: i32) -> (i32, i32) {
    %c0_i32 = arith.constant 0 : i32
    %c0_i32_0 = arith.constant 0 : i32
    %c0_i32_1 = arith.constant 0 : i32
    return %c0_i32, %c0_i32_0 : i32, i32
  }
  func.func @transform_12(%arg0: i32) -> (i32, i32) {
    %c0_i32 = arith.constant 0 : i32
    %c0_i32_0 = arith.constant 0 : i32
    %c0_i32_1 = arith.constant 0 : i32
    return %c0_i32, %c0_i32_0 : i32, i32
  }
  func.func @transform_13(%arg0: i32) -> (i32, i32) {
    %c0_i32 = arith.constant 0 : i32
    %c0_i32_0 = arith.constant 0 : i32
    %c0_i32_1 = arith.constant 0 : i32
    return %c0_i32, %c0_i32_0 : i32, i32
  }
  func.func @transform_14(%arg0: i32) -> (i32, i32) {
    %c0_i32 = arith.constant 0 : i32
    %c0_i32_0 = arith.constant 0 : i32
    %c0_i32_1 = arith.constant 0 : i32
    return %c0_i32, %c0_i32_0 : i32, i32
  }
  func.func @transform_15(%arg0: i32) -> (i32, i32) {
    %c0_i32 = arith.constant 0 : i32
    %c0_i32_0 = arith.constant 0 : i32
    return %arg0, %c0_i32 : i32, i32
  }
}

</mosaic_0001>

<llo_original>
// kernel: tpu_custom_call.1
$region0: #{tpu_custom_call.1}
  #allocation0 [shape = 'u32[]', space=smem, size = 0x4, offset = 0x4, fixed_abs, tag = 'smem constant byte address 0x4 - core index']
  #allocation1 [shape = 'u32[72,128]{1,0:T(1,128)}', space=vmem, size = 0x9000, scoped, tag = 'internal scratch']
  #allocation2 [shape = 'f32[56,128]{1,0:T(8,128)}', space=vmem, size = 0x7000, scoped, tag = 'scratch operand']
  #allocation3 [shape = 'f32[56,32]{1,0:T(8,128)}', space=vmem, size = 0x7000, scoped, tag = 'scratch operand']
  #allocation4 [shape = 'f32[72,32]{1,0:T(8,128)}', space=vmem, size = 0x9000, scoped, tag = 'scratch operand']
  %s0 = inlined_call_operand.vmem [shape: f32[2,144,5], index: 0, kind: input, shape index: {}]
  %s1 = inlined_call_operand.vmem [shape: f32[3,5,96], index: 1, kind: input, shape index: {}]
  %s2 = inlined_call_operand.vmem [shape: f32[1,96], index: 2, kind: input, shape index: {}]
  %s3 = inlined_call_operand.vmem [shape: f32[1,96], index: 3, kind: input, shape index: {}]
  %s4 = inlined_call_operand.vmem [shape: f32[1,96], index: 4, kind: input, shape index: {}]
  %s5 = inlined_call_operand.vmem [shape: f32[3,32,64], index: 5, kind: input, shape index: {}]
  %s6 = inlined_call_operand.vmem [shape: f32[1,64], index: 6, kind: input, shape index: {}]
  %s7 = inlined_call_operand.vmem [shape: f32[64,128], index: 7, kind: input, shape index: {}]
  %s8 = inlined_call_operand.vmem [shape: f32[32,128], index: 8, kind: input, shape index: {}]
  %s9 = inlined_call_operand.vmem [shape: f32[1,128], index: 9, kind: input, shape index: {}]
  %s10 = inlined_call_operand.vmem [shape: f32[32,128], index: 10, kind: input, shape index: {}]
  %s11 = inlined_call_operand.vmem [shape: f32[32,128], index: 11, kind: input, shape index: {}]
  %s12 = inlined_call_operand.vmem [shape: f32[1,128], index: 12, kind: input, shape index: {}]
  %s13 = inlined_call_operand.vmem [shape: f32[32,5], index: 13, kind: input, shape index: {}]
  %s14 = inlined_call_operand.vmem [shape: f32[1,5], index: 14, kind: input, shape index: {}]
  %s15 = inlined_call_operand.vmem [shape: f32[16,5], index: 15, kind: output, shape index: {}]
  %s16 = sld [smem:[#allocation0]]
  $region93: #{tpu_custom_call.1} parent=0
    _
  %s18 = ssub.s32 1, %s16
  %s19 = scalar_select 0, %s18, %s16
  loop: start=0, step=1, limit=4
  $region2: #{tpu_custom_call.1} parent=0 // loop_pre_header
    _
  $region3: #{tpu_custom_call.1} parent=0 // loop_header
    %s21 = sphi 0, %s25
    %p22 = scmp.ge.s32.totalorder %s21, 4
    %s31 = sphi 0, %s33
    %s34 = sphi 0, %s31
    %s35 = sphi 0, %s34
    %s51 = sphi 0, %s35
    %s55 = sphi 0, %s55
    %s57 = sphi 0, %s55
    %s58 = sphi 0, %s57
    %s72 = sphi 0, %s58
    %s76 = sphi 0, %s76
    %s78 = sphi 0, %s76
    %s79 = sphi 0, %s78
    %s93 = sphi 0, %s79
    %s97 = sphi 0, %s97
    %s99 = sphi 0, %s97
    %s100 = sphi 0, %s99
    %s114 = sphi 0, %s100
    %s118 = sphi 0, %s118
    %s120 = sphi 0, %s118
    %s121 = sphi 0, %s120
    %s135 = sphi 0, %s121
    %s139 = sphi 0, %s139
    %s141 = sphi 0, %s139
    %s142 = sphi 0, %s141
    %s156 = sphi 0, %s142
    %s160 = sphi 0, %s160
    %s162 = sphi 0, %s160
    %s163 = sphi 0, %s162
    %s177 = sphi 0, %s163
    %s181 = sphi 0, %s181
    %s183 = sphi 0, %s181
    %s184 = sphi 0, %s183
    %s198 = sphi 0, %s184
    %s202 = sphi 0, %s202
    %s204 = sphi 0, %s202
    %s205 = sphi 0, %s204
    %s219 = sphi 0, %s205
    %s223 = sphi 0, %s223
    %s225 = sphi 0, %s223
    %s226 = sphi 0, %s225
    %s240 = sphi 0, %s226
    %s244 = sphi 0, %s244
    %s246 = sphi 0, %s244
    %s247 = sphi 0, %s246
    %s261 = sphi 0, %s247
    %s265 = sphi 0, %s265
    %s267 = sphi 0, %s265
    %s268 = sphi 0, %s267
    %s282 = sphi 0, %s268
    %s286 = sphi 0, %s286
    %s288 = sphi 0, %s286
    %s289 = sphi 0, %s288
    %s303 = sphi 0, %s289
    %s307 = sphi 0, %s307
    %s309 = sphi 0, %s307
    %s310 = sphi 0, %s309
    %s324 = sphi 0, %s310
    %s328 = sphi 0, %s328
    %s330 = sphi 0, %s328
    %s331 = sphi 0, %s330
    %s345 = sphi 0, %s331
    %s351 = sphi 0, %s353
    %s354 = sphi 0, %s351
    %s355 = sphi 0, %s354
    %s371 = sphi 0, %s355
  $region4: #{tpu_custom_call.1} parent=0 // loop_header_branch
    %24 = sbr.rel (%p22) target = $region8
  $region5: #{tpu_custom_call.1} parent=0 // loop_body
    %s26 = ssub.s32 %s21, 1
    %s27 = ssub.s32 %s21, 2
    %s28 = sadd.s32 %s21, 1
    %s29 = ssub.s32 %s21, %s28
    %p30 = scmp.eq.s32.totalorder %s29, 0
    %s32 = sadd.s32 %s31, 1
    %s33 = scalar_select %p30, %s31, %s32
    %p36 = pneg %p30
    %p37 = scmp.eq.s32.totalorder %s21, 1
    %p38 = por %p36, %p37
    %p39 = scmp.ne.s32.totalorder %s31, %s34
    %p40 = scmp.eq.s32.totalorder %s21, 0
    %p41 = por %p39, %p40
    %p42 = scmp.ne.s32.totalorder %s31, %s34
    %p43 = scmp.eq.s32.totalorder %s26, 1
    %p44 = por %p42, %p43
    %p45 = scmp.ne.s32.totalorder %s34, %s35
    %p46 = scmp.eq.s32.totalorder %s26, 0
    %p47 = por %p45, %p46
    %p48 = scmp.ne.s32.totalorder %s34, %s35
    %p49 = scmp.eq.s32.totalorder %s27, 1
    %p50 = por %p48, %p49
    %p52 = scmp.ne.s32.totalorder %s35, %s51
    %p53 = scmp.eq.s32.totalorder %s27, 0
    %p54 = por %p52, %p53
    %s56 = sadd.s32 %s55, 1
    %p59 = scmp.eq.s32.totalorder %s21, 1
    %p60 = scmp.ne.s32.totalorder %s55, %s57
    %p61 = scmp.eq.s32.totalorder %s21, 0
    %p62 = por %p60, %p61
    %p63 = scmp.ne.s32.totalorder %s55, %s57
    %p64 = scmp.eq.s32.totalorder %s26, 1
    %p65 = por %p63, %p64
    %p66 = scmp.ne.s32.totalorder %s57, %s58
    %p67 = scmp.eq.s32.totalorder %s26, 0
    %p68 = por %p66, %p67
    %p69 = scmp.ne.s32.totalorder %s57, %s58
    %p70 = scmp.eq.s32.totalorder %s27, 1
    %p71 = por %p69, %p70
    %p73 = scmp.ne.s32.totalorder %s58, %s72
    %p74 = scmp.eq.s32.totalorder %s27, 0
    %p75 = por %p73, %p74
    %s77 = sadd.s32 %s76, 1
    %p80 = scmp.eq.s32.totalorder %s21, 1
    %p81 = scmp.ne.s32.totalorder %s76, %s78
    %p82 = scmp.eq.s32.totalorder %s21, 0
    %p83 = por %p81, %p82
    %p84 = scmp.ne.s32.totalorder %s76, %s78
    %p85 = scmp.eq.s32.totalorder %s26, 1
    %p86 = por %p84, %p85
    %p87 = scmp.ne.s32.totalorder %s78, %s79
    %p88 = scmp.eq.s32.totalorder %s26, 0
    %p89 = por %p87, %p88
    %p90 = scmp.ne.s32.totalorder %s78, %s79
    %p91 = scmp.eq.s32.totalorder %s27, 1
    %p92 = por %p90, %p91
    %p94 = scmp.ne.s32.totalorder %s79, %s93
    %p95 = scmp.eq.s32.totalorder %s27, 0
    %p96 = por %p94, %p95
    %s98 = sadd.s32 %s97, 1
    %p101 = scmp.eq.s32.totalorder %s21, 1
    %p102 = scmp.ne.s32.totalorder %s97, %s99
    %p103 = scmp.eq.s32.totalorder %s21, 0
    %p104 = por %p102, %p103
    %p105 = scmp.ne.s32.totalorder %s97, %s99
    %p106 = scmp.eq.s32.totalorder %s26, 1
    %p107 = por %p105, %p106
    %p108 = scmp.ne.s32.totalorder %s99, %s100
    %p109 = scmp.eq.s32.totalorder %s26, 0
    %p110 = por %p108, %p109
    %p111 = scmp.ne.s32.totalorder %s99, %s100
    %p112 = scmp.eq.s32.totalorder %s27, 1
    %p113 = por %p111, %p112
    %p115 = scmp.ne.s32.totalorder %s100, %s114
    %p116 = scmp.eq.s32.totalorder %s27, 0
    %p117 = por %p115, %p116
    %s119 = sadd.s32 %s118, 1
    %p122 = scmp.eq.s32.totalorder %s21, 1
    %p123 = scmp.ne.s32.totalorder %s118, %s120
    %p124 = scmp.eq.s32.totalorder %s21, 0
    %p125 = por %p123, %p124
    %p126 = scmp.ne.s32.totalorder %s118, %s120
    %p127 = scmp.eq.s32.totalorder %s26, 1
    %p128 = por %p126, %p127
    %p129 = scmp.ne.s32.totalorder %s120, %s121
    %p130 = scmp.eq.s32.totalorder %s26, 0
    %p131 = por %p129, %p130
    %p132 = scmp.ne.s32.totalorder %s120, %s121
    %p133 = scmp.eq.s32.totalorder %s27, 1
    %p134 = por %p132, %p133
    %p136 = scmp.ne.s32.totalorder %s121, %s135
    %p137 = scmp.eq.s32.totalorder %s27, 0
    %p138 = por %p136, %p137
    %s140 = sadd.s32 %s139, 1
    %p143 = scmp.eq.s32.totalorder %s21, 1
    %p144 = scmp.ne.s32.totalorder %s139, %s141
    %p145 = scmp.eq.s32.totalorder %s21, 0
    %p146 = por %p144, %p145
    %p147 = scmp.ne.s32.totalorder %s139, %s141
    %p148 = scmp.eq.s32.totalorder %s26, 1
    %p149 = por %p147, %p148
    %p150 = scmp.ne.s32.totalorder %s141, %s142
    %p151 = scmp.eq.s32.totalorder %s26, 0
    %p152 = por %p150, %p151
    %p153 = scmp.ne.s32.totalorder %s141, %s142
    %p154 = scmp.eq.s32.totalorder %s27, 1
    %p155 = por %p153, %p154
    %p157 = scmp.ne.s32.totalorder %s142, %s156
    %p158 = scmp.eq.s32.totalorder %s27, 0
    %p159 = por %p157, %p158
    %s161 = sadd.s32 %s160, 1
    %p164 = scmp.eq.s32.totalorder %s21, 1
    %p165 = scmp.ne.s32.totalorder %s160, %s162
    %p166 = scmp.eq.s32.totalorder %s21, 0
    %p167 = por %p165, %p166
    %p168 = scmp.ne.s32.totalorder %s160, %s162
    %p169 = scmp.eq.s32.totalorder %s26, 1
    %p170 = por %p168, %p169
    %p171 = scmp.ne.s32.totalorder %s162, %s163
    %p172 = scmp.eq.s32.totalorder %s26, 0
    %p173 = por %p171, %p172
    %p174 = scmp.ne.s32.totalorder %s162, %s163
    %p175 = scmp.eq.s32.totalorder %s27, 1
    %p176 = por %p174, %p175
    %p178 = scmp.ne.s32.totalorder %s163, %s177
    %p179 = scmp.eq.s32.totalorder %s27, 0
    %p180 = por %p178, %p179
    %s182 = sadd.s32 %s181, 1
    %p185 = scmp.eq.s32.totalorder %s21, 1
    %p186 = scmp.ne.s32.totalorder %s181, %s183
    %p187 = scmp.eq.s32.totalorder %s21, 0
    %p188 = por %p186, %p187
    %p189 = scmp.ne.s32.totalorder %s181, %s183
    %p190 = scmp.eq.s32.totalorder %s26, 1
    %p191 = por %p189, %p190
    %p192 = scmp.ne.s32.totalorder %s183, %s184
    %p193 = scmp.eq.s32.totalorder %s26, 0
    %p194 = por %p192, %p193
    %p195 = scmp.ne.s32.totalorder %s183, %s184
    %p196 = scmp.eq.s32.totalorder %s27, 1
    %p197 = por %p195, %p196
    %p199 = scmp.ne.s32.totalorder %s184, %s198
    %p200 = scmp.eq.s32.totalorder %s27, 0
    %p201 = por %p199, %p200
    %s203 = sadd.s32 %s202, 1
    %p206 = scmp.eq.s32.totalorder %s21, 1
    %p207 = scmp.ne.s32.totalorder %s202, %s204
    %p208 = scmp.eq.s32.totalorder %s21, 0
    %p209 = por %p207, %p208
    %p210 = scmp.ne.s32.totalorder %s202, %s204
    %p211 = scmp.eq.s32.totalorder %s26, 1
    %p212 = por %p210, %p211
    %p213 = scmp.ne.s32.totalorder %s204, %s205
    %p214 = scmp.eq.s32.totalorder %s26, 0
    %p215 = por %p213, %p214
    %p216 = scmp.ne.s32.totalorder %s204, %s205
    %p217 = scmp.eq.s32.totalorder %s27, 1
    %p218 = por %p216, %p217
    %p220 = scmp.ne.s32.totalorder %s205, %s219
    %p221 = scmp.eq.s32.totalorder %s27, 0
    %p222 = por %p220, %p221
    %s224 = sadd.s32 %s223, 1
    %p227 = scmp.eq.s32.totalorder %s21, 1
    %p228 = scmp.ne.s32.totalorder %s223, %s225
    %p229 = scmp.eq.s32.totalorder %s21, 0
    %p230 = por %p228, %p229
    %p231 = scmp.ne.s32.totalorder %s223, %s225
    %p232 = scmp.eq.s32.totalorder %s26, 1
    %p233 = por %p231, %p232
    %p234 = scmp.ne.s32.totalorder %s225, %s226
    %p235 = scmp.eq.s32.totalorder %s26, 0
    %p236 = por %p234, %p235
    %p237 = scmp.ne.s32.totalorder %s225, %s226
    %p238 = scmp.eq.s32.totalorder %s27, 1
    %p239 = por %p237, %p238
    %p241 = scmp.ne.s32.totalorder %s226, %s240
    %p242 = scmp.eq.s32.totalorder %s27, 0
    %p243 = por %p241, %p242
    %s245 = sadd.s32 %s244, 1
    %p248 = scmp.eq.s32.totalorder %s21, 1
    %p249 = scmp.ne.s32.totalorder %s244, %s246
    %p250 = scmp.eq.s32.totalorder %s21, 0
    %p251 = por %p249, %p250
    %p252 = scmp.ne.s32.totalorder %s244, %s246
    %p253 = scmp.eq.s32.totalorder %s26, 1
    %p254 = por %p252, %p253
    %p255 = scmp.ne.s32.totalorder %s246, %s247
    %p256 = scmp.eq.s32.totalorder %s26, 0
    %p257 = por %p255, %p256
    %p258 = scmp.ne.s32.totalorder %s246, %s247
    %p259 = scmp.eq.s32.totalorder %s27, 1
    %p260 = por %p258, %p259
    %p262 = scmp.ne.s32.totalorder %s247, %s261
    %p263 = scmp.eq.s32.totalorder %s27, 0
    %p264 = por %p262, %p263
    %s266 = sadd.s32 %s265, 1
    %p269 = scmp.eq.s32.totalorder %s21, 1
    %p270 = scmp.ne.s32.totalorder %s265, %s267
    %p271 = scmp.eq.s32.totalorder %s21, 0
    %p272 = por %p270, %p271
    %p273 = scmp.ne.s32.totalorder %s265, %s267
    %p274 = scmp.eq.s32.totalorder %s26, 1
    %p275 = por %p273, %p274
    %p276 = scmp.ne.s32.totalorder %s267, %s268
    %p277 = scmp.eq.s32.totalorder %s26, 0
    %p278 = por %p276, %p277
    %p279 = scmp.ne.s32.totalorder %s267, %s268
    %p280 = scmp.eq.s32.totalorder %s27, 1
    %p281 = por %p279, %p280
    %p283 = scmp.ne.s32.totalorder %s268, %s282
    %p284 = scmp.eq.s32.totalorder %s27, 0
    %p285 = por %p283, %p284
    %s287 = sadd.s32 %s286, 1
    %p290 = scmp.eq.s32.totalorder %s21, 1
    %p291 = scmp.ne.s32.totalorder %s286, %s288
    %p292 = scmp.eq.s32.totalorder %s21, 0
    %p293 = por %p291, %p292
    %p294 = scmp.ne.s32.totalorder %s286, %s288
    %p295 = scmp.eq.s32.totalorder %s26, 1
    %p296 = por %p294, %p295
    %p297 = scmp.ne.s32.totalorder %s288, %s289
    %p298 = scmp.eq.s32.totalorder %s26, 0
    %p299 = por %p297, %p298
    %p300 = scmp.ne.s32.totalorder %s288, %s289
    %p301 = scmp.eq.s32.totalorder %s27, 1
    %p302 = por %p300, %p301
    %p304 = scmp.ne.s32.totalorder %s289, %s303
    %p305 = scmp.eq.s32.totalorder %s27, 0
    %p306 = por %p304, %p305
    %s308 = sadd.s32 %s307, 1
    %p311 = scmp.eq.s32.totalorder %s21, 1
    %p312 = scmp.ne.s32.totalorder %s307, %s309
    %p313 = scmp.eq.s32.totalorder %s21, 0
    %p314 = por %p312, %p313
    %p315 = scmp.ne.s32.totalorder %s307, %s309
    %p316 = scmp.eq.s32.totalorder %s26, 1
    %p317 = por %p315, %p316
    %p318 = scmp.ne.s32.totalorder %s309, %s310
    %p319 = scmp.eq.s32.totalorder %s26, 0
    %p320 = por %p318, %p319
    %p321 = scmp.ne.s32.totalorder %s309, %s310
    %p322 = scmp.eq.s32.totalorder %s27, 1
    %p323 = por %p321, %p322
    %p325 = scmp.ne.s32.totalorder %s310, %s324
    %p326 = scmp.eq.s32.totalorder %s27, 0
    %p327 = por %p325, %p326
    %s329 = sadd.s32 %s328, 1
    %p332 = scmp.eq.s32.totalorder %s21, 1
    %p333 = scmp.ne.s32.totalorder %s328, %s330
    %p334 = scmp.eq.s32.totalorder %s21, 0
    %p335 = por %p333, %p334
    %p336 = scmp.ne.s32.totalorder %s328, %s330
    %p337 = scmp.eq.s32.totalorder %s26, 1
    %p338 = por %p336, %p337
    %p339 = scmp.ne.s32.totalorder %s330, %s331
    %p340 = scmp.eq.s32.totalorder %s26, 0
    %p341 = por %p339, %p340
    %p342 = scmp.ne.s32.totalorder %s330, %s331
    %p343 = scmp.eq.s32.totalorder %s27, 1
    %p344 = por %p342, %p343
    %p346 = scmp.ne.s32.totalorder %s331, %s345
    %p347 = scmp.eq.s32.totalorder %s27, 0
    %p348 = por %p346, %p347
    %s349 = ssub.s32 %s21, %s28
    %p350 = scmp.eq.s32.totalorder %s349, 0
    %s352 = sadd.s32 %s351, 1
    %s353 = scalar_select %p350, %s351, %s352
    %p356 = pneg %p350
    %p357 = scmp.eq.s32.totalorder %s21, 1
    %p358 = por %p356, %p357
    %p359 = scmp.ne.s32.totalorder %s351, %s354
    %p360 = scmp.eq.s32.totalorder %s21, 0
    %p361 = por %p359, %p360
    %p362 = scmp.ne.s32.totalorder %s351, %s354
    %p363 = scmp.eq.s32.totalorder %s26, 1
    %p364 = por %p362, %p363
    %p365 = scmp.ne.s32.totalorder %s354, %s355
    %p366 = scmp.eq.s32.totalorder %s26, 0
    %p367 = por %p365, %p366
    %p368 = scmp.ne.s32.totalorder %s354, %s355
    %p369 = scmp.eq.s32.totalorder %s27, 1
    %p370 = por %p368, %p369
    %p372 = scmp.ne.s32.totalorder %s355, %s371
    %p373 = scmp.eq.s32.totalorder %s27, 0
    %p374 = por %p372, %p373
    %p375 = scmp.le.s32.totalorder 1, %s21
    %p376 = scmp.lt.s32.totalorder %s21, 3
    %p377 = pnand %p375, %p376
    %p378 = pneg %p377
    // Predicated region
    $region9: #{tpu_custom_call.1} parent=5 // pred_check
      _
    $region10: #{tpu_custom_call.1} parent=5 // pred_check_branch
      %380 = sbr.rel (%p377) target = $region12
    $region11: #{tpu_custom_call.1} parent=5 // pred_region
      %s381 = ssub.s32 %s21, 1
      // Predicated region
      $region13: #{tpu_custom_call.1} parent=11 // pred_check
        %p382 = pneg %p68
      $region14: #{tpu_custom_call.1} parent=11 // pred_check_branch
        %384 = sbr.rel (%p382) target = $region16
      $region15: #{tpu_custom_call.1} parent=11 // pred_region
        _
      $region16: #{tpu_custom_call.1} parent=11 // pred_fallthru
        _
      // Predicated region
      $region17: #{tpu_custom_call.1} parent=11 // pred_check
        %p385 = pneg %p89
      $region18: #{tpu_custom_call.1} parent=11 // pred_check_branch
        %387 = sbr.rel (%p385) target = $region20
      $region19: #{tpu_custom_call.1} parent=11 // pred_region
        _
      $region20: #{tpu_custom_call.1} parent=11 // pred_fallthru
        _
      // Predicated region
      $region21: #{tpu_custom_call.1} parent=11 // pred_check
        %p388 = pneg %p110
      $region22: #{tpu_custom_call.1} parent=11 // pred_check_branch
        %390 = sbr.rel (%p388) target = $region24
      $region23: #{tpu_custom_call.1} parent=11 // pred_region
        _
      $region24: #{tpu_custom_call.1} parent=11 // pred_fallthru
        _
      // Predicated region
      $region25: #{tpu_custom_call.1} parent=11 // pred_check
        %p391 = pneg %p131
      $region26: #{tpu_custom_call.1} parent=11 // pred_check_branch
        %393 = sbr.rel (%p391) target = $region28
      $region27: #{tpu_custom_call.1} parent=11 // pred_region
        _
      $region28: #{tpu_custom_call.1} parent=11 // pred_fallthru
        _
      // Predicated region
      $region29: #{tpu_custom_call.1} parent=11 // pred_check
        %p394 = pneg %p152
      $region30: #{tpu_custom_call.1} parent=11 // pred_check_branch
        %396 = sbr.rel (%p394) target = $region32
      $region31: #{tpu_custom_call.1} parent=11 // pred_region
        _
      $region32: #{tpu_custom_call.1} parent=11 // pred_fallthru
        _
      // Predicated region
      $region33: #{tpu_custom_call.1} parent=11 // pred_check
        %p397 = pneg %p173
      $region34: #{tpu_custom_call.1} parent=11 // pred_check_branch
        %399 = sbr.rel (%p397) target = $region36
      $region35: #{tpu_custom_call.1} parent=11 // pred_region
        _
      $region36: #{tpu_custom_call.1} parent=11 // pred_fallthru
        _
      // Predicated region
      $region37: #{tpu_custom_call.1} parent=11 // pred_check
        %p400 = pneg %p194
      $region38: #{tpu_custom_call.1} parent=11 // pred_check_branch
        %402 = sbr.rel (%p400) target = $region40
      $region39: #{tpu_custom_call.1} parent=11 // pred_region
        _
      $region40: #{tpu_custom_call.1} parent=11 // pred_fallthru
        _
      // Predicated region
      $region41: #{tpu_custom_call.1} parent=11 // pred_check
        %p403 = pneg %p215
      $region42: #{tpu_custom_call.1} parent=11 // pred_check_branch
        %405 = sbr.rel (%p403) target = $region44
      $region43: #{tpu_custom_call.1} parent=11 // pred_region
        _
      $region44: #{tpu_custom_call.1} parent=11 // pred_fallthru
        _
      // Predicated region
      $region45: #{tpu_custom_call.1} parent=11 // pred_check
        %p406 = pneg %p236
      $region46: #{tpu_custom_call.1} parent=11 // pred_check_branch
        %408 = sbr.rel (%p406) target = $region48
      $region47: #{tpu_custom_call.1} parent=11 // pred_region
        _
      $region48: #{tpu_custom_call.1} parent=11 // pred_fallthru
        _
      // Predicated region
      $region49: #{tpu_custom_call.1} parent=11 // pred_check
        %p409 = pneg %p257
      $region50: #{tpu_custom_call.1} parent=11 // pred_check_branch
        %411 = sbr.rel (%p409) target = $region52
      $region51: #{tpu_custom_call.1} parent=11 // pred_region
        _
      $region52: #{tpu_custom_call.1} parent=11 // pred_fallthru
        _
      // Predicated region
      $region53: #{tpu_custom_call.1} parent=11 // pred_check
        %p412 = pneg %p278
      $region54: #{tpu_custom_call.1} parent=11 // pred_check_branch
        %414 = sbr.rel (%p412) target = $region56
      $region55: #{tpu_custom_call.1} parent=11 // pred_region
        _
      $region56: #{tpu_custom_call.1} parent=11 // pred_fallthru
        _
      // Predicated region
      $region57: #{tpu_custom_call.1} parent=11 // pred_check
        %p415 = pneg %p299
      $region58: #{tpu_custom_call.1} parent=11 // pred_check_branch
        %417 = sbr.rel (%p415) target = $region60
      $region59: #{tpu_custom_call.1} parent=11 // pred_region
        _
      $region60: #{tpu_custom_call.1} parent=11 // pred_fallthru
        _
      // Predicated region
      $region61: #{tpu_custom_call.1} parent=11 // pred_check
        %p418 = pneg %p320
      $region62: #{tpu_custom_call.1} parent=11 // pred_check_branch
        %420 = sbr.rel (%p418) target = $region64
      $region63: #{tpu_custom_call.1} parent=11 // pred_region
        _
      $region64: #{tpu_custom_call.1} parent=11 // pred_fallthru
        _
      // Predicated region
      $region65: #{tpu_custom_call.1} parent=11 // pred_check
        %p421 = pneg %p341
      $region66: #{tpu_custom_call.1} parent=11 // pred_check_branch
        %423 = sbr.rel (%p421) target = $region68
      $region67: #{tpu_custom_call.1} parent=11 // pred_region
        _
      $region68: #{tpu_custom_call.1} parent=11 // pred_fallthru
        _
    $region12: #{tpu_custom_call.1} parent=5 // pred_fallthru
      _
    %p424 = scmp.lt.s32.totalorder %s21, 2
    // Predicated region
    $region69: #{tpu_custom_call.1} parent=5 // pred_check
      %p425 = pneg %p424
    $region70: #{tpu_custom_call.1} parent=5 // pred_check_branch
      %427 = sbr.rel (%p425) target = $region72
    $region71: #{tpu_custom_call.1} parent=5 // pred_region
      // Predicated region
      $region73: #{tpu_custom_call.1} parent=71 // pred_check
        %p428 = pneg %p41
      $region74: #{tpu_custom_call.1} parent=71 // pred_check_branch
        %430 = sbr.rel (%p428) target = $region76
      $region75: #{tpu_custom_call.1} parent=71 // pred_region
        %p431 = scmp.lt.s32.totalorder %s21, 1
        %s432 = scalar_select %p431, %s21, 1
        %s433 = smul.addr %s432, 18
        %s434 = smul.addr %s433, 8
        %s435 = scalar_lea.vmem %s0, %s434
      $region76: #{tpu_custom_call.1} parent=71 // pred_fallthru
        _
    $region72: #{tpu_custom_call.1} parent=5 // pred_fallthru
      _
    %p436 = scmp.le.s32.totalorder 1, %s21
    %p437 = scmp.lt.s32.totalorder %s21, 3
    %p438 = pnand %p436, %p437
    %p439 = pneg %p438
    // Predicated region
    $region77: #{tpu_custom_call.1} parent=5 // pred_check
      _
    $region78: #{tpu_custom_call.1} parent=5 // pred_check_branch
      %441 = sbr.rel (%p438) target = $region80
    $region79: #{tpu_custom_call.1} parent=5 // pred_region
      %s442 = ssub.s32 %s21, 1
      %p443 = scmp.lt.s32.totalorder %s26, 1
      %s444 = scalar_select %p443, %s26, 1
      %s445 = smul.addr %s444, 18
      %s446 = smul.addr %s445, 8
      %s447 = scalar_lea.vmem %s0, %s446
      %p448 = pneg %p47
      %p449 = pneg %p44
      %p450 = pneg %p68
      %p451 = pneg %p65
      %p452 = pneg %p89
      %p453 = pneg %p86
      %p454 = pneg %p110
      %p455 = pneg %p107
      %p456 = pneg %p131
      %p457 = pneg %p128
      %p458 = pneg %p152
      %p459 = pneg %p149
      %p460 = pneg %p173
      %p461 = pneg %p170
      %p462 = pneg %p194
      %p463 = pneg %p191
      %p464 = pneg %p215
      %p465 = pneg %p212
      %p466 = pneg %p236
      %p467 = pneg %p233
      %p468 = pneg %p257
      %p469 = pneg %p254
      %p470 = pneg %p278
      %p471 = pneg %p275
      %p472 = pneg %p299
      %p473 = pneg %p296
      %p474 = pneg %p320
      %p475 = pneg %p317
      %p476 = pneg %p341
      %p477 = pneg %p338
      %p478 = pneg %p367
      %p479 = pneg %p364
      %p480 = scmp.lt.s32.totalorder %s26, 1
      %s481 = scalar_select %p480, %s26, 1
      %s482 = smul.addr %s481, 8
      %s483 = scalar_lea.vmem %s15, %s482
      %p484 = scmp.lt.s32.totalorder %s26, 1
      %s485 = scalar_select %p484, %s26, 1
      %s486 = smul.addr %s485, 18
      %s487 = smul.addr %s486, 8
      %s488 = scalar_lea.vmem %s0, %s487
      %p489 = scmp.lt.s32.totalorder %s26, 1
      %s490 = scalar_select %p489, %s26, 1
      %s491 = smul.addr %s490, 8
      %s492 = scalar_lea.vmem %s15, %s491
      %v493 = vld [vmem:[%s488] sm:$0xff]
      %v494 = vld [vmem:[%s488 + $0x8] sm:$0xff]
      %v495 = vld [vmem:[%s488 + $0x10] sm:$0xff]
      %v496 = vld [vmem:[%s488 + $0x18] sm:$0xff]
      %v497 = vld [vmem:[%s488 + $0x20] sm:$0xff]
      %v498 = vld [vmem:[%s488 + $0x28] sm:$0xff]
      %v499 = vld [vmem:[%s488 + $0x30] sm:$0xff]
      %v500 = vld [vmem:[%s488 + $0x38] sm:$0xff]
      %v501 = vld [vmem:[%s488 + $0x40] sm:$0xff]
      %v502 = vld [vmem:[%s488 + $0x48] sm:$0xff]
      %v503 = vld [vmem:[%s488 + $0x50] sm:$0xff]
      %v504 = vld [vmem:[%s488 + $0x58] sm:$0xff]
      %v505 = vld [vmem:[%s488 + $0x60] sm:$0xff]
      %v506 = vld [vmem:[%s488 + $0x68] sm:$0xff]
      %v507 = vld [vmem:[%s488 + $0x70] sm:$0xff]
      %v508 = vld [vmem:[%s488 + $0x78] sm:$0xff]
      %v509 = vld [vmem:[%s488 + $0x80] sm:$0xff]
      %v510 = vld [vmem:[%s488 + $0x88] sm:$0xff]
      %v511 = vld [vmem:[%s1] sm:$0x1f]
      %s512 = scalar_lea.vmem %s1, 8
      %v513 = vld [vmem:[%s512] sm:$0x1f]
      %vm514 = vcmask 39936
      %v516 = vsel %vm514, %v494, 0
      %v519 = vsel %vm514, %v495, 0
      %v522 = vsel %vm514, %v496, 0
      %v525 = vsel %vm514, %v497, 0
      %v528 = vsel %vm514, %v498, 0
      %v531 = vsel %vm514, %v499, 0
      %v534 = vsel %vm514, %v500, 0
      %v537 = vsel %vm514, %v501, 0
      %v540 = vsel %vm514, %v502, 0
      %v543 = vsel %vm514, %v503, 0
      %v546 = vsel %vm514, %v504, 0
      %v549 = vsel %vm514, %v505, 0
      %v552 = vsel %vm514, %v506, 0
      %v555 = vsel %vm514, %v507, 0
      %v558 = vsel %vm514, %v508, 0
      %v561 = vsel %vm514, %v509, 0
      %vm563 = vcmask 1044480
      %v565 = vsel %vm563, %v513, 0
      %567 = vmatpush.msra.mxu0 0.0
      %568 = vmatpush.msra.mxu0 0.0
      %569 = vmatpush.msra.mxu0 0.0
      %570 = vmatpush.msra.mxu0 0.0
      %571 = vmatpush.msra.mxu0 0.0
      %572 = vmatpush.msra.mxu0 0.0
      %573 = vmatpush.msra.mxu0 0.0
      %574 = vmatpush.msra.mxu0 0.0
      %575 = vmatpush.msra.mxu0 0.0
      %576 = vmatpush.msra.mxu0 0.0
      %577 = vmatpush.msra.mxu0 0.0
      %578 = vmatpush.msra.mxu0 0.0
      %579 = vmatpush.msra.mxu0 0.0
      %580 = vmatpush.msra.mxu0 0.0
      %581 = vmatpush.msra.mxu0 0.0
      %582 = vmatpush.msra.mxu0 %v565
      %583 = vmatmul.f32.gmra.mxu0 %v516
      %v584 = vpop.f32.mrf.mxu0
      %v585 = vadd.f32 0.0, %v584
      %586 = vmatmul.f32.gmra.mxu0 %v519
      %v587 = vpop.f32.mrf.mxu0
      %v588 = vadd.f32 0.0, %v587
      %589 = vmatmul.f32.gmra.mxu0 %v522
      %v590 = vpop.f32.mrf.mxu0
      %v591 = vadd.f32 0.0, %v590
      %592 = vmatmul.f32.gmra.mxu0 %v525
      %v593 = vpop.f32.mrf.mxu0
      %v594 = vadd.f32 0.0, %v593
      %595 = vmatmul.f32.gmra.mxu0 %v528
      %v596 = vpop.f32.mrf.mxu0
      %v597 = vadd.f32 0.0, %v596
      %598 = vmatmul.f32.gmra.mxu0 %v531
      %v599 = vpop.f32.mrf.mxu0
      %v600 = vadd.f32 0.0, %v599
      %601 = vmatmul.f32.gmra.mxu0 %v534
      %v602 = vpop.f32.mrf.mxu0
      %v603 = vadd.f32 0.0, %v602
      %604 = vmatmul.f32.gmra.mxu0 %v537
      %v605 = vpop.f32.mrf.mxu0
      %v606 = vadd.f32 0.0, %v605
      %607 = vmatmul.f32.gmra.mxu0 %v540
      %v608 = vpop.f32.mrf.mxu0
      %v609 = vadd.f32 0.0, %v608
      %610 = vmatmul.f32.gmra.mxu0 %v543
      %v611 = vpop.f32.mrf.mxu0
      %v612 = vadd.f32 0.0, %v611
      %613 = vmatmul.f32.gmra.mxu0 %v546
      %v614 = vpop.f32.mrf.mxu0
      %v615 = vadd.f32 0.0, %v614
      %616 = vmatmul.f32.gmra.mxu0 %v549
      %v617 = vpop.f32.mrf.mxu0
      %v618 = vadd.f32 0.0, %v617
      %619 = vmatmul.f32.gmra.mxu0 %v552
      %v620 = vpop.f32.mrf.mxu0
      %v621 = vadd.f32 0.0, %v620
      %622 = vmatmul.f32.gmra.mxu0 %v555
      %v623 = vpop.f32.mrf.mxu0
      %v624 = vadd.f32 0.0, %v623
      %625 = vmatmul.f32.gmra.mxu0 %v558
      %v626 = vpop.f32.mrf.mxu0
      %v627 = vadd.f32 0.0, %v626
      %628 = vmatmul.f32.gmra.mxu0 %v561
      %v629 = vpop.f32.mrf.mxu0
      %630 = vdwg.mxu0
      %v632 = vsel %vm514, %v493, 0
      %v635 = vsel %vm563, %v511, 0
      %637 = vmatpush.msra.mxu0 0.0
      %638 = vmatpush.msra.mxu0 0.0
      %639 = vmatpush.msra.mxu0 0.0
      %640 = vmatpush.msra.mxu0 0.0
      %641 = vmatpush.msra.mxu0 0.0
      %642 = vmatpush.msra.mxu0 0.0
      %643 = vmatpush.msra.mxu0 0.0
      %644 = vmatpush.msra.mxu0 0.0
      %645 = vmatpush.msra.mxu0 0.0
      %646 = vmatpush.msra.mxu0 0.0
      %647 = vmatpush.msra.mxu0 0.0
      %648 = vmatpush.msra.mxu0 0.0
      %649 = vmatpush.msra.mxu0 0.0
      %650 = vmatpush.msra.mxu0 0.0
      %651 = vmatpush.msra.mxu0 0.0
      %652 = vmatpush.msra.mxu0 %v635
      %653 = vmatmul.f32.gmra.mxu0 %v632
      %v654 = vpop.f32.mrf.mxu0
      %v655 = vadd.f32 %v585, %v654
      %656 = vmatmul.f32.gmra.mxu0 %v516
      %v657 = vpop.f32.mrf.mxu0
      %v658 = vadd.f32 %v588, %v657
      %659 = vmatmul.f32.gmra.mxu0 %v519
      %v660 = vpop.f32.mrf.mxu0
      %v661 = vadd.f32 %v591, %v660
      %662 = vmatmul.f32.gmra.mxu0 %v522
      %v663 = vpop.f32.mrf.mxu0
      %v664 = vadd.f32 %v594, %v663
      %665 = vmatmul.f32.gmra.mxu0 %v525
      %v666 = vpop.f32.mrf.mxu0
      %v667 = vadd.f32 %v597, %v666
      %668 = vmatmul.f32.gmra.mxu0 %v528
      %v669 = vpop.f32.mrf.mxu0
      %v670 = vadd.f32 %v600, %v669
      %671 = vmatmul.f32.gmra.mxu0 %v531
      %v672 = vpop.f32.mrf.mxu0
      %v673 = vadd.f32 %v603, %v672
      %674 = vmatmul.f32.gmra.mxu0 %v534
      %v675 = vpop.f32.mrf.mxu0
      %v676 = vadd.f32 %v606, %v675
      %677 = vmatmul.f32.gmra.mxu0 %v537
      %v678 = vpop.f32.mrf.mxu0
      %v679 = vadd.f32 %v609, %v678
      %680 = vmatmul.f32.gmra.mxu0 %v540
      %v681 = vpop.f32.mrf.mxu0
      %v682 = vadd.f32 %v612, %v681
      %683 = vmatmul.f32.gmra.mxu0 %v543
      %v684 = vpop.f32.mrf.mxu0
      %v685 = vadd.f32 %v615, %v684
      %686 = vmatmul.f32.gmra.mxu0 %v546
      %v687 = vpop.f32.mrf.mxu0
      %v688 = vadd.f32 %v618, %v687
      %689 = vmatmul.f32.gmra.mxu0 %v549
      %v690 = vpop.f32.mrf.mxu0
      %v691 = vadd.f32 %v621, %v690
      %692 = vmatmul.f32.gmra.mxu0 %v552
      %v693 = vpop.f32.mrf.mxu0
      %v694 = vadd.f32 %v624, %v693
      %695 = vmatmul.f32.gmra.mxu0 %v555
      %v696 = vpop.f32.mrf.mxu0
      %v697 = vadd.f32 %v627, %v696
      %698 = vmatmul.f32.gmra.mxu0 %v558
      %v699 = vpop.f32.mrf.mxu0
      %700 = vdwg.mxu0
      %s701 = scalar_lea.vmem %s1, 16
      %v702 = vld [vmem:[%s701] sm:$0x1f]
      %v704 = vsel %vm514, %v510, 0
      %v707 = vsel %vm563, %v702, 0
      %709 = vmatpush.msra.mxu0 0.0
      %710 = vmatpush.msra.mxu0 0.0
      %711 = vmatpush.msra.mxu0 0.0
      %712 = vmatpush.msra.mxu0 0.0
      %713 = vmatpush.msra.mxu0 0.0
      %714 = vmatpush.msra.mxu0 0.0
      %715 = vmatpush.msra.mxu0 0.0
      %716 = vmatpush.msra.mxu0 0.0
      %717 = vmatpush.msra.mxu0 0.0
      %718 = vmatpush.msra.mxu0 0.0
      %719 = vmatpush.msra.mxu0 0.0
      %720 = vmatpush.msra.mxu0 0.0
      %721 = vmatpush.msra.mxu0 0.0
      %722 = vmatpush.msra.mxu0 0.0
      %723 = vmatpush.msra.mxu0 0.0
      %724 = vmatpush.msra.mxu0 %v707
      %725 = vmatmul.f32.gmra.mxu0 %v519
      %v726 = vpop.f32.mrf.mxu0
      %v727 = vadd.f32 0.0, %v726
      %728 = vmatmul.f32.gmra.mxu0 %v522
      %v729 = vpop.f32.mrf.mxu0
      %v730 = vadd.f32 0.0, %v729
      %731 = vmatmul.f32.gmra.mxu0 %v525
      %v732 = vpop.f32.mrf.mxu0
      %v733 = vadd.f32 0.0, %v732
      %734 = vmatmul.f32.gmra.mxu0 %v528
      %v735 = vpop.f32.mrf.mxu0
      %v736 = vadd.f32 0.0, %v735
      %737 = vmatmul.f32.gmra.mxu0 %v531
      %v738 = vpop.f32.mrf.mxu0
      %v739 = vadd.f32 0.0, %v738
      %740 = vmatmul.f32.gmra.mxu0 %v534
      %v741 = vpop.f32.mrf.mxu0
      %v742 = vadd.f32 0.0, %v741
      %743 = vmatmul.f32.gmra.mxu0 %v537
      %v744 = vpop.f32.mrf.mxu0
      %v745 = vadd.f32 0.0, %v744
      %746 = vmatmul.f32.gmra.mxu0 %v540
      %v747 = vpop.f32.mrf.mxu0
      %v748 = vadd.f32 0.0, %v747
      %749 = vmatmul.f32.gmra.mxu0 %v543
      %v750 = vpop.f32.mrf.mxu0
      %v751 = vadd.f32 0.0, %v750
      %752 = vmatmul.f32.gmra.mxu0 %v546
      %v753 = vpop.f32.mrf.mxu0
      %v754 = vadd.f32 0.0, %v753
      %755 = vmatmul.f32.gmra.mxu0 %v549
      %v756 = vpop.f32.mrf.mxu0
      %v757 = vadd.f32 0.0, %v756
      %758 = vmatmul.f32.gmra.mxu0 %v552
      %v759 = vpop.f32.mrf.mxu0
      %v760 = vadd.f32 0.0, %v759
      %761 = vmatmul.f32.gmra.mxu0 %v555
      %v762 = vpop.f32.mrf.mxu0
      %v763 = vadd.f32 0.0, %v762
      %764 = vmatmul.f32.gmra.mxu0 %v558
      %v765 = vpop.f32.mrf.mxu0
      %v766 = vadd.f32 0.0, %v765
      %767 = vmatmul.f32.gmra.mxu0 %v561
      %v768 = vpop.f32.mrf.mxu0
      %v769 = vadd.f32 0.0, %v768
      %770 = vmatmul.f32.gmra.mxu0 %v704
      %v771 = vpop.f32.mrf.mxu0
      %772 = vdwg.mxu0
      %v773 = vadd.f32 %v655, %v727
      %v774 = vadd.f32 %v658, %v730
      %v775 = vadd.f32 %v661, %v733
      %v776 = vadd.f32 %v664, %v736
      %v777 = vadd.f32 %v667, %v739
      %v778 = vadd.f32 %v670, %v742
      %v779 = vadd.f32 %v673, %v745
      %v780 = vadd.f32 %v676, %v748
      %v781 = vadd.f32 %v679, %v751
      %v782 = vadd.f32 %v682, %v754
      %v783 = vadd.f32 %v685, %v757
      %v784 = vadd.f32 %v688, %v760
      %v785 = vadd.f32 %v691, %v763
      %v786 = vadd.f32 %v694, %v766
      %v787 = vadd.f32 %v697, %v769
      %v788 = vld [vmem:[%s2] sm:$0x1]
      %v790 = vperm.slane %v788, 0
      %v792 = vadd.f32 %v773, %v790
      %v793 = vadd.f32 %v774, %v790
      %v794 = vadd.f32 %v775, %v790
      %v795 = vadd.f32 %v776, %v790
      %v796 = vadd.f32 %v777, %v790
      %v797 = vadd.f32 %v778, %v790
      %v798 = vadd.f32 %v779, %v790
      %v799 = vadd.f32 %v780, %v790
      %v800 = vadd.f32 %v781, %v790
      %v801 = vadd.f32 %v782, %v790
      %v802 = vadd.f32 %v783, %v790
      %v803 = vadd.f32 %v784, %v790
      %v804 = vadd.f32 %v785, %v790
      %v805 = vadd.f32 %v786, %v790
      %v806 = vadd.f32 %v787, %v790
      %vm807 = vcmp.gt.f32.partialorder %v792, 0.0
      %vm808 = vcmp.gt.f32.partialorder %v793, 0.0
      %vm809 = vcmp.gt.f32.partialorder %v794, 0.0
      %vm810 = vcmp.gt.f32.partialorder %v795, 0.0
      %vm811 = vcmp.gt.f32.partialorder %v796, 0.0
      %vm812 = vcmp.gt.f32.partialorder %v797, 0.0
      %vm813 = vcmp.gt.f32.partialorder %v798, 0.0
      %vm814 = vcmp.gt.f32.partialorder %v799, 0.0
      %vm815 = vcmp.gt.f32.partialorder %v800, 0.0
      %vm816 = vcmp.gt.f32.partialorder %v801, 0.0
      %vm817 = vcmp.gt.f32.partialorder %v802, 0.0
      %vm818 = vcmp.gt.f32.partialorder %v803, 0.0
      %vm819 = vcmp.gt.f32.partialorder %v804, 0.0
      %vm820 = vcmp.gt.f32.partialorder %v805, 0.0
      %vm821 = vcmp.gt.f32.partialorder %v806, 0.0
      %v822 = vmul.f32 %v792, 0.01
      %v823 = vmul.f32 %v793, 0.01
      %v824 = vmul.f32 %v794, 0.01
      %v825 = vmul.f32 %v795, 0.01
      %v826 = vmul.f32 %v796, 0.01
      %v827 = vmul.f32 %v797, 0.01
      %v828 = vmul.f32 %v798, 0.01
      %v829 = vmul.f32 %v799, 0.01
      %v830 = vmul.f32 %v800, 0.01
      %v831 = vmul.f32 %v801, 0.01
      %v832 = vmul.f32 %v802, 0.01
      %v833 = vmul.f32 %v803, 0.01
      %v834 = vmul.f32 %v804, 0.01
      %v835 = vmul.f32 %v805, 0.01
      %v836 = vmul.f32 %v806, 0.01
      %v837 = vsel %vm807, %v792, %v822
      %v838 = vsel %vm808, %v793, %v823
      %v839 = vsel %vm809, %v794, %v824
      %v840 = vsel %vm810, %v795, %v825
      %v841 = vsel %vm811, %v796, %v826
      %v842 = vsel %vm812, %v797, %v827
      %v843 = vsel %vm813, %v798, %v828
      %v844 = vsel %vm814, %v799, %v829
      %v845 = vsel %vm815, %v800, %v830
      %v846 = vsel %vm816, %v801, %v831
      %v847 = vsel %vm817, %v802, %v832
      %v848 = vsel %vm818, %v803, %v833
      %v849 = vsel %vm819, %v804, %v834
      %v850 = vsel %vm820, %v805, %v835
      %v851 = vsel %vm821, %v806, %v836
      %v852 = vld [vmem:[%s3] sm:$0x1]
      %v854 = vperm.slane %v852, 0
      %v856 = vmul.f32 %v837, %v854
      %v857 = vmul.f32 %v838, %v854
      %v858 = vmul.f32 %v839, %v854
      %v859 = vmul.f32 %v840, %v854
      %v860 = vmul.f32 %v841, %v854
      %v861 = vmul.f32 %v842, %v854
      %v862 = vmul.f32 %v843, %v854
      %v863 = vmul.f32 %v844, %v854
      %v864 = vmul.f32 %v845, %v854
      %v865 = vmul.f32 %v846, %v854
      %v866 = vmul.f32 %v847, %v854
      %v867 = vmul.f32 %v848, %v854
      %v868 = vmul.f32 %v849, %v854
      %v869 = vmul.f32 %v850, %v854
      %v870 = vmul.f32 %v851, %v854
      %v871 = vld [vmem:[%s4] sm:$0x1]
      %v873 = vperm.slane %v871, 0
      %v875 = vadd.f32 %v856, %v873
      %v876 = vadd.f32 %v857, %v873
      %v877 = vadd.f32 %v858, %v873
      %v878 = vadd.f32 %v859, %v873
      %v879 = vadd.f32 %v860, %v873
      %v880 = vadd.f32 %v861, %v873
      %v881 = vadd.f32 %v862, %v873
      %v882 = vadd.f32 %v863, %v873
      %v883 = vadd.f32 %v864, %v873
      %v884 = vadd.f32 %v865, %v873
      %v885 = vadd.f32 %v866, %v873
      %v886 = vadd.f32 %v867, %v873
      %v887 = vadd.f32 %v868, %v873
      %v888 = vadd.f32 %v869, %v873
      %v889 = vadd.f32 %v870, %v873
      %905 = vrot.lane.b32.xlu0 %v875, 96
      %v906 = vpop.permute.xlu0 %905
      %907 = vrot.lane.b32.xlu0 %v876, 96
      %v908 = vpop.permute.xlu0 %907
      %909 = vrot.lane.b32.xlu0 %v877, 96
      %v910 = vpop.permute.xlu0 %909
      %911 = vrot.lane.b32.xlu0 %v878, 96
      %v912 = vpop.permute.xlu0 %911
      %913 = vrot.lane.b32.xlu0 %v879, 96
      %v914 = vpop.permute.xlu0 %913
      %915 = vrot.lane.b32.xlu0 %v880, 96
      %v916 = vpop.permute.xlu0 %915
      %917 = vrot.lane.b32.xlu0 %v881, 96
      %v918 = vpop.permute.xlu0 %917
      %919 = vrot.lane.b32.xlu0 %v882, 96
      %v920 = vpop.permute.xlu0 %919
      %921 = vrot.lane.b32.xlu0 %v883, 96
      %v922 = vpop.permute.xlu0 %921
      %923 = vrot.lane.b32.xlu0 %v884, 96
      %v924 = vpop.permute.xlu0 %923
      %925 = vrot.lane.b32.xlu0 %v885, 96
      %v926 = vpop.permute.xlu0 %925
      %927 = vrot.lane.b32.xlu0 %v886, 96
      %v928 = vpop.permute.xlu0 %927
      %929 = vrot.lane.b32.xlu0 %v887, 96
      %v930 = vpop.permute.xlu0 %929
      %931 = vrot.lane.b32.xlu0 %v888, 96
      %v932 = vpop.permute.xlu0 %931
      %933 = vrot.lane.b32.xlu0 %v889, 96
      %v934 = vpop.permute.xlu0 %933
      %v950 = vadd.f32 %v875, %v906
      %v951 = vadd.f32 %v876, %v908
      %v952 = vadd.f32 %v877, %v910
      %v953 = vadd.f32 %v878, %v912
      %v954 = vadd.f32 %v879, %v914
      %v955 = vadd.f32 %v880, %v916
      %v956 = vadd.f32 %v881, %v918
      %v957 = vadd.f32 %v882, %v920
      %v958 = vadd.f32 %v883, %v922
      %v959 = vadd.f32 %v884, %v924
      %v960 = vadd.f32 %v885, %v926
      %v961 = vadd.f32 %v886, %v928
      %v962 = vadd.f32 %v887, %v930
      %v963 = vadd.f32 %v888, %v932
      %v964 = vadd.f32 %v889, %v934
      %965 = vrot.lane.b32.xlu0 %v875, 64
      %v966 = vpop.permute.xlu0 %965
      %967 = vrot.lane.b32.xlu0 %v876, 64
      %v968 = vpop.permute.xlu0 %967
      %969 = vrot.lane.b32.xlu0 %v877, 64
      %v970 = vpop.permute.xlu0 %969
      %971 = vrot.lane.b32.xlu0 %v878, 64
      %v972 = vpop.permute.xlu0 %971
      %973 = vrot.lane.b32.xlu0 %v879, 64
      %v974 = vpop.permute.xlu0 %973
      %975 = vrot.lane.b32.xlu0 %v880, 64
      %v976 = vpop.permute.xlu0 %975
      %977 = vrot.lane.b32.xlu0 %v881, 64
      %v978 = vpop.permute.xlu0 %977
      %979 = vrot.lane.b32.xlu0 %v882, 64
      %v980 = vpop.permute.xlu0 %979
      %981 = vrot.lane.b32.xlu0 %v883, 64
      %v982 = vpop.permute.xlu0 %981
      %983 = vrot.lane.b32.xlu0 %v884, 64
      %v984 = vpop.permute.xlu0 %983
      %985 = vrot.lane.b32.xlu0 %v885, 64
      %v986 = vpop.permute.xlu0 %985
      %987 = vrot.lane.b32.xlu0 %v886, 64
      %v988 = vpop.permute.xlu0 %987
      %989 = vrot.lane.b32.xlu0 %v887, 64
      %v990 = vpop.permute.xlu0 %989
      %991 = vrot.lane.b32.xlu0 %v888, 64
      %v992 = vpop.permute.xlu0 %991
      %993 = vrot.lane.b32.xlu0 %v889, 64
      %v994 = vpop.permute.xlu0 %993
      %v1010 = vadd.f32 %v950, %v966
      %v1011 = vadd.f32 %v951, %v968
      %v1012 = vadd.f32 %v952, %v970
      %v1013 = vadd.f32 %v953, %v972
      %v1014 = vadd.f32 %v954, %v974
      %v1015 = vadd.f32 %v955, %v976
      %v1016 = vadd.f32 %v956, %v978
      %v1017 = vadd.f32 %v957, %v980
      %v1018 = vadd.f32 %v958, %v982
      %v1019 = vadd.f32 %v959, %v984
      %v1020 = vadd.f32 %v960, %v986
      %v1021 = vadd.f32 %v961, %v988
      %v1022 = vadd.f32 %v962, %v990
      %v1023 = vadd.f32 %v963, %v992
      %v1024 = vadd.f32 %v964, %v994
      %v1025 = vadd.f32 %v1010, %v1011
      %v1026 = vadd.f32 %v1012, %v1013
      %v1027 = vadd.f32 %v1014, %v1015
      %v1028 = vadd.f32 %v1016, %v1017
      %v1029 = vadd.f32 %v1018, %v1019
      %v1030 = vadd.f32 %v1020, %v1021
      %v1031 = vadd.f32 %v1022, %v1023
      %v1032 = vadd.f32 %v1025, %v1012
      %v1033 = vadd.f32 %v1026, %v1014
      %v1034 = vadd.f32 %v1027, %v1016
      %v1035 = vadd.f32 %v1028, %v1018
      %v1036 = vadd.f32 %v1029, %v1020
      %v1037 = vadd.f32 %v1030, %v1022
      %v1038 = vadd.f32 %v1031, %v1024
      %v1039 = vmul.f32 %v1032, 0.11111111
      %v1040 = vmul.f32 %v1033, 0.11111111
      %v1041 = vmul.f32 %v1034, 0.11111111
      %v1042 = vmul.f32 %v1035, 0.11111111
      %v1043 = vmul.f32 %v1036, 0.11111111
      %v1044 = vmul.f32 %v1037, 0.11111111
      %v1045 = vmul.f32 %v1038, 0.11111111
      %vm1046 = vcmask 261120
      %1047 = vst.msk [vmem:[#allocation4] sm:$0xff] %vm1046, 0.0
      %1048 = vst.msk [vmem:[#allocation4 + $0x40] sm:$0xff] %vm1046, 0.0
      %1049 = vst.msk [vmem:[#allocation4 + $0x8] sm:$0xff] %vm1046, %v1039
      %1050 = vst.msk [vmem:[#allocation4 + $0x10] sm:$0xff] %vm1046, %v1040
      %1051 = vst.msk [vmem:[#allocation4 + $0x18] sm:$0xff] %vm1046, %v1041
      %1052 = vst.msk [vmem:[#allocation4 + $0x20] sm:$0xff] %vm1046, %v1042
      %1053 = vst.msk [vmem:[#allocation4 + $0x28] sm:$0xff] %vm1046, %v1043
      %1054 = vst.msk [vmem:[#allocation4 + $0x30] sm:$0xff] %vm1046, %v1044
      %1055 = vst.msk [vmem:[#allocation4 + $0x38] sm:$0xff] %vm1046, %v1045
      %v1056 = vld [vmem:[#allocation4] sm:$0xff]
      %v1057 = vld [vmem:[#allocation4 + $0x8] sm:$0xff]
      %v1058 = vld [vmem:[#allocation4 + $0x10] sm:$0xff]
      %v1059 = vld [vmem:[#allocation4 + $0x18] sm:$0xff]
      %v1060 = vld [vmem:[#allocation4 + $0x20] sm:$0xff]
      %v1061 = vld [vmem:[#allocation4 + $0x28] sm:$0xff]
      %v1062 = vld [vmem:[#allocation4 + $0x30] sm:$0xff]
      %v1063 = vld [vmem:[%s5] sm:$0xff]
      %v1064 = vld [vmem:[%s5 + $0x8] sm:$0xff]
      %v1065 = vld [vmem:[%s5 + $0x10] sm:$0xff]
      %v1066 = vld [vmem:[%s5 + $0x18] sm:$0xff]
      %v1067 = vld [vmem:[#allocation4 + $0x38] sm:$0xff]
      %s1068 = scalar_lea.vmem %s5, 32
      %v1069 = vld [vmem:[%s1068] sm:$0xff]
      %v1070 = vld [vmem:[%s1068 + $0x8] sm:$0xff]
      %v1071 = vld [vmem:[%s1068 + $0x10] sm:$0xff]
      %v1072 = vld [vmem:[%s1068 + $0x18] sm:$0xff]
      %v1074 = vsel %vm1046, %v1057, 0
      %v1077 = vsel %vm1046, %v1058, 0
      %v1080 = vsel %vm1046, %v1059, 0
      %v1083 = vsel %vm1046, %v1060, 0
      %v1086 = vsel %vm1046, %v1061, 0
      %v1089 = vsel %vm1046, %v1062, 0
      %v1092 = vsel %vm1046, %v1067, 0
      %1094 = vmatpush.msra.mxu0 0.0
      %1095 = vmatpush.msra.mxu0 0.0
      %1096 = vmatpush.msra.mxu0 0.0
      %1097 = vmatpush.msra.mxu0 0.0
      %1098 = vmatpush.msra.mxu0 0.0
      %1099 = vmatpush.msra.mxu0 0.0
      %1100 = vmatpush.msra.mxu0 0.0
      %1101 = vmatpush.msra.mxu0 0.0
      %1102 = vmatpush.msra.mxu0 0.0
      %1103 = vmatpush.msra.mxu0 0.0
      %1104 = vmatpush.msra.mxu0 0.0
      %1105 = vmatpush.msra.mxu0 0.0
      %1106 = vmatpush.msra.mxu0 %v1072
      %1107 = vmatpush.msra.mxu0 %v1071
      %1108 = vmatpush.msra.mxu0 %v1070
      %1109 = vmatpush.msra.mxu0 %v1069
      %1110 = vmatmul.f32.gmra.mxu0 %v1074
      %v1111 = vpop.f32.mrf.mxu0
      %v1112 = vadd.f32 0.0, %v1111
      %1113 = vmatmul.f32.gmra.mxu0 %v1077
      %v1114 = vpop.f32.mrf.mxu0
      %v1115 = vadd.f32 0.0, %v1114
      %1116 = vmatmul.f32.gmra.mxu0 %v1080
      %v1117 = vpop.f32.mrf.mxu0
      %v1118 = vadd.f32 0.0, %v1117
      %1119 = vmatmul.f32.gmra.mxu0 %v1083
      %v1120 = vpop.f32.mrf.mxu0
      %v1121 = vadd.f32 0.0, %v1120
      %1122 = vmatmul.f32.gmra.mxu0 %v1086
      %v1123 = vpop.f32.mrf.mxu0
      %v1124 = vadd.f32 0.0, %v1123
      %1125 = vmatmul.f32.gmra.mxu0 %v1089
      %v1126 = vpop.f32.mrf.mxu0
      %v1127 = vadd.f32 0.0, %v1126
      %1128 = vmatmul.f32.gmra.mxu0 %v1092
      %v1129 = vpop.f32.mrf.mxu0
      %v1130 = vadd.f32 0.0, %v1129
      %1131 = vdwg.mxu0
      %v1133 = vsel %vm1046, %v1056, 0
      %1135 = vmatpush.msra.mxu0 0.0
      %1136 = vmatpush.msra.mxu0 0.0
      %1137 = vmatpush.msra.mxu0 0.0
      %1138 = vmatpush.msra.mxu0 0.0
      %1139 = vmatpush.msra.mxu0 0.0
      %1140 = vmatpush.msra.mxu0 0.0
      %1141 = vmatpush.msra.mxu0 0.0
      %1142 = vmatpush.msra.mxu0 0.0
      %1143 = vmatpush.msra.mxu0 0.0
      %1144 = vmatpush.msra.mxu0 0.0
      %1145 = vmatpush.msra.mxu0 0.0
      %1146 = vmatpush.msra.mxu0 0.0
      %1147 = vmatpush.msra.mxu0 %v1066
      %1148 = vmatpush.msra.mxu0 %v1065
      %1149 = vmatpush.msra.mxu0 %v1064
      %1150 = vmatpush.msra.mxu0 %v1063
      %1151 = vmatmul.f32.gmra.mxu0 %v1133
      %v1152 = vpop.f32.mrf.mxu0
      %v1153 = vadd.f32 %v1112, %v1152
      %1154 = vmatmul.f32.gmra.mxu0 %v1074
      %v1155 = vpop.f32.mrf.mxu0
      %v1156 = vadd.f32 %v1115, %v1155
      %1157 = vmatmul.f32.gmra.mxu0 %v1077
      %v1158 = vpop.f32.mrf.mxu0
      %v1159 = vadd.f32 %v1118, %v1158
      %1160 = vmatmul.f32.gmra.mxu0 %v1080
      %v1161 = vpop.f32.mrf.mxu0
      %v1162 = vadd.f32 %v1121, %v1161
      %1163 = vmatmul.f32.gmra.mxu0 %v1083
      %v1164 = vpop.f32.mrf.mxu0
      %v1165 = vadd.f32 %v1124, %v1164
      %1166 = vmatmul.f32.gmra.mxu0 %v1086
      %v1167 = vpop.f32.mrf.mxu0
      %v1168 = vadd.f32 %v1127, %v1167
      %1169 = vmatmul.f32.gmra.mxu0 %v1089
      %v1170 = vpop.f32.mrf.mxu0
      %v1171 = vadd.f32 %v1130, %v1170
      %1172 = vdwg.mxu0
      %v1173 = vld [vmem:[#allocation4 + $0x10] sm:$0xff]
      %v1174 = vld [vmem:[#allocation4 + $0x18] sm:$0xff]
      %v1175 = vld [vmem:[#allocation4 + $0x20] sm:$0xff]
      %v1176 = vld [vmem:[#allocation4 + $0x28] sm:$0xff]
      %v1177 = vld [vmem:[#allocation4 + $0x30] sm:$0xff]
      %v1178 = vld [vmem:[#allocation4 + $0x38] sm:$0xff]
      %v1179 = vld [vmem:[#allocation4 + $0x40] sm:$0xff]
      %s1180 = scalar_lea.vmem %s5, 64
      %v1181 = vld [vmem:[%s1180] sm:$0xff]
      %v1182 = vld [vmem:[%s1180 + $0x8] sm:$0xff]
      %v1183 = vld [vmem:[%s1180 + $0x10] sm:$0xff]
      %v1184 = vld [vmem:[%s1180 + $0x18] sm:$0xff]
      %v1186 = vsel %vm1046, %v1173, 0
      %v1189 = vsel %vm1046, %v1174, 0
      %v1192 = vsel %vm1046, %v1175, 0
      %v1195 = vsel %vm1046, %v1176, 0
      %v1198 = vsel %vm1046, %v1177, 0
      %v1201 = vsel %vm1046, %v1178, 0
      %v1204 = vsel %vm1046, %v1179, 0
      %1206 = vmatpush.msra.mxu0 0.0
      %1207 = vmatpush.msra.mxu0 0.0
      %1208 = vmatpush.msra.mxu0 0.0
      %1209 = vmatpush.msra.mxu0 0.0
      %1210 = vmatpush.msra.mxu0 0.0
      %1211 = vmatpush.msra.mxu0 0.0
      %1212 = vmatpush.msra.mxu0 0.0
      %1213 = vmatpush.msra.mxu0 0.0
      %1214 = vmatpush.msra.mxu0 0.0
      %1215 = vmatpush.msra.mxu0 0.0
      %1216 = vmatpush.msra.mxu0 0.0
      %1217 = vmatpush.msra.mxu0 0.0
      %1218 = vmatpush.msra.mxu0 %v1184
      %1219 = vmatpush.msra.mxu0 %v1183
      %1220 = vmatpush.msra.mxu0 %v1182
      %1221 = vmatpush.msra.mxu0 %v1181
      %1222 = vmatmul.f32.gmra.mxu0 %v1186
      %v1223 = vpop.f32.mrf.mxu0
      %v1224 = vadd.f32 0.0, %v1223
      %1225 = vmatmul.f32.gmra.mxu0 %v1189
      %v1226 = vpop.f32.mrf.mxu0
      %v1227 = vadd.f32 0.0, %v1226
      %1228 = vmatmul.f32.gmra.mxu0 %v1192
      %v1229 = vpop.f32.mrf.mxu0
      %v1230 = vadd.f32 0.0, %v1229
      %1231 = vmatmul.f32.gmra.mxu0 %v1195
      %v1232 = vpop.f32.mrf.mxu0
      %v1233 = vadd.f32 0.0, %v1232
      %1234 = vmatmul.f32.gmra.mxu0 %v1198
      %v1235 = vpop.f32.mrf.mxu0
      %v1236 = vadd.f32 0.0, %v1235
      %1237 = vmatmul.f32.gmra.mxu0 %v1201
      %v1238 = vpop.f32.mrf.mxu0
      %v1239 = vadd.f32 0.0, %v1238
      %1240 = vmatmul.f32.gmra.mxu0 %v1204
      %v1241 = vpop.f32.mrf.mxu0
      %v1242 = vadd.f32 0.0, %v1241
      %1243 = vdwg.mxu0
      %v1244 = vadd.f32 %v1153, %v1224
      %v1245 = vadd.f32 %v1156, %v1227
      %v1246 = vadd.f32 %v1159, %v1230
      %v1247 = vadd.f32 %v1162, %v1233
      %v1248 = vadd.f32 %v1165, %v1236
      %v1249 = vadd.f32 %v1168, %v1239
      %v1250 = vadd.f32 %v1171, %v1242
      %v1251 = vld [vmem:[%s6] sm:$0x1]
      %v1253 = vperm.slane %v1251, 0
      %v1255 = vadd.f32 %v1244, %v1253
      %v1256 = vadd.f32 %v1245, %v1253
      %v1257 = vadd.f32 %v1246, %v1253
      %v1258 = vadd.f32 %v1247, %v1253
      %v1259 = vadd.f32 %v1248, %v1253
      %v1260 = vadd.f32 %v1249, %v1253
      %v1261 = vadd.f32 %v1250, %v1253
      %vm1262 = vcmp.gt.f32.partialorder %v1255, 0.0
      %vm1263 = vcmp.gt.f32.partialorder %v1256, 0.0
      %vm1264 = vcmp.gt.f32.partialorder %v1257, 0.0
      %vm1265 = vcmp.gt.f32.partialorder %v1258, 0.0
      %vm1266 = vcmp.gt.f32.partialorder %v1259, 0.0
      %vm1267 = vcmp.gt.f32.partialorder %v1260, 0.0
      %vm1268 = vcmp.gt.f32.partialorder %v1261, 0.0
      %v1269 = vmul.f32 %v1255, 0.01
      %v1270 = vmul.f32 %v1256, 0.01
      %v1271 = vmul.f32 %v1257, 0.01
      %v1272 = vmul.f32 %v1258, 0.01
      %v1273 = vmul.f32 %v1259, 0.01
      %v1274 = vmul.f32 %v1260, 0.01
      %v1275 = vmul.f32 %v1261, 0.01
      %v1276 = vsel %vm1262, %v1255, %v1269
      %v1277 = vsel %vm1263, %v1256, %v1270
      %v1278 = vsel %vm1264, %v1257, %v1271
      %v1279 = vsel %vm1265, %v1258, %v1272
      %v1280 = vsel %vm1266, %v1259, %v1273
      %v1281 = vsel %vm1267, %v1260, %v1274
      %v1282 = vsel %vm1268, %v1261, %v1275
      %v1283 = vld [vmem:[%s7] sm:$0xff]
      %v1284 = vld [vmem:[%s7 + $0x8] sm:$0xff]
      %v1285 = vld [vmem:[%s7 + $0x10] sm:$0xff]
      %v1286 = vld [vmem:[%s7 + $0x18] sm:$0xff]
      %v1287 = vld [vmem:[%s7 + $0x20] sm:$0xff]
      %v1288 = vld [vmem:[%s7 + $0x28] sm:$0xff]
      %v1289 = vld [vmem:[%s7 + $0x30] sm:$0xff]
      %v1290 = vld [vmem:[%s7 + $0x38] sm:$0xff]
      %v1291 = vld [vmem:[%s8] sm:$0xff]
      %v1292 = vld [vmem:[%s8 + $0x8] sm:$0xff]
      %v1293 = vld [vmem:[%s8 + $0x10] sm:$0xff]
      %v1294 = vld [vmem:[%s8 + $0x18] sm:$0xff]
      %v1295 = vld [vmem:[%s9] sm:$0x1]
      %v1297 = vperm.slane %v1295, 0
      %vm1299 = vcmask 523264
      %v1301 = vsel %vm1299, %v1276, 0
      %v1304 = vsel %vm1299, %v1277, 0
      %v1307 = vsel %vm1299, %v1278, 0
      %v1310 = vsel %vm1299, %v1279, 0
      %v1313 = vsel %vm1299, %v1280, 0
      %v1316 = vsel %vm1299, %v1281, 0
      %v1319 = vsel %vm1299, %v1282, 0
      %1321 = vmatpush.msra.mxu0 0.0
      %1322 = vmatpush.msra.mxu0 0.0
      %1323 = vmatpush.msra.mxu0 0.0
      %1324 = vmatpush.msra.mxu0 0.0
      %1325 = vmatpush.msra.mxu0 0.0
      %1326 = vmatpush.msra.mxu0 0.0
      %1327 = vmatpush.msra.mxu0 0.0
      %1328 = vmatpush.msra.mxu0 0.0
      %1329 = vmatpush.msra.mxu0 %v1290
      %1330 = vmatpush.msra.mxu0 %v1289
      %1331 = vmatpush.msra.mxu0 %v1288
      %1332 = vmatpush.msra.mxu0 %v1287
      %1333 = vmatpush.msra.mxu0 %v1286
      %1334 = vmatpush.msra.mxu0 %v1285
      %1335 = vmatpush.msra.mxu0 %v1284
      %1336 = vmatpush.msra.mxu0 %v1283
      %1337 = vmatmul.f32.gmra.mxu0 %v1301
      %v1338 = vpop.f32.mrf.mxu0
      %v1339 = vadd.f32 %v1297, %v1338
      %1340 = vmatmul.f32.gmra.mxu0 %v1304
      %v1341 = vpop.f32.mrf.mxu0
      %v1342 = vadd.f32 %v1297, %v1341
      %1343 = vmatmul.f32.gmra.mxu0 %v1307
      %v1344 = vpop.f32.mrf.mxu0
      %v1345 = vadd.f32 %v1297, %v1344
      %1346 = vmatmul.f32.gmra.mxu0 %v1310
      %v1347 = vpop.f32.mrf.mxu0
      %v1348 = vadd.f32 %v1297, %v1347
      %1349 = vmatmul.f32.gmra.mxu0 %v1313
      %v1350 = vpop.f32.mrf.mxu0
      %v1351 = vadd.f32 %v1297, %v1350
      %1352 = vmatmul.f32.gmra.mxu0 %v1316
      %v1353 = vpop.f32.mrf.mxu0
      %v1354 = vadd.f32 %v1297, %v1353
      %1355 = vmatmul.f32.gmra.mxu0 %v1319
      %v1356 = vpop.f32.mrf.mxu0
      %v1357 = vadd.f32 %v1297, %v1356
      %1358 = vdwg.mxu0
      %1359 = vst [vmem:[#allocation2] sm:$0xff] %v1339
      %1360 = vst [vmem:[#allocation2 + $0x8] sm:$0xff] %v1342
      %1361 = vst [vmem:[#allocation2 + $0x10] sm:$0xff] %v1345
      %1362 = vst [vmem:[#allocation2 + $0x18] sm:$0xff] %v1348
      %1363 = vst [vmem:[#allocation2 + $0x20] sm:$0xff] %v1351
      %1364 = vst [vmem:[#allocation2 + $0x28] sm:$0xff] %v1354
      %1365 = vst [vmem:[#allocation2 + $0x30] sm:$0xff] %v1357
      %v1366 = vld [vmem:[#allocation2] sm:$0xff]
      %v1368 = vsel %vm1046, 0.0, 0
      %1370 = vmatpush.msra.mxu0 0.0
      %1371 = vmatpush.msra.mxu0 0.0
      %1372 = vmatpush.msra.mxu0 0.0
      %1373 = vmatpush.msra.mxu0 0.0
      %1374 = vmatpush.msra.mxu0 0.0
      %1375 = vmatpush.msra.mxu0 0.0
      %1376 = vmatpush.msra.mxu0 0.0
      %1377 = vmatpush.msra.mxu0 0.0
      %1378 = vmatpush.msra.mxu0 0.0
      %1379 = vmatpush.msra.mxu0 0.0
      %1380 = vmatpush.msra.mxu0 0.0
      %1381 = vmatpush.msra.mxu0 0.0
      %1382 = vmatpush.msra.mxu0 %v1294
      %1383 = vmatpush.msra.mxu0 %v1293
      %1384 = vmatpush.msra.mxu0 %v1292
      %1385 = vmatpush.msra.mxu0 %v1291
      %1386 = vmatmul.f32.gmra.mxu0 %v1368
      %v1387 = vpop.f32.mrf.mxu0
      %v1388 = vadd.f32 0.0, %v1387
      %1389 = vdwg.mxu0
      %v1390 = vadd.f32 %v1366, %v1388
      %v1391 = vxor.u32 %v1390, 2147483648
      %v1392 = vmul.f32 %v1391, 1.442695
      %v1393 = vpow.pop %v1392
      %v1394 = vadd.f32 %v1393, 1.0
      %v1395 = vrcp.pop %v1394
      %v1396 = vmul.f32 %v1394, %v1395
      %v1397 = vsub.f32 1.0, %v1396
      %v1398 = vmul.f32 %v1395, %v1397
      %v1399 = vadd.f32 %v1395, %v1398
      %vm1400 = vweird.f32 %v1394
      %vm1401 = vweird.f32 %v1395
      %vm1402 = vmor %vm1400, %vm1401
      %v1403 = vsel %vm1402, %v1395, %v1399
      %v1404 = vand.u32 2147483647, %v1394
      %vm1405 = vcmp.eq.f32.partialorder %v1404, 8.507059e+37
      %v1406 = vand.u32 %v1394, 2147483648
      %v1407 = vor.u32 1.1754944e-38, %v1406
      %v1408 = vsel %vm1405, %v1407, %v1403
      %v1409 = vmul.f32 1.0, %v1408
      %v1410 = vtanh.pop %v1390
      %v1411 = vmul.f32 %v1409, 0.0
      %1413 = vrot.lane.b32.xlu0 %v1410, 64
      %v1414 = vpop.permute.xlu0 %1413
      %v1416 = vmul.f32 %v1409, %v1414
      %1418 = vrot.lane.b32.xlu0 %v1416, 32
      %v1419 = vpop.permute.xlu0 %1418
      %v1421 = vadd.f32 %v1411, %v1419
      %v1422 = vtanh.pop %v1421
      %1424 = vrot.lane.b32.xlu0 %v1422, 64
      %v1425 = vpop.permute.xlu0 %1424
      %v1427 = vmul.f32 %v1409, %v1425
      %1429 = vrot.lane.b32.xlu0 %v1427, 32
      %v1430 = vpop.permute.xlu0 %1429
      %1432 = vst.msk [vmem:[#allocation3] sm:$0xff] %vm1046, %v1430
      %s1433 = scalar_lea.vmem [#allocation2], 8
      %v1434 = vld [vmem:[%s1433] sm:$0xff]
      %v1435 = vsel %vm1046, %v1430, 0
      %1437 = vmatpush.msra.mxu0 0.0
      %1438 = vmatpush.msra.mxu0 0.0
      %1439 = vmatpush.msra.mxu0 0.0
      %1440 = vmatpush.msra.mxu0 0.0
      %1441 = vmatpush.msra.mxu0 0.0
      %1442 = vmatpush.msra.mxu0 0.0
      %1443 = vmatpush.msra.mxu0 0.0
      %1444 = vmatpush.msra.mxu0 0.0
      %1445 = vmatpush.msra.mxu0 0.0
      %1446 = vmatpush.msra.mxu0 0.0
      %1447 = vmatpush.msra.mxu0 0.0
      %1448 = vmatpush.msra.mxu0 0.0
      %1449 = vmatpush.msra.mxu0 %v1294
      %1450 = vmatpush.msra.mxu0 %v1293
      %1451 = vmatpush.msra.mxu0 %v1292
      %1452 = vmatpush.msra.mxu0 %v1291
      %1453 = vmatmul.f32.gmra.mxu0 %v1435
      %v1454 = vpop.f32.mrf.mxu0
      %v1455 = vadd.f32 0.0, %v1454
      %1456 = vdwg.mxu0
      %v1457 = vadd.f32 %v1434, %v1455
      %v1458 = vxor.u32 %v1457, 2147483648
      %v1459 = vmul.f32 %v1458, 1.442695
      %v1460 = vpow.pop %v1459
      %v1461 = vadd.f32 %v1460, 1.0
      %v1462 = vrcp.pop %v1461
      %v1463 = vmul.f32 %v1461, %v1462
      %v1464 = vsub.f32 1.0, %v1463
      %v1465 = vmul.f32 %v1462, %v1464
      %v1466 = vadd.f32 %v1462, %v1465
      %vm1467 = vweird.f32 %v1461
      %vm1468 = vweird.f32 %v1462
      %vm1469 = vmor %vm1467, %vm1468
      %v1470 = vsel %vm1469, %v1462, %v1466
      %v1471 = vand.u32 2147483647, %v1461
      %vm1472 = vcmp.eq.f32.partialorder %v1471, 8.507059e+37
      %v1473 = vand.u32 %v1461, 2147483648
      %v1474 = vor.u32 1.1754944e-38, %v1473
      %v1475 = vsel %vm1472, %v1474, %v1470
      %v1476 = vmul.f32 1.0, %v1475
      %v1477 = vtanh.pop %v1457
      %v1478 = vmul.f32 %v1476, %v1421
      %1480 = vrot.lane.b32.xlu0 %v1477, 64
      %v1481 = vpop.permute.xlu0 %1480
      %v1483 = vmul.f32 %v1476, %v1481
      %1485 = vrot.lane.b32.xlu0 %v1483, 32
      %v1486 = vpop.permute.xlu0 %1485
      %v1488 = vadd.f32 %v1478, %v1486
      %v1489 = vtanh.pop %v1488
      %1491 = vrot.lane.b32.xlu0 %v1489, 64
      %v1492 = vpop.permute.xlu0 %1491
      %v1494 = vmul.f32 %v1476, %v1492
      %1496 = vrot.lane.b32.xlu0 %v1494, 32
      %v1497 = vpop.permute.xlu0 %1496
      %s1499 = scalar_lea.vmem [#allocation3], 8
      %1500 = vst.msk [vmem:[%s1499] sm:$0xff] %vm1046, %v1497
      %s1501 = scalar_lea.vmem [#allocation2], 16
      %v1502 = vld [vmem:[%s1501] sm:$0xff]
      %v1503 = vsel %vm1046, %v1497, 0
      %1505 = vmatpush.msra.mxu0 0.0
      %1506 = vmatpush.msra.mxu0 0.0
      %1507 = vmatpush.msra.mxu0 0.0
      %1508 = vmatpush.msra.mxu0 0.0
      %1509 = vmatpush.msra.mxu0 0.0
      %1510 = vmatpush.msra.mxu0 0.0
      %1511 = vmatpush.msra.mxu0 0.0
      %1512 = vmatpush.msra.mxu0 0.0
      %1513 = vmatpush.msra.mxu0 0.0
      %1514 = vmatpush.msra.mxu0 0.0
      %1515 = vmatpush.msra.mxu0 0.0
      %1516 = vmatpush.msra.mxu0 0.0
      %1517 = vmatpush.msra.mxu0 %v1294
      %1518 = vmatpush.msra.mxu0 %v1293
      %1519 = vmatpush.msra.mxu0 %v1292
      %1520 = vmatpush.msra.mxu0 %v1291
      %1521 = vmatmul.f32.gmra.mxu0 %v1503
      %v1522 = vpop.f32.mrf.mxu0
      %v1523 = vadd.f32 0.0, %v1522
      %1524 = vdwg.mxu0
      %v1525 = vadd.f32 %v1502, %v1523
      %v1526 = vxor.u32 %v1525, 2147483648
      %v1527 = vmul.f32 %v1526, 1.442695
      %v1528 = vpow.pop %v1527
      %v1529 = vadd.f32 %v1528, 1.0
      %v1530 = vrcp.pop %v1529
      %v1531 = vmul.f32 %v1529, %v1530
      %v1532 = vsub.f32 1.0, %v1531
      %v1533 = vmul.f32 %v1530, %v1532
      %v1534 = vadd.f32 %v1530, %v1533
      %vm1535 = vweird.f32 %v1529
      %vm1536 = vweird.f32 %v1530
      %vm1537 = vmor %vm1535, %vm1536
      %v1538 = vsel %vm1537, %v1530, %v1534
      %v1539 = vand.u32 2147483647, %v1529
      %vm1540 = vcmp.eq.f32.partialorder %v1539, 8.507059e+37
      %v1541 = vand.u32 %v1529, 2147483648
      %v1542 = vor.u32 1.1754944e-38, %v1541
      %v1543 = vsel %vm1540, %v1542, %v1538
      %v1544 = vmul.f32 1.0, %v1543
      %v1545 = vtanh.pop %v1525
      %v1546 = vmul.f32 %v1544, %v1488
      %1548 = vrot.lane.b32.xlu0 %v1545, 64
      %v1549 = vpop.permute.xlu0 %1548
      %v1551 = vmul.f32 %v1544, %v1549
      %1553 = vrot.lane.b32.xlu0 %v1551, 32
      %v1554 = vpop.permute.xlu0 %1553
      %v1556 = vadd.f32 %v1546, %v1554
      %v1557 = vtanh.pop %v1556
      %1559 = vrot.lane.b32.xlu0 %v1557, 64
      %v1560 = vpop.permute.xlu0 %1559
      %v1562 = vmul.f32 %v1544, %v1560
      %1564 = vrot.lane.b32.xlu0 %v1562, 32
      %v1565 = vpop.permute.xlu0 %1564
      %s1567 = scalar_lea.vmem [#allocation3], 16
      %1568 = vst.msk [vmem:[%s1567] sm:$0xff] %vm1046, %v1565
      %s1569 = scalar_lea.vmem [#allocation2], 24
      %v1570 = vld [vmem:[%s1569] sm:$0xff]
      %v1571 = vsel %vm1046, %v1565, 0
      %1573 = vmatpush.msra.mxu0 0.0
      %1574 = vmatpush.msra.mxu0 0.0
      %1575 = vmatpush.msra.mxu0 0.0
      %1576 = vmatpush.msra.mxu0 0.0
      %1577 = vmatpush.msra.mxu0 0.0
      %1578 = vmatpush.msra.mxu0 0.0
      %1579 = vmatpush.msra.mxu0 0.0
      %1580 = vmatpush.msra.mxu0 0.0
      %1581 = vmatpush.msra.mxu0 0.0
      %1582 = vmatpush.msra.mxu0 0.0
      %1583 = vmatpush.msra.mxu0 0.0
      %1584 = vmatpush.msra.mxu0 0.0
      %1585 = vmatpush.msra.mxu0 %v1294
      %1586 = vmatpush.msra.mxu0 %v1293
      %1587 = vmatpush.msra.mxu0 %v1292
      %1588 = vmatpush.msra.mxu0 %v1291
      %1589 = vmatmul.f32.gmra.mxu0 %v1571
      %v1590 = vpop.f32.mrf.mxu0
      %v1591 = vadd.f32 0.0, %v1590
      %1592 = vdwg.mxu0
      %v1593 = vadd.f32 %v1570, %v1591
      %v1594 = vxor.u32 %v1593, 2147483648
      %v1595 = vmul.f32 %v1594, 1.442695
      %v1596 = vpow.pop %v1595
      %v1597 = vadd.f32 %v1596, 1.0
      %v1598 = vrcp.pop %v1597
      %v1599 = vmul.f32 %v1597, %v1598
      %v1600 = vsub.f32 1.0, %v1599
      %v1601 = vmul.f32 %v1598, %v1600
      %v1602 = vadd.f32 %v1598, %v1601
      %vm1603 = vweird.f32 %v1597
      %vm1604 = vweird.f32 %v1598
      %vm1605 = vmor %vm1603, %vm1604
      %v1606 = vsel %vm1605, %v1598, %v1602
      %v1607 = vand.u32 2147483647, %v1597
      %vm1608 = vcmp.eq.f32.partialorder %v1607, 8.507059e+37
      %v1609 = vand.u32 %v1597, 2147483648
      %v1610 = vor.u32 1.1754944e-38, %v1609
      %v1611 = vsel %vm1608, %v1610, %v1606
      %v1612 = vmul.f32 1.0, %v1611
      %v1613 = vtanh.pop %v1593
      %v1614 = vmul.f32 %v1612, %v1556
      %1616 = vrot.lane.b32.xlu0 %v1613, 64
      %v1617 = vpop.permute.xlu0 %1616
      %v1619 = vmul.f32 %v1612, %v1617
      %1621 = vrot.lane.b32.xlu0 %v1619, 32
      %v1622 = vpop.permute.xlu0 %1621
      %v1624 = vadd.f32 %v1614, %v1622
      %v1625 = vtanh.pop %v1624
      %1627 = vrot.lane.b32.xlu0 %v1625, 64
      %v1628 = vpop.permute.xlu0 %1627
      %v1630 = vmul.f32 %v1612, %v1628
      %1632 = vrot.lane.b32.xlu0 %v1630, 32
      %v1633 = vpop.permute.xlu0 %1632
      %s1635 = scalar_lea.vmem [#allocation3], 24
      %1636 = vst.msk [vmem:[%s1635] sm:$0xff] %vm1046, %v1633
      %s1637 = scalar_lea.vmem [#allocation2], 32
      %v1638 = vld [vmem:[%s1637] sm:$0xff]
      %v1639 = vsel %vm1046, %v1633, 0
      %1641 = vmatpush.msra.mxu0 0.0
      %1642 = vmatpush.msra.mxu0 0.0
      %1643 = vmatpush.msra.mxu0 0.0
      %1644 = vmatpush.msra.mxu0 0.0
      %1645 = vmatpush.msra.mxu0 0.0
      %1646 = vmatpush.msra.mxu0 0.0
      %1647 = vmatpush.msra.mxu0 0.0
      %1648 = vmatpush.msra.mxu0 0.0
      %1649 = vmatpush.msra.mxu0 0.0
      %1650 = vmatpush.msra.mxu0 0.0
      %1651 = vmatpush.msra.mxu0 0.0
      %1652 = vmatpush.msra.mxu0 0.0
      %1653 = vmatpush.msra.mxu0 %v1294
      %1654 = vmatpush.msra.mxu0 %v1293
      %1655 = vmatpush.msra.mxu0 %v1292
      %1656 = vmatpush.msra.mxu0 %v1291
      %1657 = vmatmul.f32.gmra.mxu0 %v1639
      %v1658 = vpop.f32.mrf.mxu0
      %v1659 = vadd.f32 0.0, %v1658
      %1660 = vdwg.mxu0
      %v1661 = vadd.f32 %v1638, %v1659
      %v1662 = vxor.u32 %v1661, 2147483648
      %v1663 = vmul.f32 %v1662, 1.442695
      %v1664 = vpow.pop %v1663
      %v1665 = vadd.f32 %v1664, 1.0
      %v1666 = vrcp.pop %v1665
      %v1667 = vmul.f32 %v1665, %v1666
      %v1668 = vsub.f32 1.0, %v1667
      %v1669 = vmul.f32 %v1666, %v1668
      %v1670 = vadd.f32 %v1666, %v1669
      %vm1671 = vweird.f32 %v1665
      %vm1672 = vweird.f32 %v1666
      %vm1673 = vmor %vm1671, %vm1672
      %v1674 = vsel %vm1673, %v1666, %v1670
      %v1675 = vand.u32 2147483647, %v1665
      %vm1676 = vcmp.eq.f32.partialorder %v1675, 8.507059e+37
      %v1677 = vand.u32 %v1665, 2147483648
      %v1678 = vor.u32 1.1754944e-38, %v1677
      %v1679 = vsel %vm1676, %v1678, %v1674
      %v1680 = vmul.f32 1.0, %v1679
      %v1681 = vtanh.pop %v1661
      %v1682 = vmul.f32 %v1680, %v1624
      %1684 = vrot.lane.b32.xlu0 %v1681, 64
      %v1685 = vpop.permute.xlu0 %1684
      %v1687 = vmul.f32 %v1680, %v1685
      %1689 = vrot.lane.b32.xlu0 %v1687, 32
      %v1690 = vpop.permute.xlu0 %1689
      %v1692 = vadd.f32 %v1682, %v1690
      %v1693 = vtanh.pop %v1692
      %1695 = vrot.lane.b32.xlu0 %v1693, 64
      %v1696 = vpop.permute.xlu0 %1695
      %v1698 = vmul.f32 %v1680, %v1696
      %1700 = vrot.lane.b32.xlu0 %v1698, 32
      %v1701 = vpop.permute.xlu0 %1700
      %s1703 = scalar_lea.vmem [#allocation3], 32
      %1704 = vst.msk [vmem:[%s1703] sm:$0xff] %vm1046, %v1701
      %s1705 = scalar_lea.vmem [#allocation2], 40
      %v1706 = vld [vmem:[%s1705] sm:$0xff]
      %v1707 = vsel %vm1046, %v1701, 0
      %1709 = vmatpush.msra.mxu0 0.0
      %1710 = vmatpush.msra.mxu0 0.0
      %1711 = vmatpush.msra.mxu0 0.0
      %1712 = vmatpush.msra.mxu0 0.0
      %1713 = vmatpush.msra.mxu0 0.0
      %1714 = vmatpush.msra.mxu0 0.0
      %1715 = vmatpush.msra.mxu0 0.0
      %1716 = vmatpush.msra.mxu0 0.0
      %1717 = vmatpush.msra.mxu0 0.0
      %1718 = vmatpush.msra.mxu0 0.0
      %1719 = vmatpush.msra.mxu0 0.0
      %1720 = vmatpush.msra.mxu0 0.0
      %1721 = vmatpush.msra.mxu0 %v1294
      %1722 = vmatpush.msra.mxu0 %v1293
      %1723 = vmatpush.msra.mxu0 %v1292
      %1724 = vmatpush.msra.mxu0 %v1291
      %1725 = vmatmul.f32.gmra.mxu0 %v1707
      %v1726 = vpop.f32.mrf.mxu0
      %v1727 = vadd.f32 0.0, %v1726
      %1728 = vdwg.mxu0
      %v1729 = vadd.f32 %v1706, %v1727
      %v1730 = vxor.u32 %v1729, 2147483648
      %v1731 = vmul.f32 %v1730, 1.442695
      %v1732 = vpow.pop %v1731
      %v1733 = vadd.f32 %v1732, 1.0
      %v1734 = vrcp.pop %v1733
      %v1735 = vmul.f32 %v1733, %v1734
      %v1736 = vsub.f32 1.0, %v1735
      %v1737 = vmul.f32 %v1734, %v1736
      %v1738 = vadd.f32 %v1734, %v1737
      %vm1739 = vweird.f32 %v1733
      %vm1740 = vweird.f32 %v1734
      %vm1741 = vmor %vm1739, %vm1740
      %v1742 = vsel %vm1741, %v1734, %v1738
      %v1743 = vand.u32 2147483647, %v1733
      %vm1744 = vcmp.eq.f32.partialorder %v1743, 8.507059e+37
      %v1745 = vand.u32 %v1733, 2147483648
      %v1746 = vor.u32 1.1754944e-38, %v1745
      %v1747 = vsel %vm1744, %v1746, %v1742
      %v1748 = vmul.f32 1.0, %v1747
      %v1749 = vtanh.pop %v1729
      %v1750 = vmul.f32 %v1748, %v1692
      %1752 = vrot.lane.b32.xlu0 %v1749, 64
      %v1753 = vpop.permute.xlu0 %1752
      %v1755 = vmul.f32 %v1748, %v1753
      %1757 = vrot.lane.b32.xlu0 %v1755, 32
      %v1758 = vpop.permute.xlu0 %1757
      %v1760 = vadd.f32 %v1750, %v1758
      %v1761 = vtanh.pop %v1760
      %1763 = vrot.lane.b32.xlu0 %v1761, 64
      %v1764 = vpop.permute.xlu0 %1763
      %v1766 = vmul.f32 %v1748, %v1764
      %1768 = vrot.lane.b32.xlu0 %v1766, 32
      %v1769 = vpop.permute.xlu0 %1768
      %s1771 = scalar_lea.vmem [#allocation3], 40
      %1772 = vst.msk [vmem:[%s1771] sm:$0xff] %vm1046, %v1769
      %s1773 = scalar_lea.vmem [#allocation2], 48
      %v1774 = vld [vmem:[%s1773] sm:$0xff]
      %v1775 = vsel %vm1046, %v1769, 0
      %1777 = vmatpush.msra.mxu0 0.0
      %1778 = vmatpush.msra.mxu0 0.0
      %1779 = vmatpush.msra.mxu0 0.0
      %1780 = vmatpush.msra.mxu0 0.0
      %1781 = vmatpush.msra.mxu0 0.0
      %1782 = vmatpush.msra.mxu0 0.0
      %1783 = vmatpush.msra.mxu0 0.0
      %1784 = vmatpush.msra.mxu0 0.0
      %1785 = vmatpush.msra.mxu0 0.0
      %1786 = vmatpush.msra.mxu0 0.0
      %1787 = vmatpush.msra.mxu0 0.0
      %1788 = vmatpush.msra.mxu0 0.0
      %1789 = vmatpush.msra.mxu0 %v1294
      %1790 = vmatpush.msra.mxu0 %v1293
      %1791 = vmatpush.msra.mxu0 %v1292
      %1792 = vmatpush.msra.mxu0 %v1291
      %1793 = vmatmul.f32.gmra.mxu0 %v1775
      %v1794 = vpop.f32.mrf.mxu0
      %v1795 = vadd.f32 0.0, %v1794
      %1796 = vdwg.mxu0
      %v1797 = vadd.f32 %v1774, %v1795
      %v1798 = vxor.u32 %v1797, 2147483648
      %v1799 = vmul.f32 %v1798, 1.442695
      %v1800 = vpow.pop %v1799
      %v1801 = vadd.f32 %v1800, 1.0
      %v1802 = vrcp.pop %v1801
      %v1803 = vmul.f32 %v1801, %v1802
      %v1804 = vsub.f32 1.0, %v1803
      %v1805 = vmul.f32 %v1802, %v1804
      %v1806 = vadd.f32 %v1802, %v1805
      %vm1807 = vweird.f32 %v1801
      %vm1808 = vweird.f32 %v1802
      %vm1809 = vmor %vm1807, %vm1808
      %v1810 = vsel %vm1809, %v1802, %v1806
      %v1811 = vand.u32 2147483647, %v1801
      %vm1812 = vcmp.eq.f32.partialorder %v1811, 8.507059e+37
      %v1813 = vand.u32 %v1801, 2147483648
      %v1814 = vor.u32 1.1754944e-38, %v1813
      %v1815 = vsel %vm1812, %v1814, %v1810
      %v1816 = vmul.f32 1.0, %v1815
      %v1817 = vtanh.pop %v1797
      %v1818 = vmul.f32 %v1816, %v1760
      %1820 = vrot.lane.b32.xlu0 %v1817, 64
      %v1821 = vpop.permute.xlu0 %1820
      %v1823 = vmul.f32 %v1816, %v1821
      %1825 = vrot.lane.b32.xlu0 %v1823, 32
      %v1826 = vpop.permute.xlu0 %1825
      %v1828 = vadd.f32 %v1818, %v1826
      %v1829 = vtanh.pop %v1828
      %1831 = vrot.lane.b32.xlu0 %v1829, 64
      %v1832 = vpop.permute.xlu0 %1831
      %v1834 = vmul.f32 %v1816, %v1832
      %1836 = vrot.lane.b32.xlu0 %v1834, 32
      %v1837 = vpop.permute.xlu0 %1836
      %s1839 = scalar_lea.vmem [#allocation3], 48
      %1840 = vst.msk [vmem:[%s1839] sm:$0xff] %vm1046, %v1837
      %v1841 = vld [vmem:[%s10] sm:$0xff]
      %v1842 = vld [vmem:[%s10 + $0x8] sm:$0xff]
      %v1843 = vld [vmem:[%s10 + $0x10] sm:$0xff]
      %v1844 = vld [vmem:[%s10 + $0x18] sm:$0xff]
      %v1845 = vld [vmem:[%s11] sm:$0xff]
      %v1846 = vld [vmem:[%s11 + $0x8] sm:$0xff]
      %v1847 = vld [vmem:[%s11 + $0x10] sm:$0xff]
      %v1848 = vld [vmem:[%s11 + $0x18] sm:$0xff]
      %v1849 = vld [vmem:[%s12] sm:$0x1]
      %v1850 = vld [vmem:[#allocation3] sm:$0xff]
      %v1851 = vld [vmem:[#allocation3 + $0x8] sm:$0xff]
      %v1852 = vld [vmem:[#allocation3 + $0x10] sm:$0xff]
      %v1853 = vld [vmem:[#allocation3 + $0x18] sm:$0xff]
      %v1854 = vld [vmem:[#allocation3 + $0x20] sm:$0xff]
      %v1855 = vld [vmem:[#allocation3 + $0x28] sm:$0xff]
      %v1856 = vld [vmem:[#allocation3 + $0x30] sm:$0xff]
      %v1858 = vperm.slane %v1849, 0
      %v1861 = vsel %vm1046, %v1850, 0
      %v1864 = vsel %vm1046, %v1851, 0
      %v1867 = vsel %vm1046, %v1852, 0
      %v1870 = vsel %vm1046, %v1853, 0
      %v1873 = vsel %vm1046, %v1854, 0
      %v1876 = vsel %vm1046, %v1855, 0
      %v1879 = vsel %vm1046, %v1856, 0
      %1881 = vmatpush.msra.mxu0 0.0
      %1882 = vmatpush.msra.mxu0 0.0
      %1883 = vmatpush.msra.mxu0 0.0
      %1884 = vmatpush.msra.mxu0 0.0
      %1885 = vmatpush.msra.mxu0 0.0
      %1886 = vmatpush.msra.mxu0 0.0
      %1887 = vmatpush.msra.mxu0 0.0
      %1888 = vmatpush.msra.mxu0 0.0
      %1889 = vmatpush.msra.mxu0 0.0
      %1890 = vmatpush.msra.mxu0 0.0
      %1891 = vmatpush.msra.mxu0 0.0
      %1892 = vmatpush.msra.mxu0 0.0
      %1893 = vmatpush.msra.mxu0 %v1844
      %1894 = vmatpush.msra.mxu0 %v1843
      %1895 = vmatpush.msra.mxu0 %v1842
      %1896 = vmatpush.msra.mxu0 %v1841
      %1897 = vmatmul.f32.gmra.mxu0 %v1861
      %v1898 = vpop.f32.mrf.mxu0
      %v1899 = vadd.f32 %v1858, %v1898
      %1900 = vmatmul.f32.gmra.mxu0 %v1864
      %v1901 = vpop.f32.mrf.mxu0
      %v1902 = vadd.f32 %v1858, %v1901
      %1903 = vmatmul.f32.gmra.mxu0 %v1867
      %v1904 = vpop.f32.mrf.mxu0
      %v1905 = vadd.f32 %v1858, %v1904
      %1906 = vmatmul.f32.gmra.mxu0 %v1870
      %v1907 = vpop.f32.mrf.mxu0
      %v1908 = vadd.f32 %v1858, %v1907
      %1909 = vmatmul.f32.gmra.mxu0 %v1873
      %v1910 = vpop.f32.mrf.mxu0
      %v1911 = vadd.f32 %v1858, %v1910
      %1912 = vmatmul.f32.gmra.mxu0 %v1876
      %v1913 = vpop.f32.mrf.mxu0
      %v1914 = vadd.f32 %v1858, %v1913
      %1915 = vmatmul.f32.gmra.mxu0 %v1879
      %v1916 = vpop.f32.mrf.mxu0
      %v1917 = vadd.f32 %v1858, %v1916
      %1918 = vdwg.mxu0
      %1919 = vst [vmem:[#allocation2] sm:$0xff] %v1899
      %1920 = vst [vmem:[#allocation2 + $0x8] sm:$0xff] %v1902
      %1921 = vst [vmem:[#allocation2 + $0x10] sm:$0xff] %v1905
      %1922 = vst [vmem:[#allocation2 + $0x18] sm:$0xff] %v1908
      %1923 = vst [vmem:[#allocation2 + $0x20] sm:$0xff] %v1911
      %1924 = vst [vmem:[#allocation2 + $0x28] sm:$0xff] %v1914
      %1925 = vst [vmem:[#allocation2 + $0x30] sm:$0xff] %v1917
      %v1926 = vld [vmem:[#allocation2] sm:$0xff]
      %1927 = vmatpush.msra.mxu0 0.0
      %1928 = vmatpush.msra.mxu0 0.0
      %1929 = vmatpush.msra.mxu0 0.0
      %1930 = vmatpush.msra.mxu0 0.0
      %1931 = vmatpush.msra.mxu0 0.0
      %1932 = vmatpush.msra.mxu0 0.0
      %1933 = vmatpush.msra.mxu0 0.0
      %1934 = vmatpush.msra.mxu0 0.0
      %1935 = vmatpush.msra.mxu0 0.0
      %1936 = vmatpush.msra.mxu0 0.0
      %1937 = vmatpush.msra.mxu0 0.0
      %1938 = vmatpush.msra.mxu0 0.0
      %1939 = vmatpush.msra.mxu0 %v1848
      %1940 = vmatpush.msra.mxu0 %v1847
      %1941 = vmatpush.msra.mxu0 %v1846
      %1942 = vmatpush.msra.mxu0 %v1845
      %1943 = vmatmul.f32.gmra.mxu0 %v1368
      %v1944 = vpop.f32.mrf.mxu0
      %v1945 = vadd.f32 0.0, %v1944
      %1946 = vdwg.mxu0
      %v1947 = vadd.f32 %v1926, %v1945
      %v1948 = vxor.u32 %v1947, 2147483648
      %v1949 = vmul.f32 %v1948, 1.442695
      %v1950 = vpow.pop %v1949
      %v1951 = vadd.f32 %v1950, 1.0
      %v1952 = vrcp.pop %v1951
      %v1953 = vmul.f32 %v1951, %v1952
      %v1954 = vsub.f32 1.0, %v1953
      %v1955 = vmul.f32 %v1952, %v1954
      %v1956 = vadd.f32 %v1952, %v1955
      %vm1957 = vweird.f32 %v1951
      %vm1958 = vweird.f32 %v1952
      %vm1959 = vmor %vm1957, %vm1958
      %v1960 = vsel %vm1959, %v1952, %v1956
      %v1961 = vand.u32 2147483647, %v1951
      %vm1962 = vcmp.eq.f32.partialorder %v1961, 8.507059e+37
      %v1963 = vand.u32 %v1951, 2147483648
      %v1964 = vor.u32 1.1754944e-38, %v1963
      %v1965 = vsel %vm1962, %v1964, %v1960
      %v1966 = vmul.f32 1.0, %v1965
      %v1967 = vtanh.pop %v1947
      %v1968 = vmul.f32 %v1966, 0.0
      %1970 = vrot.lane.b32.xlu0 %v1967, 64
      %v1971 = vpop.permute.xlu0 %1970
      %v1973 = vmul.f32 %v1966, %v1971
      %1975 = vrot.lane.b32.xlu0 %v1973, 32
      %v1976 = vpop.permute.xlu0 %1975
      %v1978 = vadd.f32 %v1968, %v1976
      %v1979 = vtanh.pop %v1978
      %1981 = vrot.lane.b32.xlu0 %v1979, 64
      %v1982 = vpop.permute.xlu0 %1981
      %v1984 = vmul.f32 %v1966, %v1982
      %v1985 = vld [vmem:[%s1433] sm:$0xff]
      %1987 = vrot.lane.b32.xlu0 %v1984, 32
      %v1988 = vpop.permute.xlu0 %1987
      %v1989 = vsel %vm1046, %v1988, 0
      %1991 = vmatpush.msra.mxu0 0.0
      %1992 = vmatpush.msra.mxu0 0.0
      %1993 = vmatpush.msra.mxu0 0.0
      %1994 = vmatpush.msra.mxu0 0.0
      %1995 = vmatpush.msra.mxu0 0.0
      %1996 = vmatpush.msra.mxu0 0.0
      %1997 = vmatpush.msra.mxu0 0.0
      %1998 = vmatpush.msra.mxu0 0.0
      %1999 = vmatpush.msra.mxu0 0.0
      %2000 = vmatpush.msra.mxu0 0.0
      %2001 = vmatpush.msra.mxu0 0.0
      %2002 = vmatpush.msra.mxu0 0.0
      %2003 = vmatpush.msra.mxu0 %v1848
      %2004 = vmatpush.msra.mxu0 %v1847
      %2005 = vmatpush.msra.mxu0 %v1846
      %2006 = vmatpush.msra.mxu0 %v1845
      %2007 = vmatmul.f32.gmra.mxu0 %v1989
      %v2008 = vpop.f32.mrf.mxu0
      %v2009 = vadd.f32 0.0, %v2008
      %2010 = vdwg.mxu0
      %v2011 = vadd.f32 %v1985, %v2009
      %v2012 = vxor.u32 %v2011, 2147483648
      %v2013 = vmul.f32 %v2012, 1.442695
      %v2014 = vpow.pop %v2013
      %v2015 = vadd.f32 %v2014, 1.0
      %v2016 = vrcp.pop %v2015
      %v2017 = vmul.f32 %v2015, %v2016
      %v2018 = vsub.f32 1.0, %v2017
      %v2019 = vmul.f32 %v2016, %v2018
      %v2020 = vadd.f32 %v2016, %v2019
      %vm2021 = vweird.f32 %v2015
      %vm2022 = vweird.f32 %v2016
      %vm2023 = vmor %vm2021, %vm2022
      %v2024 = vsel %vm2023, %v2016, %v2020
      %v2025 = vand.u32 2147483647, %v2015
      %vm2026 = vcmp.eq.f32.partialorder %v2025, 8.507059e+37
      %v2027 = vand.u32 %v2015, 2147483648
      %v2028 = vor.u32 1.1754944e-38, %v2027
      %v2029 = vsel %vm2026, %v2028, %v2024
      %v2030 = vmul.f32 1.0, %v2029
      %v2031 = vtanh.pop %v2011
      %v2032 = vmul.f32 %v2030, %v1978
      %2034 = vrot.lane.b32.xlu0 %v2031, 64
      %v2035 = vpop.permute.xlu0 %2034
      %v2037 = vmul.f32 %v2030, %v2035
      %2039 = vrot.lane.b32.xlu0 %v2037, 32
      %v2040 = vpop.permute.xlu0 %2039
      %v2042 = vadd.f32 %v2032, %v2040
      %v2043 = vtanh.pop %v2042
      %2045 = vrot.lane.b32.xlu0 %v2043, 64
      %v2046 = vpop.permute.xlu0 %2045
      %v2048 = vmul.f32 %v2030, %v2046
      %v2049 = vld [vmem:[%s1501] sm:$0xff]
      %2051 = vrot.lane.b32.xlu0 %v2048, 32
      %v2052 = vpop.permute.xlu0 %2051
      %v2053 = vsel %vm1046, %v2052, 0
      %2055 = vmatpush.msra.mxu0 0.0
      %2056 = vmatpush.msra.mxu0 0.0
      %2057 = vmatpush.msra.mxu0 0.0
      %2058 = vmatpush.msra.mxu0 0.0
      %2059 = vmatpush.msra.mxu0 0.0
      %2060 = vmatpush.msra.mxu0 0.0
      %2061 = vmatpush.msra.mxu0 0.0
      %2062 = vmatpush.msra.mxu0 0.0
      %2063 = vmatpush.msra.mxu0 0.0
      %2064 = vmatpush.msra.mxu0 0.0
      %2065 = vmatpush.msra.mxu0 0.0
      %2066 = vmatpush.msra.mxu0 0.0
      %2067 = vmatpush.msra.mxu0 %v1848
      %2068 = vmatpush.msra.mxu0 %v1847
      %2069 = vmatpush.msra.mxu0 %v1846
      %2070 = vmatpush.msra.mxu0 %v1845
      %2071 = vmatmul.f32.gmra.mxu0 %v2053
      %v2072 = vpop.f32.mrf.mxu0
      %v2073 = vadd.f32 0.0, %v2072
      %2074 = vdwg.mxu0
      %v2075 = vadd.f32 %v2049, %v2073
      %v2076 = vxor.u32 %v2075, 2147483648
      %v2077 = vmul.f32 %v2076, 1.442695
      %v2078 = vpow.pop %v2077
      %v2079 = vadd.f32 %v2078, 1.0
      %v2080 = vrcp.pop %v2079
      %v2081 = vmul.f32 %v2079, %v2080
      %v2082 = vsub.f32 1.0, %v2081
      %v2083 = vmul.f32 %v2080, %v2082
      %v2084 = vadd.f32 %v2080, %v2083
      %vm2085 = vweird.f32 %v2079
      %vm2086 = vweird.f32 %v2080
      %vm2087 = vmor %vm2085, %vm2086
      %v2088 = vsel %vm2087, %v2080, %v2084
      %v2089 = vand.u32 2147483647, %v2079
      %vm2090 = vcmp.eq.f32.partialorder %v2089, 8.507059e+37
      %v2091 = vand.u32 %v2079, 2147483648
      %v2092 = vor.u32 1.1754944e-38, %v2091
      %v2093 = vsel %vm2090, %v2092, %v2088
      %v2094 = vmul.f32 1.0, %v2093
      %v2095 = vtanh.pop %v2075
      %v2096 = vmul.f32 %v2094, %v2042
      %2098 = vrot.lane.b32.xlu0 %v2095, 64
      %v2099 = vpop.permute.xlu0 %2098
      %v2101 = vmul.f32 %v2094, %v2099
      %2103 = vrot.lane.b32.xlu0 %v2101, 32
      %v2104 = vpop.permute.xlu0 %2103
      %v2106 = vadd.f32 %v2096, %v2104
      %v2107 = vtanh.pop %v2106
      %2109 = vrot.lane.b32.xlu0 %v2107, 64
      %v2110 = vpop.permute.xlu0 %2109
      %v2112 = vmul.f32 %v2094, %v2110
      %v2113 = vld [vmem:[%s1569] sm:$0xff]
      %2115 = vrot.lane.b32.xlu0 %v2112, 32
      %v2116 = vpop.permute.xlu0 %2115
      %v2117 = vsel %vm1046, %v2116, 0
      %2119 = vmatpush.msra.mxu0 0.0
      %2120 = vmatpush.msra.mxu0 0.0
      %2121 = vmatpush.msra.mxu0 0.0
      %2122 = vmatpush.msra.mxu0 0.0
      %2123 = vmatpush.msra.mxu0 0.0
      %2124 = vmatpush.msra.mxu0 0.0
      %2125 = vmatpush.msra.mxu0 0.0
      %2126 = vmatpush.msra.mxu0 0.0
      %2127 = vmatpush.msra.mxu0 0.0
      %2128 = vmatpush.msra.mxu0 0.0
      %2129 = vmatpush.msra.mxu0 0.0
      %2130 = vmatpush.msra.mxu0 0.0
      %2131 = vmatpush.msra.mxu0 %v1848
      %2132 = vmatpush.msra.mxu0 %v1847
      %2133 = vmatpush.msra.mxu0 %v1846
      %2134 = vmatpush.msra.mxu0 %v1845
      %2135 = vmatmul.f32.gmra.mxu0 %v2117
      %v2136 = vpop.f32.mrf.mxu0
      %v2137 = vadd.f32 0.0, %v2136
      %2138 = vdwg.mxu0
      %v2139 = vadd.f32 %v2113, %v2137
      %v2140 = vxor.u32 %v2139, 2147483648
      %v2141 = vmul.f32 %v2140, 1.442695
      %v2142 = vpow.pop %v2141
      %v2143 = vadd.f32 %v2142, 1.0
      %v2144 = vrcp.pop %v2143
      %v2145 = vmul.f32 %v2143, %v2144
      %v2146 = vsub.f32 1.0, %v2145
      %v2147 = vmul.f32 %v2144, %v2146
      %v2148 = vadd.f32 %v2144, %v2147
      %vm2149 = vweird.f32 %v2143
      %vm2150 = vweird.f32 %v2144
      %vm2151 = vmor %vm2149, %vm2150
      %v2152 = vsel %vm2151, %v2144, %v2148
      %v2153 = vand.u32 2147483647, %v2143
      %vm2154 = vcmp.eq.f32.partialorder %v2153, 8.507059e+37
      %v2155 = vand.u32 %v2143, 2147483648
      %v2156 = vor.u32 1.1754944e-38, %v2155
      %v2157 = vsel %vm2154, %v2156, %v2152
      %v2158 = vmul.f32 1.0, %v2157
      %v2159 = vtanh.pop %v2139
      %v2160 = vmul.f32 %v2158, %v2106
      %2162 = vrot.lane.b32.xlu0 %v2159, 64
      %v2163 = vpop.permute.xlu0 %2162
      %v2165 = vmul.f32 %v2158, %v2163
      %2167 = vrot.lane.b32.xlu0 %v2165, 32
      %v2168 = vpop.permute.xlu0 %2167
      %v2170 = vadd.f32 %v2160, %v2168
      %v2171 = vtanh.pop %v2170
      %2173 = vrot.lane.b32.xlu0 %v2171, 64
      %v2174 = vpop.permute.xlu0 %2173
      %v2176 = vmul.f32 %v2158, %v2174
      %v2177 = vld [vmem:[%s1637] sm:$0xff]
      %2179 = vrot.lane.b32.xlu0 %v2176, 32
      %v2180 = vpop.permute.xlu0 %2179
      %v2181 = vsel %vm1046, %v2180, 0
      %2183 = vmatpush.msra.mxu0 0.0
      %2184 = vmatpush.msra.mxu0 0.0
      %2185 = vmatpush.msra.mxu0 0.0
      %2186 = vmatpush.msra.mxu0 0.0
      %2187 = vmatpush.msra.mxu0 0.0
      %2188 = vmatpush.msra.mxu0 0.0
      %2189 = vmatpush.msra.mxu0 0.0
      %2190 = vmatpush.msra.mxu0 0.0
      %2191 = vmatpush.msra.mxu0 0.0
      %2192 = vmatpush.msra.mxu0 0.0
      %2193 = vmatpush.msra.mxu0 0.0
      %2194 = vmatpush.msra.mxu0 0.0
      %2195 = vmatpush.msra.mxu0 %v1848
      %2196 = vmatpush.msra.mxu0 %v1847
      %2197 = vmatpush.msra.mxu0 %v1846
      %2198 = vmatpush.msra.mxu0 %v1845
      %2199 = vmatmul.f32.gmra.mxu0 %v2181
      %v2200 = vpop.f32.mrf.mxu0
      %v2201 = vadd.f32 0.0, %v2200
      %2202 = vdwg.mxu0
      %v2203 = vadd.f32 %v2177, %v2201
      %v2204 = vxor.u32 %v2203, 2147483648
      %v2205 = vmul.f32 %v2204, 1.442695
      %v2206 = vpow.pop %v2205
      %v2207 = vadd.f32 %v2206, 1.0
      %v2208 = vrcp.pop %v2207
      %v2209 = vmul.f32 %v2207, %v2208
      %v2210 = vsub.f32 1.0, %v2209
      %v2211 = vmul.f32 %v2208, %v2210
      %v2212 = vadd.f32 %v2208, %v2211
      %vm2213 = vweird.f32 %v2207
      %vm2214 = vweird.f32 %v2208
      %vm2215 = vmor %vm2213, %vm2214
      %v2216 = vsel %vm2215, %v2208, %v2212
      %v2217 = vand.u32 2147483647, %v2207
      %vm2218 = vcmp.eq.f32.partialorder %v2217, 8.507059e+37
      %v2219 = vand.u32 %v2207, 2147483648
      %v2220 = vor.u32 1.1754944e-38, %v2219
      %v2221 = vsel %vm2218, %v2220, %v2216
      %v2222 = vmul.f32 1.0, %v2221
      %v2223 = vtanh.pop %v2203
      %v2224 = vmul.f32 %v2222, %v2170
      %2226 = vrot.lane.b32.xlu0 %v2223, 64
      %v2227 = vpop.permute.xlu0 %2226
      %v2229 = vmul.f32 %v2222, %v2227
      %2231 = vrot.lane.b32.xlu0 %v2229, 32
      %v2232 = vpop.permute.xlu0 %2231
      %v2234 = vadd.f32 %v2224, %v2232
      %v2235 = vtanh.pop %v2234
      %2237 = vrot.lane.b32.xlu0 %v2235, 64
      %v2238 = vpop.permute.xlu0 %2237
      %v2240 = vmul.f32 %v2222, %v2238
      %v2241 = vld [vmem:[%s1705] sm:$0xff]
      %2243 = vrot.lane.b32.xlu0 %v2240, 32
      %v2244 = vpop.permute.xlu0 %2243
      %v2245 = vsel %vm1046, %v2244, 0
      %2247 = vmatpush.msra.mxu0 0.0
      %2248 = vmatpush.msra.mxu0 0.0
      %2249 = vmatpush.msra.mxu0 0.0
      %2250 = vmatpush.msra.mxu0 0.0
      %2251 = vmatpush.msra.mxu0 0.0
      %2252 = vmatpush.msra.mxu0 0.0
      %2253 = vmatpush.msra.mxu0 0.0
      %2254 = vmatpush.msra.mxu0 0.0
      %2255 = vmatpush.msra.mxu0 0.0
      %2256 = vmatpush.msra.mxu0 0.0
      %2257 = vmatpush.msra.mxu0 0.0
      %2258 = vmatpush.msra.mxu0 0.0
      %2259 = vmatpush.msra.mxu0 %v1848
      %2260 = vmatpush.msra.mxu0 %v1847
      %2261 = vmatpush.msra.mxu0 %v1846
      %2262 = vmatpush.msra.mxu0 %v1845
      %2263 = vmatmul.f32.gmra.mxu0 %v2245
      %v2264 = vpop.f32.mrf.mxu0
      %v2265 = vadd.f32 0.0, %v2264
      %2266 = vdwg.mxu0
      %v2267 = vadd.f32 %v2241, %v2265
      %v2268 = vxor.u32 %v2267, 2147483648
      %v2269 = vmul.f32 %v2268, 1.442695
      %v2270 = vpow.pop %v2269
      %v2271 = vadd.f32 %v2270, 1.0
      %v2272 = vrcp.pop %v2271
      %v2273 = vmul.f32 %v2271, %v2272
      %v2274 = vsub.f32 1.0, %v2273
      %v2275 = vmul.f32 %v2272, %v2274
      %v2276 = vadd.f32 %v2272, %v2275
      %vm2277 = vweird.f32 %v2271
      %vm2278 = vweird.f32 %v2272
      %vm2279 = vmor %vm2277, %vm2278
      %v2280 = vsel %vm2279, %v2272, %v2276
      %v2281 = vand.u32 2147483647, %v2271
      %vm2282 = vcmp.eq.f32.partialorder %v2281, 8.507059e+37
      %v2283 = vand.u32 %v2271, 2147483648
      %v2284 = vor.u32 1.1754944e-38, %v2283
      %v2285 = vsel %vm2282, %v2284, %v2280
      %v2286 = vmul.f32 1.0, %v2285
      %v2287 = vtanh.pop %v2267
      %v2288 = vmul.f32 %v2286, %v2234
      %2290 = vrot.lane.b32.xlu0 %v2287, 64
      %v2291 = vpop.permute.xlu0 %2290
      %v2293 = vmul.f32 %v2286, %v2291
      %2295 = vrot.lane.b32.xlu0 %v2293, 32
      %v2296 = vpop.permute.xlu0 %2295
      %v2298 = vadd.f32 %v2288, %v2296
      %v2299 = vtanh.pop %v2298
      %2301 = vrot.lane.b32.xlu0 %v2299, 64
      %v2302 = vpop.permute.xlu0 %2301
      %v2304 = vmul.f32 %v2286, %v2302
      %v2305 = vld [vmem:[%s1773] sm:$0xff]
      %2307 = vrot.lane.b32.xlu0 %v2304, 32
      %v2308 = vpop.permute.xlu0 %2307
      %v2309 = vsel %vm1046, %v2308, 0
      %2311 = vmatpush.msra.mxu0 0.0
      %2312 = vmatpush.msra.mxu0 0.0
      %2313 = vmatpush.msra.mxu0 0.0
      %2314 = vmatpush.msra.mxu0 0.0
      %2315 = vmatpush.msra.mxu0 0.0
      %2316 = vmatpush.msra.mxu0 0.0
      %2317 = vmatpush.msra.mxu0 0.0
      %2318 = vmatpush.msra.mxu0 0.0
      %2319 = vmatpush.msra.mxu0 0.0
      %2320 = vmatpush.msra.mxu0 0.0
      %2321 = vmatpush.msra.mxu0 0.0
      %2322 = vmatpush.msra.mxu0 0.0
      %2323 = vmatpush.msra.mxu0 %v1848
      %2324 = vmatpush.msra.mxu0 %v1847
      %2325 = vmatpush.msra.mxu0 %v1846
      %2326 = vmatpush.msra.mxu0 %v1845
      %2327 = vmatmul.f32.gmra.mxu0 %v2309
      %v2328 = vpop.f32.mrf.mxu0
      %v2329 = vadd.f32 0.0, %v2328
      %2330 = vdwg.mxu0
      %v2331 = vadd.f32 %v2305, %v2329
      %v2332 = vxor.u32 %v2331, 2147483648
      %v2333 = vmul.f32 %v2332, 1.442695
      %v2334 = vpow.pop %v2333
      %v2335 = vadd.f32 %v2334, 1.0
      %v2336 = vrcp.pop %v2335
      %v2337 = vmul.f32 %v2335, %v2336
      %v2338 = vsub.f32 1.0, %v2337
      %v2339 = vmul.f32 %v2336, %v2338
      %v2340 = vadd.f32 %v2336, %v2339
      %vm2341 = vweird.f32 %v2335
      %vm2342 = vweird.f32 %v2336
      %vm2343 = vmor %vm2341, %vm2342
      %v2344 = vsel %vm2343, %v2336, %v2340
      %v2345 = vand.u32 2147483647, %v2335
      %vm2346 = vcmp.eq.f32.partialorder %v2345, 8.507059e+37
      %v2347 = vand.u32 %v2335, 2147483648
      %v2348 = vor.u32 1.1754944e-38, %v2347
      %v2349 = vsel %vm2346, %v2348, %v2344
      %v2350 = vmul.f32 1.0, %v2349
      %v2351 = vtanh.pop %v2331
      %v2352 = vmul.f32 %v2350, %v2298
      %2354 = vrot.lane.b32.xlu0 %v2351, 64
      %v2355 = vpop.permute.xlu0 %2354
      %v2357 = vmul.f32 %v2350, %v2355
      %2359 = vrot.lane.b32.xlu0 %v2357, 32
      %v2360 = vpop.permute.xlu0 %2359
      %v2362 = vadd.f32 %v2352, %v2360
      %v2363 = vtanh.pop %v2362
      %2365 = vrot.lane.b32.xlu0 %v2363, 64
      %v2366 = vpop.permute.xlu0 %2365
      %v2368 = vmul.f32 %v2350, %v2366
      %v2369 = vld [vmem:[%s13] sm:$0xff]
      %v2370 = vld [vmem:[%s13 + $0x8] sm:$0xff]
      %v2371 = vld [vmem:[%s13 + $0x10] sm:$0xff]
      %v2372 = vld [vmem:[%s13 + $0x18] sm:$0xff]
      %v2373 = vld [vmem:[%s14] sm:$0x1]
      %v2375 = vperm.slane %v2373, 0
      %2378 = vrot.lane.b32.xlu0 %v2368, 32
      %v2379 = vpop.permute.xlu0 %2378
      %v2380 = vsel %vm1046, %v2379, 0
      %2382 = vmatpush.msra.mxu0 0.0
      %2383 = vmatpush.msra.mxu0 0.0
      %2384 = vmatpush.msra.mxu0 0.0
      %2385 = vmatpush.msra.mxu0 0.0
      %2386 = vmatpush.msra.mxu0 0.0
      %2387 = vmatpush.msra.mxu0 0.0
      %2388 = vmatpush.msra.mxu0 0.0
      %2389 = vmatpush.msra.mxu0 0.0
      %2390 = vmatpush.msra.mxu0 0.0
      %2391 = vmatpush.msra.mxu0 0.0
      %2392 = vmatpush.msra.mxu0 0.0
      %2393 = vmatpush.msra.mxu0 0.0
      %2394 = vmatpush.msra.mxu0 %v2372
      %2395 = vmatpush.msra.mxu0 %v2371
      %2396 = vmatpush.msra.mxu0 %v2370
      %2397 = vmatpush.msra.mxu0 %v2369
      %2398 = vmatmul.f32.gmra.mxu0 %v2380
      %v2399 = vpop.f32.mrf.mxu0
      %v2400 = vadd.f32 %v2375, %v2399
      %2401 = vdwg.mxu0
      %2402 = vst.msk [vmem:[%s492] sm:$0xff] %vm514, %v2400
      %p2403 = scmp.lt.s32.totalorder %s26, 1
      %s2404 = scalar_select %p2403, %s26, 1
      %s2405 = smul.addr %s2404, 8
      %s2406 = scalar_lea.vmem %s15, %s2405
      // Predicated region
      $region81: #{tpu_custom_call.1} parent=79 // pred_check
        %p2407 = pneg %p364
      $region82: #{tpu_custom_call.1} parent=79 // pred_check_branch
        %2409 = sbr.rel (%p2407) target = $region84
      $region83: #{tpu_custom_call.1} parent=79 // pred_region
        _
      $region84: #{tpu_custom_call.1} parent=79 // pred_fallthru
        _
    $region80: #{tpu_custom_call.1} parent=5 // pred_fallthru
      _
    %p2410 = scmp.le.s32.totalorder 2, %s21
    // Predicated region
    $region85: #{tpu_custom_call.1} parent=5 // pred_check
      %p2411 = pneg %p2410
    $region86: #{tpu_custom_call.1} parent=5 // pred_check_branch
      %2413 = sbr.rel (%p2411) target = $region88
    $region87: #{tpu_custom_call.1} parent=5 // pred_region
      %s2414 = ssub.s32 %s21, 2
      // Predicated region
      $region89: #{tpu_custom_call.1} parent=87 // pred_check
        %p2415 = pneg %p370
      $region90: #{tpu_custom_call.1} parent=87 // pred_check_branch
        %2417 = sbr.rel (%p2415) target = $region92
      $region91: #{tpu_custom_call.1} parent=87 // pred_region
        %p2418 = scmp.lt.s32.totalorder %s27, 1
        %s2419 = scalar_select %p2418, %s27, 1
        %s2420 = smul.addr %s2419, 8
        %s2421 = scalar_lea.vmem %s15, %s2420
      $region92: #{tpu_custom_call.1} parent=87 // pred_fallthru
        _
    $region88: #{tpu_custom_call.1} parent=5 // pred_fallthru
      _
  $region6: #{tpu_custom_call.1} parent=0 // loop_footer
    %s25 = sadd.s32 1, %s21
  $region7: #{tpu_custom_call.1} parent=0 // loop_footer_branch
    %20 = sbr.rel target = $region3
  $region8: #{tpu_custom_call.1} parent=0 // loop_exit
    _

</llo_original>
